<compile_context>
chip_gen: v6e
topology: v6e:2x2x1
jax: 0.10.0
libtpu: 0.0.40
codegen_flags: <defaults>
</compile_context>

<pallas_src>
import math

import jax
import jax.numpy as jnp
from jax import lax
from jax.experimental import pallas as pl
from jax.experimental.pallas import tpu as pltpu


BLOB_COLS = 128   # lane-padded width of the single parameter blob
BIAS_COL = 64     # blob column holding the folded BN bias (> any conv cin)


def _round_up(x, m):
    return (x + m - 1) // m * m


class HParams:
    use_ohe = True
    embedding_size = 16
    layers = [2, 2]
    hidden_sizes = [16, 32]
    kernel_sizes = [3, 3]


def bn_scale_bias(cout, eps=1e-5):
    """Inference-mode BatchNorm1d affine (init: gamma=1, beta=0, mean=0, var=1).

    A real checkpoint must feed its trained running stats through this same
    folding path.
    """
    gamma = jnp.ones((cout,), jnp.float32)
    beta = jnp.zeros((cout,), jnp.float32)
    running_mean = jnp.zeros((cout,), jnp.float32)
    running_var = jnp.ones((cout,), jnp.float32)
    scale = gamma / jnp.sqrt(running_var + eps)
    bias = beta - running_mean * scale
    return scale, bias


def positional_embedding_T(E, L):
    assert E % 2 == 0, "PositionalEmbedding requires an even d_model"
    pos = jnp.arange(L, dtype=jnp.float32)[:, None]
    div = jnp.exp(jnp.arange(0, E, 2, dtype=jnp.float32) * -(math.log(10000.0) / E))
    pe = jnp.zeros((L, E), jnp.float32)
    pe = pe.at[:, 0::2].set(jnp.sin(pos * div))
    pe = pe.at[:, 1::2].set(jnp.cos(pos * div))
    return pe.T                                          # (E, L)


def init_params(key, input_size, hp):
    keys = iter(jax.random.split(key, 64))
    params = {}
    E = hp.embedding_size
    assert hp.use_ohe, "fused kernel implements the use_ohe=True path"

    tok = jax.random.normal(next(keys), (21, E), jnp.float32).at[0].set(0.0)
    seg = jax.random.normal(next(keys), (17, E), jnp.float32).at[0].set(0.0)
    params["tokT"] = tok.T                               # (E, 21), padding_idx=0 zeroed
    params["segT"] = seg.T                               # (E, 17), padding_idx=0 zeroed
    cin = input_size - 21 + E

    def conv_w(cout, cin_, k):
        std = math.sqrt(2.0 / (cout * k))                # kaiming fan_out, relu
        return jax.random.normal(next(keys), (cout, cin_, k), jnp.float32) * std

    h0 = hp.hidden_sizes[0]
    s, b = bn_scale_bias(h0)
    params["stem"] = dict(w=conv_w(h0, cin, 7), scale=s, bias=b)

    layers = []
    start = h0
    for i, hs in enumerate(hp.hidden_sizes):
        blks = []
        for j in range(hp.layers[i]):
            in_c = start if j == 0 else hs
            blk = dict(w1=conv_w(hs, in_c, hp.kernel_sizes[0]),
                       w2=conv_w(hs, hs, hp.kernel_sizes[1]))
            blk["s1"], blk["b1"] = bn_scale_bias(hs)
            blk["s2"], blk["b2"] = bn_scale_bias(hs)
            if j == 0:                                   # downsample always on 1st block
                blk["wd"] = conv_w(hs, in_c, 1)
                blk["sd"], blk["bd"] = bn_scale_bias(hs)
            blks.append(blk)
        start = hs
        layers.append(blks)
    params["layers"] = layers
    return params


def build_forward(params, hp, input_size, N, L):
    E = hp.embedding_size
    n_extra = input_size - 21
    assert n_extra > 0
    NL = N * L
    assert NL <= BLOB_COLS, "shift matrices assume N*L fits one lane group"
    # TODO(synk): for long sequences (N*L > 128) tile L as an extra grid axis
    # instead of packing the whole batch into the lane dimension.

    # ---------------- single parameter blob (one DMA) ----------------
    blob_blocks = []
    cur = [0]

    def alloc(block):
        r, c = block.shape
        rpad = _round_up(r, 8)
        buf = jnp.zeros((rpad, BLOB_COLS), jnp.float32)
        buf = buf.at[:r, :c].set(block.astype(jnp.float32))
        off = cur[0]
        blob_blocks.append(buf)
        cur[0] += rpad
        return off

    def alloc_conv(w, scale, bias, split=None):
        """Fold BN scale into w; store tap-stacked weights + folded bias column."""
        cout, cin, k = w.shape
        assert k % 2 == 1, "'same' padding path assumes odd kernel size"
        wf = (w * scale[:, None, None]).astype(jnp.float32)
        # wstack[kk*cout + co, c] = wf[co, c, kk]
        wstack = jnp.transpose(wf, (2, 0, 1)).reshape(k * cout, cin)
        seg_bounds = [0, cin] if split is None else [0, split, cin]
        segs = []
        for si in range(len(seg_bounds) - 1):
            lo, hi = seg_bounds[si], seg_bounds[si + 1]
            blk = jnp.zeros((k * cout, BLOB_COLS), jnp.float32)
            blk = blk.at[:, :hi - lo].set(wstack[:, lo:hi])
            if si == 0:  # folded BN bias rides along in a spare lane column
                blk = blk.at[:cout, BIAS_COL].set(bias.astype(jnp.float32))
            segs.append((alloc(blk), hi - lo))
        return dict(cout=cout, ksz=k, bias_off=segs[0][0], segs=tuple(segs))

    # Stem: conv input channels are [E embedding rows] ++ [n_extra raw rows];
    # the channel concat is expressed as two weight segments (no activation
    # concatenate is ever built).
    stem_meta = alloc_conv(params["stem"]["w"], params["stem"]["scale"],
                           params["stem"]["bias"], split=E)

    block_metas = []
    for layer in params["layers"]:
        for blk in layer:
            c1 = alloc_conv(blk["w1"], blk["s1"], blk["b1"])
            c2 = alloc_conv(blk["w2"], blk["s2"], blk["b2"])
            cd = alloc_conv(blk["wd"], blk["sd"], blk["bd"]) if "wd" in blk else None
            block_metas.append((c1, c2, cd))

    # Shift matrices: S_s[i, j] = 1 iff i == j + s and columns i, j belong to
    # the same sample.  Multiplying (Cout, NL) @ S_s realizes the per-tap lane
    # shift of a 'same'-padded conv, including the zero padding at each
    # sample's edges (so no masks / rolls / scratch are needed in-kernel).
    max_pad = max([7 // 2] + [k // 2 for k in hp.kernel_sizes])
    ii = jnp.arange(NL)[:, None]
    jj = jnp.arange(NL)[None, :]
    same_sample = (ii // L) == (jj // L)
    shift_rows = {}
    for s in range(-max_pad, max_pad + 1):
        if s == 0:
            continue
        S = jnp.where((ii == jj + s) & same_sample, 1.0, 0.0).astype(jnp.float32)
        shift_rows[s] = alloc(S)

    tok_off = alloc(params["tokT"])                                   # (E, 21)
    seg_off = alloc(params["segT"])                                   # (E, 17)
    pe_off = alloc(jnp.tile(positional_embedding_T(E, L), (1, N)))    # (E, NL)

    blob = jnp.concatenate(blob_blocks, axis=0)                       # (R, 128)
    cout_last = hp.hidden_sizes[-1]

    # ---------------- fused kernel (single grid step) ----------------
    def kernel(x21_ref, xrest_ref, seg_ref, blob_ref, o_ref):
        x21 = x21_ref[...]                         # (21, NL) OHE channels
        seg = seg_ref[...]                         # (1, NL) int32 segment labels

        # --- BERT embedding: argmax over 21 OHE channels (first-max tie-break,
        #     matching torch.argmax), expressed as one-hot matmuls ---
        row21 = lax.broadcasted_iota(jnp.int32, (21, NL), 0)
        mx = jnp.max(x21, axis=0, keepdims=True)
        first_idx = jnp.min(jnp.where(x21 == mx, row21, 21), axis=0, keepdims=True)
        tok_oh = (row21 == first_idx).astype(jnp.float32)             # (21, NL)
        row17 = lax.broadcasted_iota(jnp.int32, (17, NL), 0)
        seg_oh = (row17 == seg).astype(jnp.float32)                   # (17, NL)

        emb = (jnp.dot(blob_ref[tok_off:tok_off + E, 0:21], tok_oh,
                       preferred_element_type=jnp.float32)
               + jnp.dot(blob_ref[seg_off:seg_off + E, 0:17], seg_oh,
                         preferred_element_type=jnp.float32)
               + blob_ref[pe_off:pe_off + E, 0:NL])                   # (E, NL)
        # TODO(synk): Dropout(p=0.2) after the embedding sum is identity in eval mode.

        def shift_mat(s):
            off = shift_rows[s]
            return blob_ref[off:off + NL, 0:NL]

        def conv_bn(xs, meta, relu):
            """Conv1d(stride=1, 'same', bias=False) + folded BN + optional ReLU.

            One matmul against the tap-stacked weight computes every tap at
            once; K-1 shift-matrix matmuls realign and sum the taps.  All
            intermediates stay in vregs.
            """
            cout, ksz = meta["cout"], meta["ksz"]
            pad = ksz // 2
            z = None
            for x_val, (roff, cin) in zip(xs, meta["segs"]):
                d = jnp.dot(blob_ref[roff:roff + ksz * cout, 0:cin], x_val,
                            preferred_element_type=jnp.float32)
                z = d if z is None else z + d                         # (ksz*cout, NL)
            y = z[pad * cout:(pad + 1) * cout, :]                     # center tap (s=0)
            for k in range(ksz):
                s = k - pad
                if s == 0:
                    continue
                y = y + jnp.dot(z[k * cout:(k + 1) * cout, :], shift_mat(s),
                                preferred_element_type=jnp.float32)
            y = y + blob_ref[meta["bias_off"]:meta["bias_off"] + cout,
                             BIAS_COL:BIAS_COL + 1]                   # folded BN bias
            if relu:
                y = jnp.maximum(y, 0.0)
            return y

        # --- stem conv: segments = (embedding rows, raw extra channels) ---
        h = conv_bn([emb, xrest_ref[...]], stem_meta, relu=True)

        # --- residual BasicBlocks; ReLU BEFORE the residual add, exactly as in
        #     birds/models.py BasicBlock.forward ---
        for (c1, c2, cd) in block_metas:
            y = conv_bn([h], c1, relu=True)
            identity = conv_bn([h], cd, relu=False) if cd is not None else h
            h = conv_bn([y], c2, relu=True) + identity

        o_ref[...] = h                                                # (cout_last, NL)

    fwd_call = pl.pallas_call(
        kernel,
        out_shape=jax.ShapeDtypeStruct((cout_last, NL), jnp.float32),
        grid=(1,),
        in_specs=[
            pl.BlockSpec((21, NL), lambda i: (0, 0)),
            pl.BlockSpec((n_extra, NL), lambda i: (0, 0)),
            pl.BlockSpec((1, NL), lambda i: (0, 0)),
            pl.BlockSpec(blob.shape, lambda i: (0, 0)),
        ],
        out_specs=pl.BlockSpec((cout_last, NL), lambda i: (0, 0)),
        compiler_params=pltpu.CompilerParams(
            # Single grid step: whole batch is packed into the lane axis, so
            # per-sample grid overhead disappears on single-TC v5e/v6e; on v7x
            # splitting across TCs is deliberately skipped at this size.
            dimension_semantics=("arbitrary",)),
    )

    def forward(X, lengths, segment_label):
        del lengths                                      # unused by the reference forward
        n, c, l = X.shape
        assert (n, c, l) == (N, input_size, L)
        # Fold batch into the lane axis: (N, C, L) -> (C, N*L), column = n*L + l.
        xf = jnp.transpose(X, (1, 0, 2)).reshape(c, NL)
        segf = segment_label.astype(jnp.int32).reshape(1, NL)
        out = fwd_call(xf[:21], xf[21:], segf, blob)     # (cout_last, NL)
        return jnp.transpose(out.reshape(cout_last, N, L), (1, 0, 2))

    return forward


if __name__ == "__main__":
    key = jax.random.PRNGKey(0)
    kx, kseg, kp = jax.random.split(key, 3)

    hp = HParams()
    N, C, L = 2, 25, 16                                   # 21 OHE channels + 4 extra
    X = jax.random.normal(kx, (N, C, L), jnp.float32)
    lengths = jnp.full((N,), L, jnp.int32)
    segment_label = jax.random.randint(kseg, (N, L), 0, 17, dtype=jnp.int32)

    params = init_params(kp, C, hp)
    forward = build_forward(params, hp, input_size=C, N=N, L=L)
    out = forward(X, lengths, segment_label)
    out = jax.block_until_ready(out)

    assert out.shape == (N, hp.hidden_sizes[-1], L), out.shape
    assert out.dtype == jnp.float32
    print("KERNEL_OK")
</pallas_src>

<mosaic_0001>
module attributes {stable_mosaic.version = 11 : i64} {
  func.func @kernel(%arg0: i32, %arg1: memref<21x32xf32, #tpu.memory_space<vmem>>, %arg2: memref<4x32xf32, #tpu.memory_space<vmem>>, %arg3: memref<1x32xi32, #tpu.memory_space<vmem>>, %arg4: memref<1088x128xf32, #tpu.memory_space<vmem>>, %arg5: memref<32x32xf32, #tpu.memory_space<vmem>>) attributes {dimension_semantics = [#tpu.dimension_semantics<arbitrary>], iteration_bounds = array<i64: 1>, scalar_prefetch = 0 : i64, scratch_operands = 0 : i64, tpu.core_type = #tpu.core_type<tc>, window_params = [{pipeline_mode = #tpu.pipeline_mode<synchronous>, transform_indices = @transform_0, window_bounds = array<i64: 21, 32>}, {pipeline_mode = #tpu.pipeline_mode<synchronous>, transform_indices = @transform_1, window_bounds = array<i64: 4, 32>}, {pipeline_mode = #tpu.pipeline_mode<synchronous>, transform_indices = @transform_2, window_bounds = array<i64: 1, 32>}, {pipeline_mode = #tpu.pipeline_mode<synchronous>, transform_indices = @transform_3, window_bounds = array<i64: 1088, 128>}, {pipeline_mode = #tpu.pipeline_mode<synchronous>, transform_indices = @transform_4, window_bounds = array<i64: 32, 32>}]} {
    %c0 = arith.constant 0 : index
    %c0_0 = arith.constant 0 : index
    %0 = vector.load %arg1[%c0, %c0_0] : memref<21x32xf32, #tpu.memory_space<vmem>>, vector<21x32xf32>
    %c0_1 = arith.constant 0 : index
    %c0_2 = arith.constant 0 : index
    %1 = vector.load %arg3[%c0_1, %c0_2] : memref<1x32xi32, #tpu.memory_space<vmem>>, vector<1x32xi32>
    %2 = tpu.iota {dimensions = array<i32: 0>} : vector<21x32xi32>
    %cst = arith.constant dense<0xFF800000> : vector<32xf32>
    %3 = vector.multi_reduction <maximumf>, %0, %cst [0] : vector<21x32xf32> to vector<32xf32>
    %4 = vector.shape_cast %3 : vector<32xf32> to vector<1x32xf32>
    %5 = vector.broadcast %4 : vector<1x32xf32> to vector<21x32xf32>
    %6 = arith.cmpf oeq, %0, %5 : vector<21x32xf32>
    %c21_i32 = arith.constant 21 : i32
    %7 = vector.broadcast %c21_i32 : i32 to vector<21x32xi32>
    %8 = arith.select %6, %2, %7 : vector<21x32xi1>, vector<21x32xi32>
    %cst_3 = arith.constant dense<2147483647> : vector<32xi32>
    %9 = vector.multi_reduction <minsi>, %8, %cst_3 [0] : vector<21x32xi32> to vector<32xi32>
    %10 = vector.shape_cast %9 : vector<32xi32> to vector<1x32xi32>
    %11 = vector.broadcast %10 : vector<1x32xi32> to vector<21x32xi32>
    %12 = arith.cmpi eq, %2, %11 : vector<21x32xi32>
    %13 = arith.extui %12 : vector<21x32xi1> to vector<21x32xi32>
    %14 = arith.sitofp %13 : vector<21x32xi32> to vector<21x32xf32>
    %15 = tpu.iota {dimensions = array<i32: 0>} : vector<17x32xi32>
    %16 = vector.broadcast %1 : vector<1x32xi32> to vector<17x32xi32>
    %17 = arith.cmpi eq, %15, %16 : vector<17x32xi32>
    %18 = arith.extui %17 : vector<17x32xi1> to vector<17x32xi32>
    %19 = arith.sitofp %18 : vector<17x32xi32> to vector<17x32xf32>
    %c1040 = arith.constant 1040 : index
    %c0_4 = arith.constant 0 : index
    %20 = vector.load %arg4[%c1040, %c0_4] : memref<1088x128xf32, #tpu.memory_space<vmem>>, vector<16x21xf32>
    %cst_5 = arith.constant dense<0.000000e+00> : vector<16x32xf32>
    %21 = tpu.matmul %20, %14, %cst_5 {dimension_numbers = #tpu.dot_dimension_numbers<[1], [0], [0], [1], [0, 0, 1, 1], [], []>} : vector<16x21xf32>, vector<21x32xf32>, vector<16x32xf32> -> vector<16x32xf32>
    %c1056 = arith.constant 1056 : index
    %c0_6 = arith.constant 0 : index
    %22 = vector.load %arg4[%c1056, %c0_6] : memref<1088x128xf32, #tpu.memory_space<vmem>>, vector<16x17xf32>
    %cst_7 = arith.constant dense<0.000000e+00> : vector<16x32xf32>
    %23 = tpu.matmul %22, %19, %cst_7 {dimension_numbers = #tpu.dot_dimension_numbers<[1], [0], [0], [1], [0, 0, 1, 1], [], []>} : vector<16x17xf32>, vector<17x32xf32>, vector<16x32xf32> -> vector<16x32xf32>
    %24 = arith.addf %21, %23 : vector<16x32xf32>
    %c1072 = arith.constant 1072 : index
    %c0_8 = arith.constant 0 : index
    %25 = vector.load %arg4[%c1072, %c0_8] : memref<1088x128xf32, #tpu.memory_space<vmem>>, vector<16x32xf32>
    %26 = arith.addf %24, %25 : vector<16x32xf32>
    %c0_9 = arith.constant 0 : index
    %c0_10 = arith.constant 0 : index
    %27 = vector.load %arg2[%c0_9, %c0_10] : memref<4x32xf32, #tpu.memory_space<vmem>>, vector<4x32xf32>
    %c0_11 = arith.constant 0 : index
    %c0_12 = arith.constant 0 : index
    %28 = vector.load %arg4[%c0_11, %c0_12] : memref<1088x128xf32, #tpu.memory_space<vmem>>, vector<112x16xf32>
    %cst_13 = arith.constant dense<0.000000e+00> : vector<112x32xf32>
    %29 = tpu.matmul %28, %26, %cst_13 {dimension_numbers = #tpu.dot_dimension_numbers<[1], [0], [0], [1], [0, 0, 1, 1], [], []>} : vector<112x16xf32>, vector<16x32xf32>, vector<112x32xf32> -> vector<112x32xf32>
    %c112 = arith.constant 112 : index
    %c0_14 = arith.constant 0 : index
    %30 = vector.load %arg4[%c112, %c0_14] : memref<1088x128xf32, #tpu.memory_space<vmem>>, vector<112x4xf32>
    %cst_15 = arith.constant dense<0.000000e+00> : vector<112x32xf32>
    %31 = tpu.matmul %30, %27, %cst_15 {dimension_numbers = #tpu.dot_dimension_numbers<[1], [0], [0], [1], [0, 0, 1, 1], [], []>} : vector<112x4xf32>, vector<4x32xf32>, vector<112x32xf32> -> vector<112x32xf32>
    %32 = arith.addf %29, %31 : vector<112x32xf32>
    %33 = vector.extract_strided_slice %32 {offsets = [48, 0], sizes = [16, 32], strides = [1, 1]} : vector<112x32xf32> to vector<16x32xf32>
    %34 = vector.extract_strided_slice %32 {offsets = [0, 0], sizes = [16, 32], strides = [1, 1]} : vector<112x32xf32> to vector<16x32xf32>
    %c848 = arith.constant 848 : index
    %c0_16 = arith.constant 0 : index
    %35 = vector.load %arg4[%c848, %c0_16] : memref<1088x128xf32, #tpu.memory_space<vmem>>, vector<32x32xf32>
    %cst_17 = arith.constant dense<0.000000e+00> : vector<16x32xf32>
    %36 = tpu.matmul %34, %35, %cst_17 {dimension_numbers = #tpu.dot_dimension_numbers<[1], [0], [0], [1], [0, 0, 1, 1], [], []>} : vector<16x32xf32>, vector<32x32xf32>, vector<16x32xf32> -> vector<16x32xf32>
    %37 = arith.addf %33, %36 : vector<16x32xf32>
    %38 = vector.extract_strided_slice %32 {offsets = [16, 0], sizes = [16, 32], strides = [1, 1]} : vector<112x32xf32> to vector<16x32xf32>
    %c880 = arith.constant 880 : index
    %c0_18 = arith.constant 0 : index
    %39 = vector.load %arg4[%c880, %c0_18] : memref<1088x128xf32, #tpu.memory_space<vmem>>, vector<32x32xf32>
    %cst_19 = arith.constant dense<0.000000e+00> : vector<16x32xf32>
    %40 = tpu.matmul %38, %39, %cst_19 {dimension_numbers = #tpu.dot_dimension_numbers<[1], [0], [0], [1], [0, 0, 1, 1], [], []>} : vector<16x32xf32>, vector<32x32xf32>, vector<16x32xf32> -> vector<16x32xf32>
    %41 = arith.addf %37, %40 : vector<16x32xf32>
    %42 = vector.extract_strided_slice %32 {offsets = [32, 0], sizes = [16, 32], strides = [1, 1]} : vector<112x32xf32> to vector<16x32xf32>
    %c912 = arith.constant 912 : index
    %c0_20 = arith.constant 0 : index
    %43 = vector.load %arg4[%c912, %c0_20] : memref<1088x128xf32, #tpu.memory_space<vmem>>, vector<32x32xf32>
    %cst_21 = arith.constant dense<0.000000e+00> : vector<16x32xf32>
    %44 = tpu.matmul %42, %43, %cst_21 {dimension_numbers = #tpu.dot_dimension_numbers<[1], [0], [0], [1], [0, 0, 1, 1], [], []>} : vector<16x32xf32>, vector<32x32xf32>, vector<16x32xf32> -> vector<16x32xf32>
    %45 = arith.addf %41, %44 : vector<16x32xf32>
    %46 = vector.extract_strided_slice %32 {offsets = [64, 0], sizes = [16, 32], strides = [1, 1]} : vector<112x32xf32> to vector<16x32xf32>
    %c944 = arith.constant 944 : index
    %c0_22 = arith.constant 0 : index
    %47 = vector.load %arg4[%c944, %c0_22] : memref<1088x128xf32, #tpu.memory_space<vmem>>, vector<32x32xf32>
    %cst_23 = arith.constant dense<0.000000e+00> : vector<16x32xf32>
    %48 = tpu.matmul %46, %47, %cst_23 {dimension_numbers = #tpu.dot_dimension_numbers<[1], [0], [0], [1], [0, 0, 1, 1], [], []>} : vector<16x32xf32>, vector<32x32xf32>, vector<16x32xf32> -> vector<16x32xf32>
    %49 = arith.addf %45, %48 : vector<16x32xf32>
    %50 = vector.extract_strided_slice %32 {offsets = [80, 0], sizes = [16, 32], strides = [1, 1]} : vector<112x32xf32> to vector<16x32xf32>
    %c976 = arith.constant 976 : index
    %c0_24 = arith.constant 0 : index
    %51 = vector.load %arg4[%c976, %c0_24] : memref<1088x128xf32, #tpu.memory_space<vmem>>, vector<32x32xf32>
    %cst_25 = arith.constant dense<0.000000e+00> : vector<16x32xf32>
    %52 = tpu.matmul %50, %51, %cst_25 {dimension_numbers = #tpu.dot_dimension_numbers<[1], [0], [0], [1], [0, 0, 1, 1], [], []>} : vector<16x32xf32>, vector<32x32xf32>, vector<16x32xf32> -> vector<16x32xf32>
    %53 = arith.addf %49, %52 : vector<16x32xf32>
    %54 = vector.extract_strided_slice %32 {offsets = [96, 0], sizes = [16, 32], strides = [1, 1]} : vector<112x32xf32> to vector<16x32xf32>
    %c1008 = arith.constant 1008 : index
    %c0_26 = arith.constant 0 : index
    %55 = vector.load %arg4[%c1008, %c0_26] : memref<1088x128xf32, #tpu.memory_space<vmem>>, vector<32x32xf32>
    %cst_27 = arith.constant dense<0.000000e+00> : vector<16x32xf32>
    %56 = tpu.matmul %54, %55, %cst_27 {dimension_numbers = #tpu.dot_dimension_numbers<[1], [0], [0], [1], [0, 0, 1, 1], [], []>} : vector<16x32xf32>, vector<32x32xf32>, vector<16x32xf32> -> vector<16x32xf32>
    %57 = arith.addf %53, %56 : vector<16x32xf32>
    %c0_28 = arith.constant 0 : index
    %c64 = arith.constant 64 : index
    %58 = vector.load %arg4[%c0_28, %c64] : memref<1088x128xf32, #tpu.memory_space<vmem>>, vector<16x1xf32>
    %59 = vector.broadcast %58 : vector<16x1xf32> to vector<16x32xf32>
    %60 = arith.addf %57, %59 : vector<16x32xf32>
    %cst_29 = arith.constant 0.000000e+00 : f32
    %61 = vector.broadcast %cst_29 : f32 to vector<16x32xf32>
    %62 = arith.maximumf %60, %61 : vector<16x32xf32>
    %c224 = arith.constant 224 : index
    %c0_30 = arith.constant 0 : index
    %63 = vector.load %arg4[%c224, %c0_30] : memref<1088x128xf32, #tpu.memory_space<vmem>>, vector<48x16xf32>
    %cst_31 = arith.constant dense<0.000000e+00> : vector<48x32xf32>
    %64 = tpu.matmul %63, %62, %cst_31 {dimension_numbers = #tpu.dot_dimension_numbers<[1], [0], [0], [1], [0, 0, 1, 1], [], []>} : vector<48x16xf32>, vector<16x32xf32>, vector<48x32xf32> -> vector<48x32xf32>
    %65 = vector.extract_strided_slice %64 {offsets = [16, 0], sizes = [16, 32], strides = [1, 1]} : vector<48x32xf32> to vector<16x32xf32>
    %66 = vector.extract_strided_slice %64 {offsets = [0, 0], sizes = [16, 32], strides = [1, 1]} : vector<48x32xf32> to vector<16x32xf32>
    %c912_32 = arith.constant 912 : index
    %c0_33 = arith.constant 0 : index
    %67 = vector.load %arg4[%c912_32, %c0_33] : memref<1088x128xf32, #tpu.memory_space<vmem>>, vector<32x32xf32>
    %cst_34 = arith.constant dense<0.000000e+00> : vector<16x32xf32>
    %68 = tpu.matmul %66, %67, %cst_34 {dimension_numbers = #tpu.dot_dimension_numbers<[1], [0], [0], [1], [0, 0, 1, 1], [], []>} : vector<16x32xf32>, vector<32x32xf32>, vector<16x32xf32> -> vector<16x32xf32>
    %69 = arith.addf %65, %68 : vector<16x32xf32>
    %70 = vector.extract_strided_slice %64 {offsets = [32, 0], sizes = [16, 32], strides = [1, 1]} : vector<48x32xf32> to vector<16x32xf32>
    %c944_35 = arith.constant 944 : index
    %c0_36 = arith.constant 0 : index
    %71 = vector.load %arg4[%c944_35, %c0_36] : memref<1088x128xf32, #tpu.memory_space<vmem>>, vector<32x32xf32>
    %cst_37 = arith.constant dense<0.000000e+00> : vector<16x32xf32>
    %72 = tpu.matmul %70, %71, %cst_37 {dimension_numbers = #tpu.dot_dimension_numbers<[1], [0], [0], [1], [0, 0, 1, 1], [], []>} : vector<16x32xf32>, vector<32x32xf32>, vector<16x32xf32> -> vector<16x32xf32>
    %73 = arith.addf %69, %72 : vector<16x32xf32>
    %c224_38 = arith.constant 224 : index
    %c64_39 = arith.constant 64 : index
    %74 = vector.load %arg4[%c224_38, %c64_39] : memref<1088x128xf32, #tpu.memory_space<vmem>>, vector<16x1xf32>
    %75 = vector.broadcast %74 : vector<16x1xf32> to vector<16x32xf32>
    %76 = arith.addf %73, %75 : vector<16x32xf32>
    %cst_40 = arith.constant 0.000000e+00 : f32
    %77 = vector.broadcast %cst_40 : f32 to vector<16x32xf32>
    %78 = arith.maximumf %76, %77 : vector<16x32xf32>
    %c320 = arith.constant 320 : index
    %c0_41 = arith.constant 0 : index
    %79 = vector.load %arg4[%c320, %c0_41] : memref<1088x128xf32, #tpu.memory_space<vmem>>, vector<16x16xf32>
    %cst_42 = arith.constant dense<0.000000e+00> : vector<16x32xf32>
    %80 = tpu.matmul %79, %62, %cst_42 {dimension_numbers = #tpu.dot_dimension_numbers<[1], [0], [0], [1], [0, 0, 1, 1], [], []>} : vector<16x16xf32>, vector<16x32xf32>, vector<16x32xf32> -> vector<16x32xf32>
    %c320_43 = arith.constant 320 : index
    %c64_44 = arith.constant 64 : index
    %81 = vector.load %arg4[%c320_43, %c64_44] : memref<1088x128xf32, #tpu.memory_space<vmem>>, vector<16x1xf32>
    %82 = vector.broadcast %81 : vector<16x1xf32> to vector<16x32xf32>
    %83 = arith.addf %80, %82 : vector<16x32xf32>
    %c272 = arith.constant 272 : index
    %c0_45 = arith.constant 0 : index
    %84 = vector.load %arg4[%c272, %c0_45] : memref<1088x128xf32, #tpu.memory_space<vmem>>, vector<48x16xf32>
    %cst_46 = arith.constant dense<0.000000e+00> : vector<48x32xf32>
    %85 = tpu.matmul %84, %78, %cst_46 {dimension_numbers = #tpu.dot_dimension_numbers<[1], [0], [0], [1], [0, 0, 1, 1], [], []>} : vector<48x16xf32>, vector<16x32xf32>, vector<48x32xf32> -> vector<48x32xf32>
    %86 = vector.extract_strided_slice %85 {offsets = [16, 0], sizes = [16, 32], strides = [1, 1]} : vector<48x32xf32> to vector<16x32xf32>
    %87 = vector.extract_strided_slice %85 {offsets = [0, 0], sizes = [16, 32], strides = [1, 1]} : vector<48x32xf32> to vector<16x32xf32>
    %c912_47 = arith.constant 912 : index
    %c0_48 = arith.constant 0 : index
    %88 = vector.load %arg4[%c912_47, %c0_48] : memref<1088x128xf32, #tpu.memory_space<vmem>>, vector<32x32xf32>
    %cst_49 = arith.constant dense<0.000000e+00> : vector<16x32xf32>
    %89 = tpu.matmul %87, %88, %cst_49 {dimension_numbers = #tpu.dot_dimension_numbers<[1], [0], [0], [1], [0, 0, 1, 1], [], []>} : vector<16x32xf32>, vector<32x32xf32>, vector<16x32xf32> -> vector<16x32xf32>
    %90 = arith.addf %86, %89 : vector<16x32xf32>
    %91 = vector.extract_strided_slice %85 {offsets = [32, 0], sizes = [16, 32], strides = [1, 1]} : vector<48x32xf32> to vector<16x32xf32>
    %c944_50 = arith.constant 944 : index
    %c0_51 = arith.constant 0 : index
    %92 = vector.load %arg4[%c944_50, %c0_51] : memref<1088x128xf32, #tpu.memory_space<vmem>>, vector<32x32xf32>
    %cst_52 = arith.constant dense<0.000000e+00> : vector<16x32xf32>
    %93 = tpu.matmul %91, %92, %cst_52 {dimension_numbers = #tpu.dot_dimension_numbers<[1], [0], [0], [1], [0, 0, 1, 1], [], []>} : vector<16x32xf32>, vector<32x32xf32>, vector<16x32xf32> -> vector<16x32xf32>
    %94 = arith.addf %90, %93 : vector<16x32xf32>
    %c272_53 = arith.constant 272 : index
    %c64_54 = arith.constant 64 : index
    %95 = vector.load %arg4[%c272_53, %c64_54] : memref<1088x128xf32, #tpu.memory_space<vmem>>, vector<16x1xf32>
    %96 = vector.broadcast %95 : vector<16x1xf32> to vector<16x32xf32>
    %97 = arith.addf %94, %96 : vector<16x32xf32>
    %cst_55 = arith.constant 0.000000e+00 : f32
    %98 = vector.broadcast %cst_55 : f32 to vector<16x32xf32>
    %99 = arith.maximumf %97, %98 : vector<16x32xf32>
    %100 = arith.addf %99, %83 : vector<16x32xf32>
    %c336 = arith.constant 336 : index
    %c0_56 = arith.constant 0 : index
    %101 = vector.load %arg4[%c336, %c0_56] : memref<1088x128xf32, #tpu.memory_space<vmem>>, vector<48x16xf32>
    %cst_57 = arith.constant dense<0.000000e+00> : vector<48x32xf32>
    %102 = tpu.matmul %101, %100, %cst_57 {dimension_numbers = #tpu.dot_dimension_numbers<[1], [0], [0], [1], [0, 0, 1, 1], [], []>} : vector<48x16xf32>, vector<16x32xf32>, vector<48x32xf32> -> vector<48x32xf32>
    %103 = vector.extract_strided_slice %102 {offsets = [16, 0], sizes = [16, 32], strides = [1, 1]} : vector<48x32xf32> to vector<16x32xf32>
    %104 = vector.extract_strided_slice %102 {offsets = [0, 0], sizes = [16, 32], strides = [1, 1]} : vector<48x32xf32> to vector<16x32xf32>
    %c912_58 = arith.constant 912 : index
    %c0_59 = arith.constant 0 : index
    %105 = vector.load %arg4[%c912_58, %c0_59] : memref<1088x128xf32, #tpu.memory_space<vmem>>, vector<32x32xf32>
    %cst_60 = arith.constant dense<0.000000e+00> : vector<16x32xf32>
    %106 = tpu.matmul %104, %105, %cst_60 {dimension_numbers = #tpu.dot_dimension_numbers<[1], [0], [0], [1], [0, 0, 1, 1], [], []>} : vector<16x32xf32>, vector<32x32xf32>, vector<16x32xf32> -> vector<16x32xf32>
    %107 = arith.addf %103, %106 : vector<16x32xf32>
    %108 = vector.extract_strided_slice %102 {offsets = [32, 0], sizes = [16, 32], strides = [1, 1]} : vector<48x32xf32> to vector<16x32xf32>
    %c944_61 = arith.constant 944 : index
    %c0_62 = arith.constant 0 : index
    %109 = vector.load %arg4[%c944_61, %c0_62] : memref<1088x128xf32, #tpu.memory_space<vmem>>, vector<32x32xf32>
    %cst_63 = arith.constant dense<0.000000e+00> : vector<16x32xf32>
    %110 = tpu.matmul %108, %109, %cst_63 {dimension_numbers = #tpu.dot_dimension_numbers<[1], [0], [0], [1], [0, 0, 1, 1], [], []>} : vector<16x32xf32>, vector<32x32xf32>, vector<16x32xf32> -> vector<16x32xf32>
    %111 = arith.addf %107, %110 : vector<16x32xf32>
    %c336_64 = arith.constant 336 : index
    %c64_65 = arith.constant 64 : index
    %112 = vector.load %arg4[%c336_64, %c64_65] : memref<1088x128xf32, #tpu.memory_space<vmem>>, vector<16x1xf32>
    %113 = vector.broadcast %112 : vector<16x1xf32> to vector<16x32xf32>
    %114 = arith.addf %111, %113 : vector<16x32xf32>
    %cst_66 = arith.constant 0.000000e+00 : f32
    %115 = vector.broadcast %cst_66 : f32 to vector<16x32xf32>
    %116 = arith.maximumf %114, %115 : vector<16x32xf32>
    %c384 = arith.constant 384 : index
    %c0_67 = arith.constant 0 : index
    %117 = vector.load %arg4[%c384, %c0_67] : memref<1088x128xf32, #tpu.memory_space<vmem>>, vector<48x16xf32>
    %cst_68 = arith.constant dense<0.000000e+00> : vector<48x32xf32>
    %118 = tpu.matmul %117, %116, %cst_68 {dimension_numbers = #tpu.dot_dimension_numbers<[1], [0], [0], [1], [0, 0, 1, 1], [], []>} : vector<48x16xf32>, vector<16x32xf32>, vector<48x32xf32> -> vector<48x32xf32>
    %119 = vector.extract_strided_slice %118 {offsets = [16, 0], sizes = [16, 32], strides = [1, 1]} : vector<48x32xf32> to vector<16x32xf32>
    %120 = vector.extract_strided_slice %118 {offsets = [0, 0], sizes = [16, 32], strides = [1, 1]} : vector<48x32xf32> to vector<16x32xf32>
    %c912_69 = arith.constant 912 : index
    %c0_70 = arith.constant 0 : index
    %121 = vector.load %arg4[%c912_69, %c0_70] : memref<1088x128xf32, #tpu.memory_space<vmem>>, vector<32x32xf32>
    %cst_71 = arith.constant dense<0.000000e+00> : vector<16x32xf32>
    %122 = tpu.matmul %120, %121, %cst_71 {dimension_numbers = #tpu.dot_dimension_numbers<[1], [0], [0], [1], [0, 0, 1, 1], [], []>} : vector<16x32xf32>, vector<32x32xf32>, vector<16x32xf32> -> vector<16x32xf32>
    %123 = arith.addf %119, %122 : vector<16x32xf32>
    %124 = vector.extract_strided_slice %118 {offsets = [32, 0], sizes = [16, 32], strides = [1, 1]} : vector<48x32xf32> to vector<16x32xf32>
    %c944_72 = arith.constant 944 : index
    %c0_73 = arith.constant 0 : index
    %125 = vector.load %arg4[%c944_72, %c0_73] : memref<1088x128xf32, #tpu.memory_space<vmem>>, vector<32x32xf32>
    %cst_74 = arith.constant dense<0.000000e+00> : vector<16x32xf32>
    %126 = tpu.matmul %124, %125, %cst_74 {dimension_numbers = #tpu.dot_dimension_numbers<[1], [0], [0], [1], [0, 0, 1, 1], [], []>} : vector<16x32xf32>, vector<32x32xf32>, vector<16x32xf32> -> vector<16x32xf32>
    %127 = arith.addf %123, %126 : vector<16x32xf32>
    %c384_75 = arith.constant 384 : index
    %c64_76 = arith.constant 64 : index
    %128 = vector.load %arg4[%c384_75, %c64_76] : memref<1088x128xf32, #tpu.memory_space<vmem>>, vector<16x1xf32>
    %129 = vector.broadcast %128 : vector<16x1xf32> to vector<16x32xf32>
    %130 = arith.addf %127, %129 : vector<16x32xf32>
    %cst_77 = arith.constant 0.000000e+00 : f32
    %131 = vector.broadcast %cst_77 : f32 to vector<16x32xf32>
    %132 = arith.maximumf %130, %131 : vector<16x32xf32>
    %133 = arith.addf %132, %100 : vector<16x32xf32>
    %c432 = arith.constant 432 : index
    %c0_78 = arith.constant 0 : index
    %134 = vector.load %arg4[%c432, %c0_78] : memref<1088x128xf32, #tpu.memory_space<vmem>>, vector<96x16xf32>
    %cst_79 = arith.constant dense<0.000000e+00> : vector<96x32xf32>
    %135 = tpu.matmul %134, %133, %cst_79 {dimension_numbers = #tpu.dot_dimension_numbers<[1], [0], [0], [1], [0, 0, 1, 1], [], []>} : vector<96x16xf32>, vector<16x32xf32>, vector<96x32xf32> -> vector<96x32xf32>
    %136 = vector.extract_strided_slice %135 {offsets = [32, 0], sizes = [32, 32], strides = [1, 1]} : vector<96x32xf32> to vector<32x32xf32>
    %137 = vector.extract_strided_slice %135 {offsets = [0, 0], sizes = [32, 32], strides = [1, 1]} : vector<96x32xf32> to vector<32x32xf32>
    %c912_80 = arith.constant 912 : index
    %c0_81 = arith.constant 0 : index
    %138 = vector.load %arg4[%c912_80, %c0_81] : memref<1088x128xf32, #tpu.memory_space<vmem>>, vector<32x32xf32>
    %cst_82 = arith.constant dense<0.000000e+00> : vector<32x32xf32>
    %139 = tpu.matmul %137, %138, %cst_82 {dimension_numbers = #tpu.dot_dimension_numbers<[1], [0], [0], [1], [0, 0, 1, 1], [], []>} : vector<32x32xf32>, vector<32x32xf32>, vector<32x32xf32> -> vector<32x32xf32>
    %140 = arith.addf %136, %139 : vector<32x32xf32>
    %141 = vector.extract_strided_slice %135 {offsets = [64, 0], sizes = [32, 32], strides = [1, 1]} : vector<96x32xf32> to vector<32x32xf32>
    %c944_83 = arith.constant 944 : index
    %c0_84 = arith.constant 0 : index
    %142 = vector.load %arg4[%c944_83, %c0_84] : memref<1088x128xf32, #tpu.memory_space<vmem>>, vector<32x32xf32>
    %cst_85 = arith.constant dense<0.000000e+00> : vector<32x32xf32>
    %143 = tpu.matmul %141, %142, %cst_85 {dimension_numbers = #tpu.dot_dimension_numbers<[1], [0], [0], [1], [0, 0, 1, 1], [], []>} : vector<32x32xf32>, vector<32x32xf32>, vector<32x32xf32> -> vector<32x32xf32>
    %144 = arith.addf %140, %143 : vector<32x32xf32>
    %c432_86 = arith.constant 432 : index
    %c64_87 = arith.constant 64 : index
    %145 = vector.load %arg4[%c432_86, %c64_87] : memref<1088x128xf32, #tpu.memory_space<vmem>>, vector<32x1xf32>
    %146 = vector.broadcast %145 : vector<32x1xf32> to vector<32x32xf32>
    %147 = arith.addf %144, %146 : vector<32x32xf32>
    %cst_88 = arith.constant 0.000000e+00 : f32
    %148 = vector.broadcast %cst_88 : f32 to vector<32x32xf32>
    %149 = arith.maximumf %147, %148 : vector<32x32xf32>
    %c624 = arith.constant 624 : index
    %c0_89 = arith.constant 0 : index
    %150 = vector.load %arg4[%c624, %c0_89] : memref<1088x128xf32, #tpu.memory_space<vmem>>, vector<32x16xf32>
    %cst_90 = arith.constant dense<0.000000e+00> : vector<32x32xf32>
    %151 = tpu.matmul %150, %133, %cst_90 {dimension_numbers = #tpu.dot_dimension_numbers<[1], [0], [0], [1], [0, 0, 1, 1], [], []>} : vector<32x16xf32>, vector<16x32xf32>, vector<32x32xf32> -> vector<32x32xf32>
    %c624_91 = arith.constant 624 : index
    %c64_92 = arith.constant 64 : index
    %152 = vector.load %arg4[%c624_91, %c64_92] : memref<1088x128xf32, #tpu.memory_space<vmem>>, vector<32x1xf32>
    %153 = vector.broadcast %152 : vector<32x1xf32> to vector<32x32xf32>
    %154 = arith.addf %151, %153 : vector<32x32xf32>
    %c528 = arith.constant 528 : index
    %c0_93 = arith.constant 0 : index
    %155 = vector.load %arg4[%c528, %c0_93] : memref<1088x128xf32, #tpu.memory_space<vmem>>, vector<96x32xf32>
    %cst_94 = arith.constant dense<0.000000e+00> : vector<96x32xf32>
    %156 = tpu.matmul %155, %149, %cst_94 {dimension_numbers = #tpu.dot_dimension_numbers<[1], [0], [0], [1], [0, 0, 1, 1], [], []>} : vector<96x32xf32>, vector<32x32xf32>, vector<96x32xf32> -> vector<96x32xf32>
    %157 = vector.extract_strided_slice %156 {offsets = [32, 0], sizes = [32, 32], strides = [1, 1]} : vector<96x32xf32> to vector<32x32xf32>
    %158 = vector.extract_strided_slice %156 {offsets = [0, 0], sizes = [32, 32], strides = [1, 1]} : vector<96x32xf32> to vector<32x32xf32>
    %c912_95 = arith.constant 912 : index
    %c0_96 = arith.constant 0 : index
    %159 = vector.load %arg4[%c912_95, %c0_96] : memref<1088x128xf32, #tpu.memory_space<vmem>>, vector<32x32xf32>
    %cst_97 = arith.constant dense<0.000000e+00> : vector<32x32xf32>
    %160 = tpu.matmul %158, %159, %cst_97 {dimension_numbers = #tpu.dot_dimension_numbers<[1], [0], [0], [1], [0, 0, 1, 1], [], []>} : vector<32x32xf32>, vector<32x32xf32>, vector<32x32xf32> -> vector<32x32xf32>
    %161 = arith.addf %157, %160 : vector<32x32xf32>
    %162 = vector.extract_strided_slice %156 {offsets = [64, 0], sizes = [32, 32], strides = [1, 1]} : vector<96x32xf32> to vector<32x32xf32>
    %c944_98 = arith.constant 944 : index
    %c0_99 = arith.constant 0 : index
    %163 = vector.load %arg4[%c944_98, %c0_99] : memref<1088x128xf32, #tpu.memory_space<vmem>>, vector<32x32xf32>
    %cst_100 = arith.constant dense<0.000000e+00> : vector<32x32xf32>
    %164 = tpu.matmul %162, %163, %cst_100 {dimension_numbers = #tpu.dot_dimension_numbers<[1], [0], [0], [1], [0, 0, 1, 1], [], []>} : vector<32x32xf32>, vector<32x32xf32>, vector<32x32xf32> -> vector<32x32xf32>
    %165 = arith.addf %161, %164 : vector<32x32xf32>
    %c528_101 = arith.constant 528 : index
    %c64_102 = arith.constant 64 : index
    %166 = vector.load %arg4[%c528_101, %c64_102] : memref<1088x128xf32, #tpu.memory_space<vmem>>, vector<32x1xf32>
    %167 = vector.broadcast %166 : vector<32x1xf32> to vector<32x32xf32>
    %168 = arith.addf %165, %167 : vector<32x32xf32>
    %cst_103 = arith.constant 0.000000e+00 : f32
    %169 = vector.broadcast %cst_103 : f32 to vector<32x32xf32>
    %170 = arith.maximumf %168, %169 : vector<32x32xf32>
    %171 = arith.addf %170, %154 : vector<32x32xf32>
    %c656 = arith.constant 656 : index
    %c0_104 = arith.constant 0 : index
    %172 = vector.load %arg4[%c656, %c0_104] : memref<1088x128xf32, #tpu.memory_space<vmem>>, vector<96x32xf32>
    %cst_105 = arith.constant dense<0.000000e+00> : vector<96x32xf32>
    %173 = tpu.matmul %172, %171, %cst_105 {dimension_numbers = #tpu.dot_dimension_numbers<[1], [0], [0], [1], [0, 0, 1, 1], [], []>} : vector<96x32xf32>, vector<32x32xf32>, vector<96x32xf32> -> vector<96x32xf32>
    %174 = vector.extract_strided_slice %173 {offsets = [32, 0], sizes = [32, 32], strides = [1, 1]} : vector<96x32xf32> to vector<32x32xf32>
    %175 = vector.extract_strided_slice %173 {offsets = [0, 0], sizes = [32, 32], strides = [1, 1]} : vector<96x32xf32> to vector<32x32xf32>
    %c912_106 = arith.constant 912 : index
    %c0_107 = arith.constant 0 : index
    %176 = vector.load %arg4[%c912_106, %c0_107] : memref<1088x128xf32, #tpu.memory_space<vmem>>, vector<32x32xf32>
    %cst_108 = arith.constant dense<0.000000e+00> : vector<32x32xf32>
    %177 = tpu.matmul %175, %176, %cst_108 {dimension_numbers = #tpu.dot_dimension_numbers<[1], [0], [0], [1], [0, 0, 1, 1], [], []>} : vector<32x32xf32>, vector<32x32xf32>, vector<32x32xf32> -> vector<32x32xf32>
    %178 = arith.addf %174, %177 : vector<32x32xf32>
    %179 = vector.extract_strided_slice %173 {offsets = [64, 0], sizes = [32, 32], strides = [1, 1]} : vector<96x32xf32> to vector<32x32xf32>
    %c944_109 = arith.constant 944 : index
    %c0_110 = arith.constant 0 : index
    %180 = vector.load %arg4[%c944_109, %c0_110] : memref<1088x128xf32, #tpu.memory_space<vmem>>, vector<32x32xf32>
    %cst_111 = arith.constant dense<0.000000e+00> : vector<32x32xf32>
    %181 = tpu.matmul %179, %180, %cst_111 {dimension_numbers = #tpu.dot_dimension_numbers<[1], [0], [0], [1], [0, 0, 1, 1], [], []>} : vector<32x32xf32>, vector<32x32xf32>, vector<32x32xf32> -> vector<32x32xf32>
    %182 = arith.addf %178, %181 : vector<32x32xf32>
    %c656_112 = arith.constant 656 : index
    %c64_113 = arith.constant 64 : index
    %183 = vector.load %arg4[%c656_112, %c64_113] : memref<1088x128xf32, #tpu.memory_space<vmem>>, vector<32x1xf32>
    %184 = vector.broadcast %183 : vector<32x1xf32> to vector<32x32xf32>
    %185 = arith.addf %182, %184 : vector<32x32xf32>
    %cst_114 = arith.constant 0.000000e+00 : f32
    %186 = vector.broadcast %cst_114 : f32 to vector<32x32xf32>
    %187 = arith.maximumf %185, %186 : vector<32x32xf32>
    %c752 = arith.constant 752 : index
    %c0_115 = arith.constant 0 : index
    %188 = vector.load %arg4[%c752, %c0_115] : memref<1088x128xf32, #tpu.memory_space<vmem>>, vector<96x32xf32>
    %cst_116 = arith.constant dense<0.000000e+00> : vector<96x32xf32>
    %189 = tpu.matmul %188, %187, %cst_116 {dimension_numbers = #tpu.dot_dimension_numbers<[1], [0], [0], [1], [0, 0, 1, 1], [], []>} : vector<96x32xf32>, vector<32x32xf32>, vector<96x32xf32> -> vector<96x32xf32>
    %190 = vector.extract_strided_slice %189 {offsets = [32, 0], sizes = [32, 32], strides = [1, 1]} : vector<96x32xf32> to vector<32x32xf32>
    %191 = vector.extract_strided_slice %189 {offsets = [0, 0], sizes = [32, 32], strides = [1, 1]} : vector<96x32xf32> to vector<32x32xf32>
    %c912_117 = arith.constant 912 : index
    %c0_118 = arith.constant 0 : index
    %192 = vector.load %arg4[%c912_117, %c0_118] : memref<1088x128xf32, #tpu.memory_space<vmem>>, vector<32x32xf32>
    %cst_119 = arith.constant dense<0.000000e+00> : vector<32x32xf32>
    %193 = tpu.matmul %191, %192, %cst_119 {dimension_numbers = #tpu.dot_dimension_numbers<[1], [0], [0], [1], [0, 0, 1, 1], [], []>} : vector<32x32xf32>, vector<32x32xf32>, vector<32x32xf32> -> vector<32x32xf32>
    %194 = arith.addf %190, %193 : vector<32x32xf32>
    %195 = vector.extract_strided_slice %189 {offsets = [64, 0], sizes = [32, 32], strides = [1, 1]} : vector<96x32xf32> to vector<32x32xf32>
    %c944_120 = arith.constant 944 : index
    %c0_121 = arith.constant 0 : index
    %196 = vector.load %arg4[%c944_120, %c0_121] : memref<1088x128xf32, #tpu.memory_space<vmem>>, vector<32x32xf32>
    %cst_122 = arith.constant dense<0.000000e+00> : vector<32x32xf32>
    %197 = tpu.matmul %195, %196, %cst_122 {dimension_numbers = #tpu.dot_dimension_numbers<[1], [0], [0], [1], [0, 0, 1, 1], [], []>} : vector<32x32xf32>, vector<32x32xf32>, vector<32x32xf32> -> vector<32x32xf32>
    %198 = arith.addf %194, %197 : vector<32x32xf32>
    %c752_123 = arith.constant 752 : index
    %c64_124 = arith.constant 64 : index
    %199 = vector.load %arg4[%c752_123, %c64_124] : memref<1088x128xf32, #tpu.memory_space<vmem>>, vector<32x1xf32>
    %200 = vector.broadcast %199 : vector<32x1xf32> to vector<32x32xf32>
    %201 = arith.addf %198, %200 : vector<32x32xf32>
    %cst_125 = arith.constant 0.000000e+00 : f32
    %202 = vector.broadcast %cst_125 : f32 to vector<32x32xf32>
    %203 = arith.maximumf %201, %202 : vector<32x32xf32>
    %204 = arith.addf %203, %171 : vector<32x32xf32>
    %c0_126 = arith.constant 0 : index
    %c0_127 = arith.constant 0 : index
    %205 = vector.load %arg5[%c0_126, %c0_127] : memref<32x32xf32, #tpu.memory_space<vmem>>, vector<32x32xf32>
    tpu.vector_store %arg5[%c0_126, %c0_127], %204 {strides = array<i32>} : memref<32x32xf32, #tpu.memory_space<vmem>>, vector<32x32xf32>,
    return
  }
  func.func @transform_0(%arg0: i32) -> (i32, i32) {
    %c0_i32 = arith.constant 0 : i32
    %c0_i32_0 = arith.constant 0 : i32
    %c0_i32_1 = arith.constant 0 : i32
    return %c0_i32, %c0_i32_0 : i32, i32
  }
  func.func @transform_1(%arg0: i32) -> (i32, i32) {
    %c0_i32 = arith.constant 0 : i32
    %c0_i32_0 = arith.constant 0 : i32
    %c0_i32_1 = arith.constant 0 : i32
    return %c0_i32, %c0_i32_0 : i32, i32
  }
  func.func @transform_2(%arg0: i32) -> (i32, i32) {
    %c0_i32 = arith.constant 0 : i32
    %c0_i32_0 = arith.constant 0 : i32
    %c0_i32_1 = arith.constant 0 : i32
    return %c0_i32, %c0_i32_0 : i32, i32
  }
  func.func @transform_3(%arg0: i32) -> (i32, i32) {
    %c0_i32 = arith.constant 0 : i32
    %c0_i32_0 = arith.constant 0 : i32
    %c0_i32_1 = arith.constant 0 : i32
    return %c0_i32, %c0_i32_0 : i32, i32
  }
  func.func @transform_4(%arg0: i32) -> (i32, i32) {
    %c0_i32 = arith.constant 0 : i32
    %c0_i32_0 = arith.constant 0 : i32
    %c0_i32_1 = arith.constant 0 : i32
    return %c0_i32, %c0_i32_0 : i32, i32
  }
}

</mosaic_0001>

<llo_original>
// kernel: tpu_custom_call.1
$region0: #{tpu_custom_call.1}
  #allocation0 [shape = 'u32[]', space=smem, size = 0x4, offset = 0x4, fixed_abs, tag = 'smem constant byte address 0x4 - core index']
  #allocation1 [shape = 'u32[144,128]{1,0:T(1,128)}', space=vmem, size = 0x12000, scoped, tag = 'internal scratch']
  %s0 = inlined_call_operand.hbm [shape: f32[21,32], index: 0, kind: input, shape index: {}]
  %s1 = inlined_call_operand.hbm [shape: f32[4,32], index: 1, kind: input, shape index: {}]
  %s2 = inlined_call_operand.vmem [shape: s32[1,32], index: 2, kind: input, shape index: {}]
  %s3 = inlined_call_operand.hbm [shape: f32[1088,128], index: 3, kind: input, shape index: {}]
  %s4 = inlined_call_operand.hbm [shape: f32[32,32], index: 4, kind: output, shape index: {}]
  %s5 = sld [smem:[#allocation0]]
  $region38: #{tpu_custom_call.1} parent=0
    _
  %s7 = ssub.s32 1, %s5
  %s8 = scalar_select 0, %s7, %s5
  $region1: #{tpu_custom_call.1} parent=0
    #allocation2 [shape = 'u8[12288]{0}', space=vmem, size = 0x3000, scoped, tag = 'input window, operand 0, single buffered']
    #allocation3 [shape = 's32[1]{0}', space=sflag, size = 0x4, scoped, tag = 'scoped memory for tpu_custom_call.1']
    #allocation4 [shape = 's32[1]{0}', space=sflag, size = 0x4, scoped, tag = 'scoped memory for tpu_custom_call.1']
    #allocation5 [shape = 'u8[2048]{0}', space=vmem, size = 0x800, scoped, tag = 'input window, operand 1, single buffered']
    #allocation6 [shape = 's32[1]{0}', space=sflag, size = 0x4, scoped, tag = 'scoped memory for tpu_custom_call.1']
    #allocation7 [shape = 'u8[557056]{0}', space=vmem, size = 0x88000, scoped, tag = 'input window, operand 3, single buffered']
    #allocation8 [shape = 'u8[16384]{0}', space=vmem, size = 0x4000, scoped, tag = 'output window, operand 0, single buffered']
    %9 = vsyncpa [#allocation3], 0
    %10 = vsyncpa [#allocation6], 0
    %11 = vsyncpa [#allocation4], 0
    // Predicated region
    $region2: #{tpu_custom_call.1} parent=1 // pred_check
      _
    $region3: #{tpu_custom_call.1} parent=1 // pred_check_branch
      %13 = sbr.rel (0) target = $region5
    $region4: #{tpu_custom_call.1} parent=1 // pred_region
      %s15 = ssub.s32 384, 384
      %16 = vsyncadd [#allocation3], %s15
      %s17 = sshll.u32 [#allocation2], 4
      %s18 = int_to_ptr.vmem [resolvable:$true] %s17
      %23 = dma.hbm_to_vmem [thread:$0]  %s0, 384, %s18, [#allocation3], 128, 128, 8
    $region5: #{tpu_custom_call.1} parent=1 // pred_fallthru
      _
    // Predicated region
    $region6: #{tpu_custom_call.1} parent=1 // pred_check
      _
    $region7: #{tpu_custom_call.1} parent=1 // pred_check_branch
      %25 = sbr.rel (0) target = $region9
    $region8: #{tpu_custom_call.1} parent=1 // pred_region
      %s27 = ssub.s32 64, 64
      %28 = vsyncadd [#allocation6], %s27
      %s30 = sshll.u32 [#allocation5], 4
      %s31 = int_to_ptr.vmem [resolvable:$true] %s30
      %33 = dma.hbm_to_vmem [thread:$0]  %s1, 64, %s31, [#allocation6]
    $region9: #{tpu_custom_call.1} parent=1 // pred_fallthru
      _
    // Predicated region
    $region10: #{tpu_custom_call.1} parent=1 // pred_check
      _
    $region11: #{tpu_custom_call.1} parent=1 // pred_check_branch
      %35 = sbr.rel (0) target = $region13
    $region12: #{tpu_custom_call.1} parent=1 // pred_region
      _
    $region13: #{tpu_custom_call.1} parent=1 // pred_fallthru
      _
    // Predicated region
    $region14: #{tpu_custom_call.1} parent=1 // pred_check
      _
    $region15: #{tpu_custom_call.1} parent=1 // pred_check_branch
      %37 = sbr.rel (0) target = $region17
    $region16: #{tpu_custom_call.1} parent=1 // pred_region
      %s39 = ssub.s32 17408, 17408
      %40 = vsyncadd [#allocation6], %s39
      %s41 = sshll.u32 [#allocation7], 4
      %s42 = int_to_ptr.vmem [resolvable:$true] %s41
      %47 = dma.hbm_to_vmem [thread:$0]  %s3, 17408, %s42, [#allocation6], 128, 128, 8
    $region17: #{tpu_custom_call.1} parent=1 // pred_fallthru
      _
    // Predicated region
    $region18: #{tpu_custom_call.1} parent=1 // pred_check
      _
    $region19: #{tpu_custom_call.1} parent=1 // pred_check_branch
      %49 = sbr.rel (0) target = $region21
    $region20: #{tpu_custom_call.1} parent=1 // pred_region
      %50 = dma.done [#allocation3], 384
    $region21: #{tpu_custom_call.1} parent=1 // pred_fallthru
      _
    // Predicated region
    $region22: #{tpu_custom_call.1} parent=1 // pred_check
      _
    $region23: #{tpu_custom_call.1} parent=1 // pred_check_branch
      %52 = sbr.rel (0) target = $region25
    $region24: #{tpu_custom_call.1} parent=1 // pred_region
      %53 = dma.done [#allocation6], 64
    $region25: #{tpu_custom_call.1} parent=1 // pred_fallthru
      _
    // Predicated region
    $region26: #{tpu_custom_call.1} parent=1 // pred_check
      _
    $region27: #{tpu_custom_call.1} parent=1 // pred_check_branch
      %55 = sbr.rel (0) target = $region29
    $region28: #{tpu_custom_call.1} parent=1 // pred_region
      %56 = dma.done [#allocation6], 17408
    $region29: #{tpu_custom_call.1} parent=1 // pred_fallthru
      _
    %v57 = vld [vmem:[#allocation2] sm:$0xff]
    %v58 = vld [vmem:[#allocation2 + $0x8] sm:$0xff]
    %v59 = vld [vmem:[#allocation2 + $0x10] sm:$0x1f]
    %v60 = vld [vmem:[%s2] sm:$0x1]
    %v61 = vlaneseq
    %v62 = vshrl.u32 %v61, 7
    %v63 = vadd.s32 %v62, 8
    %v64 = vadd.s32 %v62, 16
    %vm65 = vcmask 261120
    %v66 = vsel %vm65, %v57, -inf
    %v67 = vsel %vm65, %v58, -inf
    %vm68 = vcmask 258048
    %v69 = vsel %vm68, %v59, -inf
    %v70 = vmax.f32 %v66, %v67
    %v71 = vmax.f32 %v70, %v69
    %v72 = vrot.slane %v71, 4
    %v73 = vmax.f32 %v71, %v72
    %v74 = vrot.slane %v73, 2
    %v75 = vmax.f32 %v73, %v74
    %v76 = vrot.slane %v75, 1
    %v77 = vmax.f32 %v75, %v76
    %vm78 = vcmp.eq.f32.partialorder %v57, %v77
    %vm79 = vcmp.eq.f32.partialorder %v58, %v77
    %vm80 = vcmp.eq.f32.partialorder %v59, %v77
    %v81 = vsel %vm78, %v62, 21
    %v82 = vsel %vm79, %v63, 21
    %v83 = vsel %vm80, %v64, 21
    %v84 = vsel %vm65, %v81, 2147483647
    %v85 = vsel %vm65, %v82, 2147483647
    %v86 = vsel %vm68, %v83, 2147483647
    %vm87 = vcmp.lt.s32.totalorder %v84, %v85
    %v88 = vsel %vm87, %v84, %v85
    %vm89 = vcmp.lt.s32.totalorder %v88, %v86
    %v90 = vsel %vm89, %v88, %v86
    %v91 = vrot.slane %v90, 4
    %vm92 = vcmp.lt.s32.totalorder %v90, %v91
    %v93 = vsel %vm92, %v90, %v91
    %v94 = vrot.slane %v93, 2
    %vm95 = vcmp.lt.s32.totalorder %v93, %v94
    %v96 = vsel %vm95, %v93, %v94
    %v97 = vrot.slane %v96, 1
    %vm98 = vcmp.lt.s32.totalorder %v96, %v97
    %v99 = vsel %vm98, %v96, %v97
    %vm100 = vcmp.eq.s32.totalorder %v62, %v99
    %vm101 = vcmp.eq.s32.totalorder %v63, %v99
    %vm102 = vcmp.eq.s32.totalorder %v64, %v99
    %v103 = vsel %vm100, 1, 0
    %v104 = vsel %vm101, 1, 0
    %v105 = vsel %vm102, 1, 0
    %v106 = vcvt.s32.f32 %v103
    %v107 = vcvt.s32.f32 %v104
    %v108 = vcvt.s32.f32 %v105
    %v109 = vlaneseq
    %v110 = vshrl.u32 %v109, 7
    %v111 = vsub.s32 0, %v110
    %v112 = vrot.slane %v60, %v111
    %vm113 = vcmp.eq.s32.totalorder %v62, %v112
    %vm114 = vcmp.eq.s32.totalorder %v63, %v112
    %vm115 = vcmp.eq.s32.totalorder %v64, %v112
    %v116 = vsel %vm113, 1, 0
    %v117 = vsel %vm114, 1, 0
    %v118 = vsel %vm115, 1, 0
    %v119 = vcvt.s32.f32 %v116
    %v120 = vcvt.s32.f32 %v117
    %v121 = vcvt.s32.f32 %v118
    %v122 = vld [vmem:[#allocation7 + $0x410] sm:$0xff]
    %v123 = vld [vmem:[#allocation7 + $0x418] sm:$0xff]
    %v124 = vld [vmem:[#allocation7 + $0x420] sm:$0xff]
    %v125 = vld [vmem:[#allocation7 + $0x428] sm:$0xff]
    %vm126 = vcmask 138240
    %v128 = vsel %vm126, %v124, 0
    %v131 = vsel %vm126, %v125, 0
    %vm133 = vcmask 1040384
    %v135 = vsel %vm133, %v121, 0
    %137 = vmatprep.subr.mxu0 0.0
    %138 = vmatpush1.msra.mxu0 0.0
    %139 = vmatprep.subr.mxu0 0.0
    %140 = vmatpush1.msra.mxu0 0.0
    %141 = vmatprep.subr.mxu0 0.0
    %142 = vmatpush1.msra.mxu0 0.0
    %143 = vmatprep.subr.mxu0 0.0
    %144 = vmatpush1.msra.mxu0 0.0
    %145 = vmatprep.subr.mxu0 0.0
    %146 = vmatpush1.msra.mxu0 0.0
    %147 = vmatprep.subr.mxu0 0.0
    %148 = vmatpush1.msra.mxu0 0.0
    %149 = vmatprep.subr.mxu0 0.0
    %150 = vmatpush1.msra.mxu0 0.0
    %151 = vmatprep.subr.mxu0 0.0
    %152 = vmatpush1.msra.mxu0 0.0
    %153 = vmatprep.subr.mxu0 0.0
    %154 = vmatpush1.msra.mxu0 0.0
    %155 = vmatprep.subr.mxu0 0.0
    %156 = vmatpush1.msra.mxu0 0.0
    %157 = vmatprep.subr.mxu0 0.0
    %158 = vmatpush1.msra.mxu0 0.0
    %159 = vmatprep.subr.mxu0 0.0
    %160 = vmatpush1.msra.mxu0 0.0
    %161 = vmatprep.subr.mxu0 0.0
    %162 = vmatpush1.msra.mxu0 0.0
    %163 = vmatprep.subr.mxu0 0.0
    %164 = vmatpush1.msra.mxu0 %v135
    %165 = vmatprep.subr.mxu0 0.0
    %166 = vmatpush1.msra.mxu0 %v120
    %167 = vmatprep.subr.mxu0 0.0
    %168 = vmatpush1.msra.mxu0 %v119
    %169 = vmatprep.subr.mxu0 0.0
    %170 = vmatpush2.msra.mxu0 0.0
    %171 = vmatprep.subr.mxu0 0.0
    %172 = vmatpush2.msra.mxu0 0.0
    %173 = vmatprep.subr.mxu0 0.0
    %174 = vmatpush2.msra.mxu0 0.0
    %175 = vmatprep.subr.mxu0 0.0
    %176 = vmatpush2.msra.mxu0 0.0
    %177 = vmatprep.subr.mxu0 0.0
    %178 = vmatpush2.msra.mxu0 0.0
    %179 = vmatprep.subr.mxu0 0.0
    %180 = vmatpush2.msra.mxu0 0.0
    %181 = vmatprep.subr.mxu0 0.0
    %182 = vmatpush2.msra.mxu0 0.0
    %183 = vmatprep.subr.mxu0 0.0
    %184 = vmatpush2.msra.mxu0 0.0
    %185 = vmatprep.subr.mxu0 0.0
    %186 = vmatpush2.msra.mxu0 0.0
    %187 = vmatprep.subr.mxu0 0.0
    %188 = vmatpush2.msra.mxu0 0.0
    %189 = vmatprep.subr.mxu0 0.0
    %190 = vmatpush2.msra.mxu0 0.0
    %191 = vmatprep.subr.mxu0 0.0
    %192 = vmatpush2.msra.mxu0 0.0
    %193 = vmatprep.subr.mxu0 0.0
    %194 = vmatpush2.msra.mxu0 0.0
    %195 = vmatprep.subr.mxu0 0.0
    %196 = vmatpush2.msra.mxu0 0.0
    %197 = vmatprep.subr.mxu0 0.0
    %198 = vmatpush2.msra.mxu0 0.0
    %199 = vmatprep.subr.mxu0 0.0
    %200 = vmatpush2.msra.mxu0 0.0
    %201 = vmatprep.mubr.f32.mxu0 0.0
    %202 = vmatmul.mubr.f32.gmra.mxu0 %v128
    %v203 = vpop.f32.mrf.mxu0
    %v204 = vadd.f32 0.0, %v203
    %v205 = vpop.f32.mrf.mxu0
    %206 = vmatprep.mubr.f32.mxu0 0.0
    %207 = vmatmul.mubr.f32.gmra.mxu0 %v131
    %v208 = vpop.f32.mrf.mxu0
    %v209 = vadd.f32 0.0, %v208
    %v210 = vpop.f32.mrf.mxu0
    %211 = vdwg.mxu0
    %vm212 = vcmask 171008
    %v214 = vsel %vm212, %v122, 0
    %v217 = vsel %vm212, %v123, 0
    %vm219 = vcmask 1044480
    %v221 = vsel %vm219, %v108, 0
    %223 = vmatprep.subr.mxu0 0.0
    %224 = vmatpush1.msra.mxu0 0.0
    %225 = vmatprep.subr.mxu0 0.0
    %226 = vmatpush1.msra.mxu0 0.0
    %227 = vmatprep.subr.mxu0 0.0
    %228 = vmatpush1.msra.mxu0 0.0
    %229 = vmatprep.subr.mxu0 0.0
    %230 = vmatpush1.msra.mxu0 0.0
    %231 = vmatprep.subr.mxu0 0.0
    %232 = vmatpush1.msra.mxu0 0.0
    %233 = vmatprep.subr.mxu0 0.0
    %234 = vmatpush1.msra.mxu0 0.0
    %235 = vmatprep.subr.mxu0 0.0
    %236 = vmatpush1.msra.mxu0 0.0
    %237 = vmatprep.subr.mxu0 0.0
    %238 = vmatpush1.msra.mxu0 0.0
    %239 = vmatprep.subr.mxu0 0.0
    %240 = vmatpush1.msra.mxu0 0.0
    %241 = vmatprep.subr.mxu0 0.0
    %242 = vmatpush1.msra.mxu0 0.0
    %243 = vmatprep.subr.mxu0 0.0
    %244 = vmatpush1.msra.mxu0 0.0
    %245 = vmatprep.subr.mxu0 0.0
    %246 = vmatpush1.msra.mxu0 0.0
    %247 = vmatprep.subr.mxu0 0.0
    %248 = vmatpush1.msra.mxu0 0.0
    %249 = vmatprep.subr.mxu0 0.0
    %250 = vmatpush1.msra.mxu0 %v221
    %251 = vmatprep.subr.mxu0 0.0
    %252 = vmatpush1.msra.mxu0 %v107
    %253 = vmatprep.subr.mxu0 0.0
    %254 = vmatpush1.msra.mxu0 %v106
    %255 = vmatprep.subr.mxu0 0.0
    %256 = vmatpush2.msra.mxu0 0.0
    %257 = vmatprep.subr.mxu0 0.0
    %258 = vmatpush2.msra.mxu0 0.0
    %259 = vmatprep.subr.mxu0 0.0
    %260 = vmatpush2.msra.mxu0 0.0
    %261 = vmatprep.subr.mxu0 0.0
    %262 = vmatpush2.msra.mxu0 0.0
    %263 = vmatprep.subr.mxu0 0.0
    %264 = vmatpush2.msra.mxu0 0.0
    %265 = vmatprep.subr.mxu0 0.0
    %266 = vmatpush2.msra.mxu0 0.0
    %267 = vmatprep.subr.mxu0 0.0
    %268 = vmatpush2.msra.mxu0 0.0
    %269 = vmatprep.subr.mxu0 0.0
    %270 = vmatpush2.msra.mxu0 0.0
    %271 = vmatprep.subr.mxu0 0.0
    %272 = vmatpush2.msra.mxu0 0.0
    %273 = vmatprep.subr.mxu0 0.0
    %274 = vmatpush2.msra.mxu0 0.0
    %275 = vmatprep.subr.mxu0 0.0
    %276 = vmatpush2.msra.mxu0 0.0
    %277 = vmatprep.subr.mxu0 0.0
    %278 = vmatpush2.msra.mxu0 0.0
    %279 = vmatprep.subr.mxu0 0.0
    %280 = vmatpush2.msra.mxu0 0.0
    %281 = vmatprep.subr.mxu0 0.0
    %282 = vmatpush2.msra.mxu0 0.0
    %283 = vmatprep.subr.mxu0 0.0
    %284 = vmatpush2.msra.mxu0 0.0
    %285 = vmatprep.subr.mxu0 0.0
    %286 = vmatpush2.msra.mxu0 0.0
    %287 = vmatprep.mubr.f32.mxu0 0.0
    %288 = vmatmul.mubr.f32.gmra.mxu0 %v214
    %v289 = vpop.f32.mrf.mxu0
    %v290 = vadd.f32 %v204, %v289
    %v291 = vpop.f32.mrf.mxu0
    %292 = vmatprep.mubr.f32.mxu0 0.0
    %293 = vmatmul.mubr.f32.gmra.mxu0 %v217
    %v294 = vpop.f32.mrf.mxu0
    %v295 = vadd.f32 %v209, %v294
    %v296 = vpop.f32.mrf.mxu0
    %297 = vdwg.mxu0
    %v298 = vld [vmem:[#allocation7 + $0x430] sm:$0xff]
    %v299 = vld [vmem:[#allocation7 + $0x438] sm:$0xff]
    %v300 = vadd.f32 %v290, %v298
    %v301 = vadd.f32 %v295, %v299
    %v302 = vld [vmem:[#allocation5] sm:$0xf]
    %v303 = vld [vmem:[#allocation7] sm:$0xff]
    %v304 = vld [vmem:[#allocation7 + $0x8] sm:$0xff]
    %v305 = vld [vmem:[#allocation7 + $0x10] sm:$0xff]
    %v306 = vld [vmem:[#allocation7 + $0x18] sm:$0xff]
    %v307 = vld [vmem:[#allocation7 + $0x20] sm:$0xff]
    %v308 = vld [vmem:[#allocation7 + $0x28] sm:$0xff]
    %v309 = vld [vmem:[#allocation7 + $0x30] sm:$0xff]
    %v310 = vld [vmem:[#allocation7 + $0x38] sm:$0xff]
    %v311 = vld [vmem:[#allocation7 + $0x40] sm:$0xff]
    %v312 = vld [vmem:[#allocation7 + $0x48] sm:$0xff]
    %v313 = vld [vmem:[#allocation7 + $0x50] sm:$0xff]
    %v314 = vld [vmem:[#allocation7 + $0x58] sm:$0xff]
    %v315 = vld [vmem:[#allocation7 + $0x60] sm:$0xff]
    %v316 = vld [vmem:[#allocation7 + $0x68] sm:$0xff]
    %v317 = vld [vmem:[#allocation7 + $0x70] sm:$0xff]
    %v318 = vld [vmem:[#allocation7 + $0x78] sm:$0xff]
    %v319 = vld [vmem:[#allocation7 + $0x80] sm:$0xff]
    %v320 = vld [vmem:[#allocation7 + $0x88] sm:$0xff]
    %v321 = vld [vmem:[#allocation7 + $0x90] sm:$0xff]
    %v322 = vld [vmem:[#allocation7 + $0x98] sm:$0xff]
    %v323 = vld [vmem:[#allocation7 + $0xa0] sm:$0xff]
    %v324 = vld [vmem:[#allocation7 + $0xa8] sm:$0xff]
    %v325 = vld [vmem:[#allocation7 + $0xb0] sm:$0xff]
    %v326 = vld [vmem:[#allocation7 + $0xb8] sm:$0xff]
    %v327 = vld [vmem:[#allocation7 + $0xc0] sm:$0xff]
    %v328 = vld [vmem:[#allocation7 + $0xc8] sm:$0xff]
    %v329 = vld [vmem:[#allocation7 + $0xd0] sm:$0xff]
    %v330 = vld [vmem:[#allocation7 + $0xd8] sm:$0xff]
    %vm331 = vcmask 31744
    %v333 = vsel %vm331, %v317, 0
    %v336 = vsel %vm331, %v318, 0
    %v339 = vsel %vm331, %v319, 0
    %v342 = vsel %vm331, %v320, 0
    %v345 = vsel %vm331, %v321, 0
    %v348 = vsel %vm331, %v322, 0
    %v351 = vsel %vm331, %v323, 0
    %v354 = vsel %vm331, %v324, 0
    %v357 = vsel %vm331, %v325, 0
    %v360 = vsel %vm331, %v326, 0
    %v363 = vsel %vm331, %v327, 0
    %v366 = vsel %vm331, %v328, 0
    %v369 = vsel %vm331, %v329, 0
    %v372 = vsel %vm331, %v330, 0
    %vm374 = vcmask 1043456
    %v376 = vsel %vm374, %v302, 0
    %378 = vmatprep.subr.mxu0 0.0
    %379 = vmatpush1.msra.mxu0 0.0
    %380 = vmatprep.subr.mxu0 0.0
    %381 = vmatpush1.msra.mxu0 0.0
    %382 = vmatprep.subr.mxu0 0.0
    %383 = vmatpush1.msra.mxu0 0.0
    %384 = vmatprep.subr.mxu0 0.0
    %385 = vmatpush1.msra.mxu0 0.0
    %386 = vmatprep.subr.mxu0 0.0
    %387 = vmatpush1.msra.mxu0 0.0
    %388 = vmatprep.subr.mxu0 0.0
    %389 = vmatpush1.msra.mxu0 0.0
    %390 = vmatprep.subr.mxu0 0.0
    %391 = vmatpush1.msra.mxu0 0.0
    %392 = vmatprep.subr.mxu0 0.0
    %393 = vmatpush1.msra.mxu0 0.0
    %394 = vmatprep.subr.mxu0 0.0
    %395 = vmatpush1.msra.mxu0 0.0
    %396 = vmatprep.subr.mxu0 0.0
    %397 = vmatpush1.msra.mxu0 0.0
    %398 = vmatprep.subr.mxu0 0.0
    %399 = vmatpush1.msra.mxu0 0.0
    %400 = vmatprep.subr.mxu0 0.0
    %401 = vmatpush1.msra.mxu0 0.0
    %402 = vmatprep.subr.mxu0 0.0
    %403 = vmatpush1.msra.mxu0 0.0
    %404 = vmatprep.subr.mxu0 0.0
    %405 = vmatpush1.msra.mxu0 0.0
    %406 = vmatprep.subr.mxu0 0.0
    %407 = vmatpush1.msra.mxu0 0.0
    %408 = vmatprep.subr.mxu0 0.0
    %409 = vmatpush1.msra.mxu0 %v376
    %410 = vmatprep.subr.mxu0 0.0
    %411 = vmatpush2.msra.mxu0 0.0
    %412 = vmatprep.subr.mxu0 0.0
    %413 = vmatpush2.msra.mxu0 0.0
    %414 = vmatprep.subr.mxu0 0.0
    %415 = vmatpush2.msra.mxu0 0.0
    %416 = vmatprep.subr.mxu0 0.0
    %417 = vmatpush2.msra.mxu0 0.0
    %418 = vmatprep.subr.mxu0 0.0
    %419 = vmatpush2.msra.mxu0 0.0
    %420 = vmatprep.subr.mxu0 0.0
    %421 = vmatpush2.msra.mxu0 0.0
    %422 = vmatprep.subr.mxu0 0.0
    %423 = vmatpush2.msra.mxu0 0.0
    %424 = vmatprep.subr.mxu0 0.0
    %425 = vmatpush2.msra.mxu0 0.0
    %426 = vmatprep.subr.mxu0 0.0
    %427 = vmatpush2.msra.mxu0 0.0
    %428 = vmatprep.subr.mxu0 0.0
    %429 = vmatpush2.msra.mxu0 0.0
    %430 = vmatprep.subr.mxu0 0.0
    %431 = vmatpush2.msra.mxu0 0.0
    %432 = vmatprep.subr.mxu0 0.0
    %433 = vmatpush2.msra.mxu0 0.0
    %434 = vmatprep.subr.mxu0 0.0
    %435 = vmatpush2.msra.mxu0 0.0
    %436 = vmatprep.subr.mxu0 0.0
    %437 = vmatpush2.msra.mxu0 0.0
    %438 = vmatprep.subr.mxu0 0.0
    %439 = vmatpush2.msra.mxu0 0.0
    %440 = vmatprep.subr.mxu0 0.0
    %441 = vmatpush2.msra.mxu0 0.0
    %442 = vmatprep.mubr.f32.mxu0 0.0
    %443 = vmatmul.mubr.f32.gmra.mxu0 %v333
    %v444 = vpop.f32.mrf.mxu0
    %v445 = vadd.f32 0.0, %v444
    %v446 = vpop.f32.mrf.mxu0
    %447 = vmatprep.mubr.f32.mxu0 0.0
    %448 = vmatmul.mubr.f32.gmra.mxu0 %v336
    %v449 = vpop.f32.mrf.mxu0
    %v450 = vadd.f32 0.0, %v449
    %v451 = vpop.f32.mrf.mxu0
    %452 = vmatprep.mubr.f32.mxu0 0.0
    %453 = vmatmul.mubr.f32.gmra.mxu0 %v339
    %v454 = vpop.f32.mrf.mxu0
    %v455 = vadd.f32 0.0, %v454
    %v456 = vpop.f32.mrf.mxu0
    %457 = vmatprep.mubr.f32.mxu0 0.0
    %458 = vmatmul.mubr.f32.gmra.mxu0 %v342
    %v459 = vpop.f32.mrf.mxu0
    %v460 = vadd.f32 0.0, %v459
    %v461 = vpop.f32.mrf.mxu0
    %462 = vmatprep.mubr.f32.mxu0 0.0
    %463 = vmatmul.mubr.f32.gmra.mxu0 %v345
    %v464 = vpop.f32.mrf.mxu0
    %v465 = vadd.f32 0.0, %v464
    %v466 = vpop.f32.mrf.mxu0
    %467 = vmatprep.mubr.f32.mxu0 0.0
    %468 = vmatmul.mubr.f32.gmra.mxu0 %v348
    %v469 = vpop.f32.mrf.mxu0
    %v470 = vadd.f32 0.0, %v469
    %v471 = vpop.f32.mrf.mxu0
    %472 = vmatprep.mubr.f32.mxu0 0.0
    %473 = vmatmul.mubr.f32.gmra.mxu0 %v351
    %v474 = vpop.f32.mrf.mxu0
    %v475 = vadd.f32 0.0, %v474
    %v476 = vpop.f32.mrf.mxu0
    %477 = vmatprep.mubr.f32.mxu0 0.0
    %478 = vmatmul.mubr.f32.gmra.mxu0 %v354
    %v479 = vpop.f32.mrf.mxu0
    %v480 = vadd.f32 0.0, %v479
    %v481 = vpop.f32.mrf.mxu0
    %482 = vmatprep.mubr.f32.mxu0 0.0
    %483 = vmatmul.mubr.f32.gmra.mxu0 %v357
    %v484 = vpop.f32.mrf.mxu0
    %v485 = vadd.f32 0.0, %v484
    %v486 = vpop.f32.mrf.mxu0
    %487 = vmatprep.mubr.f32.mxu0 0.0
    %488 = vmatmul.mubr.f32.gmra.mxu0 %v360
    %v489 = vpop.f32.mrf.mxu0
    %v490 = vadd.f32 0.0, %v489
    %v491 = vpop.f32.mrf.mxu0
    %492 = vmatprep.mubr.f32.mxu0 0.0
    %493 = vmatmul.mubr.f32.gmra.mxu0 %v363
    %v494 = vpop.f32.mrf.mxu0
    %v495 = vadd.f32 0.0, %v494
    %v496 = vpop.f32.mrf.mxu0
    %497 = vmatprep.mubr.f32.mxu0 0.0
    %498 = vmatmul.mubr.f32.gmra.mxu0 %v366
    %v499 = vpop.f32.mrf.mxu0
    %v500 = vadd.f32 0.0, %v499
    %v501 = vpop.f32.mrf.mxu0
    %502 = vmatprep.mubr.f32.mxu0 0.0
    %503 = vmatmul.mubr.f32.gmra.mxu0 %v369
    %v504 = vpop.f32.mrf.mxu0
    %v505 = vadd.f32 0.0, %v504
    %v506 = vpop.f32.mrf.mxu0
    %507 = vmatprep.mubr.f32.mxu0 0.0
    %508 = vmatmul.mubr.f32.gmra.mxu0 %v372
    %v509 = vpop.f32.mrf.mxu0
    %v510 = vadd.f32 0.0, %v509
    %v511 = vpop.f32.mrf.mxu0
    %512 = vdwg.mxu0
    %vm513 = vcmask 130048
    %v515 = vsel %vm513, %v303, 0
    %v518 = vsel %vm513, %v304, 0
    %v521 = vsel %vm513, %v305, 0
    %v524 = vsel %vm513, %v306, 0
    %v527 = vsel %vm513, %v307, 0
    %v530 = vsel %vm513, %v308, 0
    %v533 = vsel %vm513, %v309, 0
    %v536 = vsel %vm513, %v310, 0
    %v539 = vsel %vm513, %v311, 0
    %v542 = vsel %vm513, %v312, 0
    %v545 = vsel %vm513, %v313, 0
    %v548 = vsel %vm513, %v314, 0
    %v551 = vsel %vm513, %v315, 0
    %v554 = vsel %vm513, %v316, 0
    %556 = vmatprep.subr.mxu0 0.0
    %557 = vmatpush1.msra.mxu0 0.0
    %558 = vmatprep.subr.mxu0 0.0
    %559 = vmatpush1.msra.mxu0 0.0
    %560 = vmatprep.subr.mxu0 0.0
    %561 = vmatpush1.msra.mxu0 0.0
    %562 = vmatprep.subr.mxu0 0.0
    %563 = vmatpush1.msra.mxu0 0.0
    %564 = vmatprep.subr.mxu0 0.0
    %565 = vmatpush1.msra.mxu0 0.0
    %566 = vmatprep.subr.mxu0 0.0
    %567 = vmatpush1.msra.mxu0 0.0
    %568 = vmatprep.subr.mxu0 0.0
    %569 = vmatpush1.msra.mxu0 0.0
    %570 = vmatprep.subr.mxu0 0.0
    %571 = vmatpush1.msra.mxu0 0.0
    %572 = vmatprep.subr.mxu0 0.0
    %573 = vmatpush1.msra.mxu0 0.0
    %574 = vmatprep.subr.mxu0 0.0
    %575 = vmatpush1.msra.mxu0 0.0
    %576 = vmatprep.subr.mxu0 0.0
    %577 = vmatpush1.msra.mxu0 0.0
    %578 = vmatprep.subr.mxu0 0.0
    %579 = vmatpush1.msra.mxu0 0.0
    %580 = vmatprep.subr.mxu0 0.0
    %581 = vmatpush1.msra.mxu0 0.0
    %582 = vmatprep.subr.mxu0 0.0
    %583 = vmatpush1.msra.mxu0 0.0
    %584 = vmatprep.subr.mxu0 0.0
    %585 = vmatpush1.msra.mxu0 %v301
    %586 = vmatprep.subr.mxu0 0.0
    %587 = vmatpush1.msra.mxu0 %v300
    %588 = vmatprep.subr.mxu0 0.0
    %589 = vmatpush2.msra.mxu0 0.0
    %590 = vmatprep.subr.mxu0 0.0
    %591 = vmatpush2.msra.mxu0 0.0
    %592 = vmatprep.subr.mxu0 0.0
    %593 = vmatpush2.msra.mxu0 0.0
    %594 = vmatprep.subr.mxu0 0.0
    %595 = vmatpush2.msra.mxu0 0.0
    %596 = vmatprep.subr.mxu0 0.0
    %597 = vmatpush2.msra.mxu0 0.0
    %598 = vmatprep.subr.mxu0 0.0
    %599 = vmatpush2.msra.mxu0 0.0
    %600 = vmatprep.subr.mxu0 0.0
    %601 = vmatpush2.msra.mxu0 0.0
    %602 = vmatprep.subr.mxu0 0.0
    %603 = vmatpush2.msra.mxu0 0.0
    %604 = vmatprep.subr.mxu0 0.0
    %605 = vmatpush2.msra.mxu0 0.0
    %606 = vmatprep.subr.mxu0 0.0
    %607 = vmatpush2.msra.mxu0 0.0
    %608 = vmatprep.subr.mxu0 0.0
    %609 = vmatpush2.msra.mxu0 0.0
    %610 = vmatprep.subr.mxu0 0.0
    %611 = vmatpush2.msra.mxu0 0.0
    %612 = vmatprep.subr.mxu0 0.0
    %613 = vmatpush2.msra.mxu0 0.0
    %614 = vmatprep.subr.mxu0 0.0
    %615 = vmatpush2.msra.mxu0 0.0
    %616 = vmatprep.subr.mxu0 0.0
    %617 = vmatpush2.msra.mxu0 0.0
    %618 = vmatprep.subr.mxu0 0.0
    %619 = vmatpush2.msra.mxu0 0.0
    %620 = vmatprep.mubr.f32.mxu0 0.0
    %621 = vmatmul.mubr.f32.gmra.mxu0 %v515
    %v622 = vpop.f32.mrf.mxu0
    %v623 = vadd.f32 %v445, %v622
    %v624 = vpop.f32.mrf.mxu0
    %625 = vmatprep.mubr.f32.mxu0 0.0
    %626 = vmatmul.mubr.f32.gmra.mxu0 %v518
    %v627 = vpop.f32.mrf.mxu0
    %v628 = vadd.f32 %v450, %v627
    %v629 = vpop.f32.mrf.mxu0
    %630 = vmatprep.mubr.f32.mxu0 0.0
    %631 = vmatmul.mubr.f32.gmra.mxu0 %v521
    %v632 = vpop.f32.mrf.mxu0
    %v633 = vadd.f32 %v455, %v632
    %v634 = vpop.f32.mrf.mxu0
    %635 = vmatprep.mubr.f32.mxu0 0.0
    %636 = vmatmul.mubr.f32.gmra.mxu0 %v524
    %v637 = vpop.f32.mrf.mxu0
    %v638 = vadd.f32 %v460, %v637
    %v639 = vpop.f32.mrf.mxu0
    %640 = vmatprep.mubr.f32.mxu0 0.0
    %641 = vmatmul.mubr.f32.gmra.mxu0 %v527
    %v642 = vpop.f32.mrf.mxu0
    %v643 = vadd.f32 %v465, %v642
    %v644 = vpop.f32.mrf.mxu0
    %645 = vmatprep.mubr.f32.mxu0 0.0
    %646 = vmatmul.mubr.f32.gmra.mxu0 %v530
    %v647 = vpop.f32.mrf.mxu0
    %v648 = vadd.f32 %v470, %v647
    %v649 = vpop.f32.mrf.mxu0
    %650 = vmatprep.mubr.f32.mxu0 0.0
    %651 = vmatmul.mubr.f32.gmra.mxu0 %v533
    %v652 = vpop.f32.mrf.mxu0
    %v653 = vadd.f32 %v475, %v652
    %v654 = vpop.f32.mrf.mxu0
    %655 = vmatprep.mubr.f32.mxu0 0.0
    %656 = vmatmul.mubr.f32.gmra.mxu0 %v536
    %v657 = vpop.f32.mrf.mxu0
    %v658 = vadd.f32 %v480, %v657
    %v659 = vpop.f32.mrf.mxu0
    %660 = vmatprep.mubr.f32.mxu0 0.0
    %661 = vmatmul.mubr.f32.gmra.mxu0 %v539
    %v662 = vpop.f32.mrf.mxu0
    %v663 = vadd.f32 %v485, %v662
    %v664 = vpop.f32.mrf.mxu0
    %665 = vmatprep.mubr.f32.mxu0 0.0
    %666 = vmatmul.mubr.f32.gmra.mxu0 %v542
    %v667 = vpop.f32.mrf.mxu0
    %v668 = vadd.f32 %v490, %v667
    %v669 = vpop.f32.mrf.mxu0
    %670 = vmatprep.mubr.f32.mxu0 0.0
    %671 = vmatmul.mubr.f32.gmra.mxu0 %v545
    %v672 = vpop.f32.mrf.mxu0
    %v673 = vadd.f32 %v495, %v672
    %v674 = vpop.f32.mrf.mxu0
    %675 = vmatprep.mubr.f32.mxu0 0.0
    %676 = vmatmul.mubr.f32.gmra.mxu0 %v548
    %v677 = vpop.f32.mrf.mxu0
    %v678 = vadd.f32 %v500, %v677
    %v679 = vpop.f32.mrf.mxu0
    %680 = vmatprep.mubr.f32.mxu0 0.0
    %681 = vmatmul.mubr.f32.gmra.mxu0 %v551
    %v682 = vpop.f32.mrf.mxu0
    %v683 = vadd.f32 %v505, %v682
    %v684 = vpop.f32.mrf.mxu0
    %685 = vmatprep.mubr.f32.mxu0 0.0
    %686 = vmatmul.mubr.f32.gmra.mxu0 %v554
    %v687 = vpop.f32.mrf.mxu0
    %v688 = vadd.f32 %v510, %v687
    %v689 = vpop.f32.mrf.mxu0
    %690 = vdwg.mxu0
    %v691 = vld [vmem:[#allocation7 + $0x350] sm:$0xff]
    %v692 = vld [vmem:[#allocation7 + $0x358] sm:$0xff]
    %v693 = vld [vmem:[#allocation7 + $0x360] sm:$0xff]
    %v694 = vld [vmem:[#allocation7 + $0x368] sm:$0xff]
    %v696 = vsel %vm65, %v623, 0
    %v699 = vsel %vm65, %v628, 0
    %701 = vmatprep.subr.mxu0 0.0
    %702 = vmatpush1.msra.mxu0 0.0
    %703 = vmatprep.subr.mxu0 0.0
    %704 = vmatpush1.msra.mxu0 0.0
    %705 = vmatprep.subr.mxu0 0.0
    %706 = vmatpush1.msra.mxu0 0.0
    %707 = vmatprep.subr.mxu0 0.0
    %708 = vmatpush1.msra.mxu0 0.0
    %709 = vmatprep.subr.mxu0 0.0
    %710 = vmatpush1.msra.mxu0 0.0
    %711 = vmatprep.subr.mxu0 0.0
    %712 = vmatpush1.msra.mxu0 0.0
    %713 = vmatprep.subr.mxu0 0.0
    %714 = vmatpush1.msra.mxu0 0.0
    %715 = vmatprep.subr.mxu0 0.0
    %716 = vmatpush1.msra.mxu0 0.0
    %717 = vmatprep.subr.mxu0 0.0
    %718 = vmatpush1.msra.mxu0 0.0
    %719 = vmatprep.subr.mxu0 0.0
    %720 = vmatpush1.msra.mxu0 0.0
    %721 = vmatprep.subr.mxu0 0.0
    %722 = vmatpush1.msra.mxu0 0.0
    %723 = vmatprep.subr.mxu0 0.0
    %724 = vmatpush1.msra.mxu0 0.0
    %725 = vmatprep.subr.mxu0 0.0
    %726 = vmatpush1.msra.mxu0 %v694
    %727 = vmatprep.subr.mxu0 0.0
    %728 = vmatpush1.msra.mxu0 %v693
    %729 = vmatprep.subr.mxu0 0.0
    %730 = vmatpush1.msra.mxu0 %v692
    %731 = vmatprep.subr.mxu0 0.0
    %732 = vmatpush1.msra.mxu0 %v691
    %733 = vmatprep.subr.mxu0 0.0
    %734 = vmatpush2.msra.mxu0 0.0
    %735 = vmatprep.subr.mxu0 0.0
    %736 = vmatpush2.msra.mxu0 0.0
    %737 = vmatprep.subr.mxu0 0.0
    %738 = vmatpush2.msra.mxu0 0.0
    %739 = vmatprep.subr.mxu0 0.0
    %740 = vmatpush2.msra.mxu0 0.0
    %741 = vmatprep.subr.mxu0 0.0
    %742 = vmatpush2.msra.mxu0 0.0
    %743 = vmatprep.subr.mxu0 0.0
    %744 = vmatpush2.msra.mxu0 0.0
    %745 = vmatprep.subr.mxu0 0.0
    %746 = vmatpush2.msra.mxu0 0.0
    %747 = vmatprep.subr.mxu0 0.0
    %748 = vmatpush2.msra.mxu0 0.0
    %749 = vmatprep.subr.mxu0 0.0
    %750 = vmatpush2.msra.mxu0 0.0
    %751 = vmatprep.subr.mxu0 0.0
    %752 = vmatpush2.msra.mxu0 0.0
    %753 = vmatprep.subr.mxu0 0.0
    %754 = vmatpush2.msra.mxu0 0.0
    %755 = vmatprep.subr.mxu0 0.0
    %756 = vmatpush2.msra.mxu0 0.0
    %757 = vmatprep.subr.mxu0 0.0
    %758 = vmatpush2.msra.mxu0 0.0
    %759 = vmatprep.subr.mxu0 0.0
    %760 = vmatpush2.msra.mxu0 0.0
    %761 = vmatprep.subr.mxu0 0.0
    %762 = vmatpush2.msra.mxu0 0.0
    %763 = vmatprep.subr.mxu0 0.0
    %764 = vmatpush2.msra.mxu0 0.0
    %765 = vmatprep.mubr.f32.mxu0 0.0
    %766 = vmatmul.mubr.f32.gmra.mxu0 %v696
    %v767 = vpop.f32.mrf.mxu0
    %v768 = vadd.f32 0.0, %v767
    %v769 = vpop.f32.mrf.mxu0
    %770 = vmatprep.mubr.f32.mxu0 0.0
    %771 = vmatmul.mubr.f32.gmra.mxu0 %v699
    %v772 = vpop.f32.mrf.mxu0
    %v773 = vadd.f32 0.0, %v772
    %v774 = vpop.f32.mrf.mxu0
    %775 = vdwg.mxu0
    %v776 = vadd.f32 %v653, %v768
    %v777 = vadd.f32 %v658, %v773
    %v778 = vld [vmem:[#allocation7 + $0x370] sm:$0xff]
    %v779 = vld [vmem:[#allocation7 + $0x378] sm:$0xff]
    %v780 = vld [vmem:[#allocation7 + $0x380] sm:$0xff]
    %v781 = vld [vmem:[#allocation7 + $0x388] sm:$0xff]
    %v783 = vsel %vm65, %v633, 0
    %v786 = vsel %vm65, %v638, 0
    %788 = vmatprep.subr.mxu0 0.0
    %789 = vmatpush1.msra.mxu0 0.0
    %790 = vmatprep.subr.mxu0 0.0
    %791 = vmatpush1.msra.mxu0 0.0
    %792 = vmatprep.subr.mxu0 0.0
    %793 = vmatpush1.msra.mxu0 0.0
    %794 = vmatprep.subr.mxu0 0.0
    %795 = vmatpush1.msra.mxu0 0.0
    %796 = vmatprep.subr.mxu0 0.0
    %797 = vmatpush1.msra.mxu0 0.0
    %798 = vmatprep.subr.mxu0 0.0
    %799 = vmatpush1.msra.mxu0 0.0
    %800 = vmatprep.subr.mxu0 0.0
    %801 = vmatpush1.msra.mxu0 0.0
    %802 = vmatprep.subr.mxu0 0.0
    %803 = vmatpush1.msra.mxu0 0.0
    %804 = vmatprep.subr.mxu0 0.0
    %805 = vmatpush1.msra.mxu0 0.0
    %806 = vmatprep.subr.mxu0 0.0
    %807 = vmatpush1.msra.mxu0 0.0
    %808 = vmatprep.subr.mxu0 0.0
    %809 = vmatpush1.msra.mxu0 0.0
    %810 = vmatprep.subr.mxu0 0.0
    %811 = vmatpush1.msra.mxu0 0.0
    %812 = vmatprep.subr.mxu0 0.0
    %813 = vmatpush1.msra.mxu0 %v781
    %814 = vmatprep.subr.mxu0 0.0
    %815 = vmatpush1.msra.mxu0 %v780
    %816 = vmatprep.subr.mxu0 0.0
    %817 = vmatpush1.msra.mxu0 %v779
    %818 = vmatprep.subr.mxu0 0.0
    %819 = vmatpush1.msra.mxu0 %v778
    %820 = vmatprep.subr.mxu0 0.0
    %821 = vmatpush2.msra.mxu0 0.0
    %822 = vmatprep.subr.mxu0 0.0
    %823 = vmatpush2.msra.mxu0 0.0
    %824 = vmatprep.subr.mxu0 0.0
    %825 = vmatpush2.msra.mxu0 0.0
    %826 = vmatprep.subr.mxu0 0.0
    %827 = vmatpush2.msra.mxu0 0.0
    %828 = vmatprep.subr.mxu0 0.0
    %829 = vmatpush2.msra.mxu0 0.0
    %830 = vmatprep.subr.mxu0 0.0
    %831 = vmatpush2.msra.mxu0 0.0
    %832 = vmatprep.subr.mxu0 0.0
    %833 = vmatpush2.msra.mxu0 0.0
    %834 = vmatprep.subr.mxu0 0.0
    %835 = vmatpush2.msra.mxu0 0.0
    %836 = vmatprep.subr.mxu0 0.0
    %837 = vmatpush2.msra.mxu0 0.0
    %838 = vmatprep.subr.mxu0 0.0
    %839 = vmatpush2.msra.mxu0 0.0
    %840 = vmatprep.subr.mxu0 0.0
    %841 = vmatpush2.msra.mxu0 0.0
    %842 = vmatprep.subr.mxu0 0.0
    %843 = vmatpush2.msra.mxu0 0.0
    %844 = vmatprep.subr.mxu0 0.0
    %845 = vmatpush2.msra.mxu0 0.0
    %846 = vmatprep.subr.mxu0 0.0
    %847 = vmatpush2.msra.mxu0 0.0
    %848 = vmatprep.subr.mxu0 0.0
    %849 = vmatpush2.msra.mxu0 0.0
    %850 = vmatprep.subr.mxu0 0.0
    %851 = vmatpush2.msra.mxu0 0.0
    %852 = vmatprep.mubr.f32.mxu0 0.0
    %853 = vmatmul.mubr.f32.gmra.mxu0 %v783
    %v854 = vpop.f32.mrf.mxu0
    %v855 = vadd.f32 0.0, %v854
    %v856 = vpop.f32.mrf.mxu0
    %857 = vmatprep.mubr.f32.mxu0 0.0
    %858 = vmatmul.mubr.f32.gmra.mxu0 %v786
    %v859 = vpop.f32.mrf.mxu0
    %v860 = vadd.f32 0.0, %v859
    %v861 = vpop.f32.mrf.mxu0
    %862 = vdwg.mxu0
    %v863 = vadd.f32 %v776, %v855
    %v864 = vadd.f32 %v777, %v860
    %v865 = vld [vmem:[#allocation7 + $0x390] sm:$0xff]
    %v866 = vld [vmem:[#allocation7 + $0x398] sm:$0xff]
    %v867 = vld [vmem:[#allocation7 + $0x3a0] sm:$0xff]
    %v868 = vld [vmem:[#allocation7 + $0x3a8] sm:$0xff]
    %v870 = vsel %vm65, %v643, 0
    %v873 = vsel %vm65, %v648, 0
    %875 = vmatprep.subr.mxu0 0.0
    %876 = vmatpush1.msra.mxu0 0.0
    %877 = vmatprep.subr.mxu0 0.0
    %878 = vmatpush1.msra.mxu0 0.0
    %879 = vmatprep.subr.mxu0 0.0
    %880 = vmatpush1.msra.mxu0 0.0
    %881 = vmatprep.subr.mxu0 0.0
    %882 = vmatpush1.msra.mxu0 0.0
    %883 = vmatprep.subr.mxu0 0.0
    %884 = vmatpush1.msra.mxu0 0.0
    %885 = vmatprep.subr.mxu0 0.0
    %886 = vmatpush1.msra.mxu0 0.0
    %887 = vmatprep.subr.mxu0 0.0
    %888 = vmatpush1.msra.mxu0 0.0
    %889 = vmatprep.subr.mxu0 0.0
    %890 = vmatpush1.msra.mxu0 0.0
    %891 = vmatprep.subr.mxu0 0.0
    %892 = vmatpush1.msra.mxu0 0.0
    %893 = vmatprep.subr.mxu0 0.0
    %894 = vmatpush1.msra.mxu0 0.0
    %895 = vmatprep.subr.mxu0 0.0
    %896 = vmatpush1.msra.mxu0 0.0
    %897 = vmatprep.subr.mxu0 0.0
    %898 = vmatpush1.msra.mxu0 0.0
    %899 = vmatprep.subr.mxu0 0.0
    %900 = vmatpush1.msra.mxu0 %v868
    %901 = vmatprep.subr.mxu0 0.0
    %902 = vmatpush1.msra.mxu0 %v867
    %903 = vmatprep.subr.mxu0 0.0
    %904 = vmatpush1.msra.mxu0 %v866
    %905 = vmatprep.subr.mxu0 0.0
    %906 = vmatpush1.msra.mxu0 %v865
    %907 = vmatprep.subr.mxu0 0.0
    %908 = vmatpush2.msra.mxu0 0.0
    %909 = vmatprep.subr.mxu0 0.0
    %910 = vmatpush2.msra.mxu0 0.0
    %911 = vmatprep.subr.mxu0 0.0
    %912 = vmatpush2.msra.mxu0 0.0
    %913 = vmatprep.subr.mxu0 0.0
    %914 = vmatpush2.msra.mxu0 0.0
    %915 = vmatprep.subr.mxu0 0.0
    %916 = vmatpush2.msra.mxu0 0.0
    %917 = vmatprep.subr.mxu0 0.0
    %918 = vmatpush2.msra.mxu0 0.0
    %919 = vmatprep.subr.mxu0 0.0
    %920 = vmatpush2.msra.mxu0 0.0
    %921 = vmatprep.subr.mxu0 0.0
    %922 = vmatpush2.msra.mxu0 0.0
    %923 = vmatprep.subr.mxu0 0.0
    %924 = vmatpush2.msra.mxu0 0.0
    %925 = vmatprep.subr.mxu0 0.0
    %926 = vmatpush2.msra.mxu0 0.0
    %927 = vmatprep.subr.mxu0 0.0
    %928 = vmatpush2.msra.mxu0 0.0
    %929 = vmatprep.subr.mxu0 0.0
    %930 = vmatpush2.msra.mxu0 0.0
    %931 = vmatprep.subr.mxu0 0.0
    %932 = vmatpush2.msra.mxu0 0.0
    %933 = vmatprep.subr.mxu0 0.0
    %934 = vmatpush2.msra.mxu0 0.0
    %935 = vmatprep.subr.mxu0 0.0
    %936 = vmatpush2.msra.mxu0 0.0
    %937 = vmatprep.subr.mxu0 0.0
    %938 = vmatpush2.msra.mxu0 0.0
    %939 = vmatprep.mubr.f32.mxu0 0.0
    %940 = vmatmul.mubr.f32.gmra.mxu0 %v870
    %v941 = vpop.f32.mrf.mxu0
    %v942 = vadd.f32 0.0, %v941
    %v943 = vpop.f32.mrf.mxu0
    %944 = vmatprep.mubr.f32.mxu0 0.0
    %945 = vmatmul.mubr.f32.gmra.mxu0 %v873
    %v946 = vpop.f32.mrf.mxu0
    %v947 = vadd.f32 0.0, %v946
    %v948 = vpop.f32.mrf.mxu0
    %949 = vdwg.mxu0
    %v950 = vadd.f32 %v863, %v942
    %v951 = vadd.f32 %v864, %v947
    %v952 = vld [vmem:[#allocation7 + $0x3b0] sm:$0xff]
    %v953 = vld [vmem:[#allocation7 + $0x3b8] sm:$0xff]
    %v954 = vld [vmem:[#allocation7 + $0x3c0] sm:$0xff]
    %v955 = vld [vmem:[#allocation7 + $0x3c8] sm:$0xff]
    %v957 = vsel %vm65, %v663, 0
    %v960 = vsel %vm65, %v668, 0
    %962 = vmatprep.subr.mxu0 0.0
    %963 = vmatpush1.msra.mxu0 0.0
    %964 = vmatprep.subr.mxu0 0.0
    %965 = vmatpush1.msra.mxu0 0.0
    %966 = vmatprep.subr.mxu0 0.0
    %967 = vmatpush1.msra.mxu0 0.0
    %968 = vmatprep.subr.mxu0 0.0
    %969 = vmatpush1.msra.mxu0 0.0
    %970 = vmatprep.subr.mxu0 0.0
    %971 = vmatpush1.msra.mxu0 0.0
    %972 = vmatprep.subr.mxu0 0.0
    %973 = vmatpush1.msra.mxu0 0.0
    %974 = vmatprep.subr.mxu0 0.0
    %975 = vmatpush1.msra.mxu0 0.0
    %976 = vmatprep.subr.mxu0 0.0
    %977 = vmatpush1.msra.mxu0 0.0
    %978 = vmatprep.subr.mxu0 0.0
    %979 = vmatpush1.msra.mxu0 0.0
    %980 = vmatprep.subr.mxu0 0.0
    %981 = vmatpush1.msra.mxu0 0.0
    %982 = vmatprep.subr.mxu0 0.0
    %983 = vmatpush1.msra.mxu0 0.0
    %984 = vmatprep.subr.mxu0 0.0
    %985 = vmatpush1.msra.mxu0 0.0
    %986 = vmatprep.subr.mxu0 0.0
    %987 = vmatpush1.msra.mxu0 %v955
    %988 = vmatprep.subr.mxu0 0.0
    %989 = vmatpush1.msra.mxu0 %v954
    %990 = vmatprep.subr.mxu0 0.0
    %991 = vmatpush1.msra.mxu0 %v953
    %992 = vmatprep.subr.mxu0 0.0
    %993 = vmatpush1.msra.mxu0 %v952
    %994 = vmatprep.subr.mxu0 0.0
    %995 = vmatpush2.msra.mxu0 0.0
    %996 = vmatprep.subr.mxu0 0.0
    %997 = vmatpush2.msra.mxu0 0.0
    %998 = vmatprep.subr.mxu0 0.0
    %999 = vmatpush2.msra.mxu0 0.0
    %1000 = vmatprep.subr.mxu0 0.0
    %1001 = vmatpush2.msra.mxu0 0.0
    %1002 = vmatprep.subr.mxu0 0.0
    %1003 = vmatpush2.msra.mxu0 0.0
    %1004 = vmatprep.subr.mxu0 0.0
    %1005 = vmatpush2.msra.mxu0 0.0
    %1006 = vmatprep.subr.mxu0 0.0
    %1007 = vmatpush2.msra.mxu0 0.0
    %1008 = vmatprep.subr.mxu0 0.0
    %1009 = vmatpush2.msra.mxu0 0.0
    %1010 = vmatprep.subr.mxu0 0.0
    %1011 = vmatpush2.msra.mxu0 0.0
    %1012 = vmatprep.subr.mxu0 0.0
    %1013 = vmatpush2.msra.mxu0 0.0
    %1014 = vmatprep.subr.mxu0 0.0
    %1015 = vmatpush2.msra.mxu0 0.0
    %1016 = vmatprep.subr.mxu0 0.0
    %1017 = vmatpush2.msra.mxu0 0.0
    %1018 = vmatprep.subr.mxu0 0.0
    %1019 = vmatpush2.msra.mxu0 0.0
    %1020 = vmatprep.subr.mxu0 0.0
    %1021 = vmatpush2.msra.mxu0 0.0
    %1022 = vmatprep.subr.mxu0 0.0
    %1023 = vmatpush2.msra.mxu0 0.0
    %1024 = vmatprep.subr.mxu0 0.0
    %1025 = vmatpush2.msra.mxu0 0.0
    %1026 = vmatprep.mubr.f32.mxu0 0.0
    %1027 = vmatmul.mubr.f32.gmra.mxu0 %v957
    %v1028 = vpop.f32.mrf.mxu0
    %v1029 = vadd.f32 0.0, %v1028
    %v1030 = vpop.f32.mrf.mxu0
    %1031 = vmatprep.mubr.f32.mxu0 0.0
    %1032 = vmatmul.mubr.f32.gmra.mxu0 %v960
    %v1033 = vpop.f32.mrf.mxu0
    %v1034 = vadd.f32 0.0, %v1033
    %v1035 = vpop.f32.mrf.mxu0
    %1036 = vdwg.mxu0
    %v1037 = vadd.f32 %v950, %v1029
    %v1038 = vadd.f32 %v951, %v1034
    %v1039 = vld [vmem:[#allocation7 + $0x3d0] sm:$0xff]
    %v1040 = vld [vmem:[#allocation7 + $0x3d8] sm:$0xff]
    %v1041 = vld [vmem:[#allocation7 + $0x3e0] sm:$0xff]
    %v1042 = vld [vmem:[#allocation7 + $0x3e8] sm:$0xff]
    %v1044 = vsel %vm65, %v673, 0
    %v1047 = vsel %vm65, %v678, 0
    %1049 = vmatprep.subr.mxu0 0.0
    %1050 = vmatpush1.msra.mxu0 0.0
    %1051 = vmatprep.subr.mxu0 0.0
    %1052 = vmatpush1.msra.mxu0 0.0
    %1053 = vmatprep.subr.mxu0 0.0
    %1054 = vmatpush1.msra.mxu0 0.0
    %1055 = vmatprep.subr.mxu0 0.0
    %1056 = vmatpush1.msra.mxu0 0.0
    %1057 = vmatprep.subr.mxu0 0.0
    %1058 = vmatpush1.msra.mxu0 0.0
    %1059 = vmatprep.subr.mxu0 0.0
    %1060 = vmatpush1.msra.mxu0 0.0
    %1061 = vmatprep.subr.mxu0 0.0
    %1062 = vmatpush1.msra.mxu0 0.0
    %1063 = vmatprep.subr.mxu0 0.0
    %1064 = vmatpush1.msra.mxu0 0.0
    %1065 = vmatprep.subr.mxu0 0.0
    %1066 = vmatpush1.msra.mxu0 0.0
    %1067 = vmatprep.subr.mxu0 0.0
    %1068 = vmatpush1.msra.mxu0 0.0
    %1069 = vmatprep.subr.mxu0 0.0
    %1070 = vmatpush1.msra.mxu0 0.0
    %1071 = vmatprep.subr.mxu0 0.0
    %1072 = vmatpush1.msra.mxu0 0.0
    %1073 = vmatprep.subr.mxu0 0.0
    %1074 = vmatpush1.msra.mxu0 %v1042
    %1075 = vmatprep.subr.mxu0 0.0
    %1076 = vmatpush1.msra.mxu0 %v1041
    %1077 = vmatprep.subr.mxu0 0.0
    %1078 = vmatpush1.msra.mxu0 %v1040
    %1079 = vmatprep.subr.mxu0 0.0
    %1080 = vmatpush1.msra.mxu0 %v1039
    %1081 = vmatprep.subr.mxu0 0.0
    %1082 = vmatpush2.msra.mxu0 0.0
    %1083 = vmatprep.subr.mxu0 0.0
    %1084 = vmatpush2.msra.mxu0 0.0
    %1085 = vmatprep.subr.mxu0 0.0
    %1086 = vmatpush2.msra.mxu0 0.0
    %1087 = vmatprep.subr.mxu0 0.0
    %1088 = vmatpush2.msra.mxu0 0.0
    %1089 = vmatprep.subr.mxu0 0.0
    %1090 = vmatpush2.msra.mxu0 0.0
    %1091 = vmatprep.subr.mxu0 0.0
    %1092 = vmatpush2.msra.mxu0 0.0
    %1093 = vmatprep.subr.mxu0 0.0
    %1094 = vmatpush2.msra.mxu0 0.0
    %1095 = vmatprep.subr.mxu0 0.0
    %1096 = vmatpush2.msra.mxu0 0.0
    %1097 = vmatprep.subr.mxu0 0.0
    %1098 = vmatpush2.msra.mxu0 0.0
    %1099 = vmatprep.subr.mxu0 0.0
    %1100 = vmatpush2.msra.mxu0 0.0
    %1101 = vmatprep.subr.mxu0 0.0
    %1102 = vmatpush2.msra.mxu0 0.0
    %1103 = vmatprep.subr.mxu0 0.0
    %1104 = vmatpush2.msra.mxu0 0.0
    %1105 = vmatprep.subr.mxu0 0.0
    %1106 = vmatpush2.msra.mxu0 0.0
    %1107 = vmatprep.subr.mxu0 0.0
    %1108 = vmatpush2.msra.mxu0 0.0
    %1109 = vmatprep.subr.mxu0 0.0
    %1110 = vmatpush2.msra.mxu0 0.0
    %1111 = vmatprep.subr.mxu0 0.0
    %1112 = vmatpush2.msra.mxu0 0.0
    %1113 = vmatprep.mubr.f32.mxu0 0.0
    %1114 = vmatmul.mubr.f32.gmra.mxu0 %v1044
    %v1115 = vpop.f32.mrf.mxu0
    %v1116 = vadd.f32 0.0, %v1115
    %v1117 = vpop.f32.mrf.mxu0
    %1118 = vmatprep.mubr.f32.mxu0 0.0
    %1119 = vmatmul.mubr.f32.gmra.mxu0 %v1047
    %v1120 = vpop.f32.mrf.mxu0
    %v1121 = vadd.f32 0.0, %v1120
    %v1122 = vpop.f32.mrf.mxu0
    %1123 = vdwg.mxu0
    %v1124 = vadd.f32 %v1037, %v1116
    %v1125 = vadd.f32 %v1038, %v1121
    %v1126 = vld [vmem:[#allocation7 + $0x3f0] sm:$0xff]
    %v1127 = vld [vmem:[#allocation7 + $0x3f8] sm:$0xff]
    %v1128 = vld [vmem:[#allocation7 + $0x400] sm:$0xff]
    %v1129 = vld [vmem:[#allocation7 + $0x408] sm:$0xff]
    %v1131 = vsel %vm65, %v683, 0
    %v1134 = vsel %vm65, %v688, 0
    %1136 = vmatprep.subr.mxu0 0.0
    %1137 = vmatpush1.msra.mxu0 0.0
    %1138 = vmatprep.subr.mxu0 0.0
    %1139 = vmatpush1.msra.mxu0 0.0
    %1140 = vmatprep.subr.mxu0 0.0
    %1141 = vmatpush1.msra.mxu0 0.0
    %1142 = vmatprep.subr.mxu0 0.0
    %1143 = vmatpush1.msra.mxu0 0.0
    %1144 = vmatprep.subr.mxu0 0.0
    %1145 = vmatpush1.msra.mxu0 0.0
    %1146 = vmatprep.subr.mxu0 0.0
    %1147 = vmatpush1.msra.mxu0 0.0
    %1148 = vmatprep.subr.mxu0 0.0
    %1149 = vmatpush1.msra.mxu0 0.0
    %1150 = vmatprep.subr.mxu0 0.0
    %1151 = vmatpush1.msra.mxu0 0.0
    %1152 = vmatprep.subr.mxu0 0.0
    %1153 = vmatpush1.msra.mxu0 0.0
    %1154 = vmatprep.subr.mxu0 0.0
    %1155 = vmatpush1.msra.mxu0 0.0
    %1156 = vmatprep.subr.mxu0 0.0
    %1157 = vmatpush1.msra.mxu0 0.0
    %1158 = vmatprep.subr.mxu0 0.0
    %1159 = vmatpush1.msra.mxu0 0.0
    %1160 = vmatprep.subr.mxu0 0.0
    %1161 = vmatpush1.msra.mxu0 %v1129
    %1162 = vmatprep.subr.mxu0 0.0
    %1163 = vmatpush1.msra.mxu0 %v1128
    %1164 = vmatprep.subr.mxu0 0.0
    %1165 = vmatpush1.msra.mxu0 %v1127
    %1166 = vmatprep.subr.mxu0 0.0
    %1167 = vmatpush1.msra.mxu0 %v1126
    %1168 = vmatprep.subr.mxu0 0.0
    %1169 = vmatpush2.msra.mxu0 0.0
    %1170 = vmatprep.subr.mxu0 0.0
    %1171 = vmatpush2.msra.mxu0 0.0
    %1172 = vmatprep.subr.mxu0 0.0
    %1173 = vmatpush2.msra.mxu0 0.0
    %1174 = vmatprep.subr.mxu0 0.0
    %1175 = vmatpush2.msra.mxu0 0.0
    %1176 = vmatprep.subr.mxu0 0.0
    %1177 = vmatpush2.msra.mxu0 0.0
    %1178 = vmatprep.subr.mxu0 0.0
    %1179 = vmatpush2.msra.mxu0 0.0
    %1180 = vmatprep.subr.mxu0 0.0
    %1181 = vmatpush2.msra.mxu0 0.0
    %1182 = vmatprep.subr.mxu0 0.0
    %1183 = vmatpush2.msra.mxu0 0.0
    %1184 = vmatprep.subr.mxu0 0.0
    %1185 = vmatpush2.msra.mxu0 0.0
    %1186 = vmatprep.subr.mxu0 0.0
    %1187 = vmatpush2.msra.mxu0 0.0
    %1188 = vmatprep.subr.mxu0 0.0
    %1189 = vmatpush2.msra.mxu0 0.0
    %1190 = vmatprep.subr.mxu0 0.0
    %1191 = vmatpush2.msra.mxu0 0.0
    %1192 = vmatprep.subr.mxu0 0.0
    %1193 = vmatpush2.msra.mxu0 0.0
    %1194 = vmatprep.subr.mxu0 0.0
    %1195 = vmatpush2.msra.mxu0 0.0
    %1196 = vmatprep.subr.mxu0 0.0
    %1197 = vmatpush2.msra.mxu0 0.0
    %1198 = vmatprep.subr.mxu0 0.0
    %1199 = vmatpush2.msra.mxu0 0.0
    %1200 = vmatprep.mubr.f32.mxu0 0.0
    %1201 = vmatmul.mubr.f32.gmra.mxu0 %v1131
    %v1202 = vpop.f32.mrf.mxu0
    %v1203 = vadd.f32 0.0, %v1202
    %v1204 = vpop.f32.mrf.mxu0
    %1205 = vmatprep.mubr.f32.mxu0 0.0
    %1206 = vmatmul.mubr.f32.gmra.mxu0 %v1134
    %v1207 = vpop.f32.mrf.mxu0
    %v1208 = vadd.f32 0.0, %v1207
    %v1209 = vpop.f32.mrf.mxu0
    %1210 = vdwg.mxu0
    %v1211 = vadd.f32 %v1124, %v1203
    %v1212 = vadd.f32 %v1125, %v1208
    %v1213 = vld [vmem:[#allocation7] sm:$0xff]
    %v1214 = vld [vmem:[#allocation7 + $0x8] sm:$0xff]
    %1216 = vset.pattern.permute.xlu0 64
    %1217 = vperm.xlu0 %1216, %v1213
    %v1218 = vpop.permute.xlu0 %1217
    %1221 = vset.pattern.permute.xlu0 64
    %1222 = vperm.xlu0 %1221, %v1214
    %v1223 = vpop.permute.xlu0 %1222
    %v1225 = vadd.f32 %v1211, %v1218
    %v1226 = vadd.f32 %v1212, %v1223
    %v1227 = vmax.f32 %v1225, 0.0
    %v1228 = vmax.f32 %v1226, 0.0
    %v1229 = vld [vmem:[#allocation7 + $0xe0] sm:$0xff]
    %v1230 = vld [vmem:[#allocation7 + $0xe8] sm:$0xff]
    %v1231 = vld [vmem:[#allocation7 + $0xf0] sm:$0xff]
    %v1232 = vld [vmem:[#allocation7 + $0xf8] sm:$0xff]
    %v1233 = vld [vmem:[#allocation7 + $0x100] sm:$0xff]
    %v1234 = vld [vmem:[#allocation7 + $0x108] sm:$0xff]
    %v1236 = vsel %vm513, %v1229, 0
    %v1239 = vsel %vm513, %v1230, 0
    %v1242 = vsel %vm513, %v1231, 0
    %v1245 = vsel %vm513, %v1232, 0
    %v1248 = vsel %vm513, %v1233, 0
    %v1251 = vsel %vm513, %v1234, 0
    %1253 = vmatprep.subr.mxu0 0.0
    %1254 = vmatpush1.msra.mxu0 0.0
    %1255 = vmatprep.subr.mxu0 0.0
    %1256 = vmatpush1.msra.mxu0 0.0
    %1257 = vmatprep.subr.mxu0 0.0
    %1258 = vmatpush1.msra.mxu0 0.0
    %1259 = vmatprep.subr.mxu0 0.0
    %1260 = vmatpush1.msra.mxu0 0.0
    %1261 = vmatprep.subr.mxu0 0.0
    %1262 = vmatpush1.msra.mxu0 0.0
    %1263 = vmatprep.subr.mxu0 0.0
    %1264 = vmatpush1.msra.mxu0 0.0
    %1265 = vmatprep.subr.mxu0 0.0
    %1266 = vmatpush1.msra.mxu0 0.0
    %1267 = vmatprep.subr.mxu0 0.0
    %1268 = vmatpush1.msra.mxu0 0.0
    %1269 = vmatprep.subr.mxu0 0.0
    %1270 = vmatpush1.msra.mxu0 0.0
    %1271 = vmatprep.subr.mxu0 0.0
    %1272 = vmatpush1.msra.mxu0 0.0
    %1273 = vmatprep.subr.mxu0 0.0
    %1274 = vmatpush1.msra.mxu0 0.0
    %1275 = vmatprep.subr.mxu0 0.0
    %1276 = vmatpush1.msra.mxu0 0.0
    %1277 = vmatprep.subr.mxu0 0.0
    %1278 = vmatpush1.msra.mxu0 0.0
    %1279 = vmatprep.subr.mxu0 0.0
    %1280 = vmatpush1.msra.mxu0 0.0
    %1281 = vmatprep.subr.mxu0 0.0
    %1282 = vmatpush1.msra.mxu0 %v1228
    %1283 = vmatprep.subr.mxu0 0.0
    %1284 = vmatpush1.msra.mxu0 %v1227
    %1285 = vmatprep.subr.mxu0 0.0
    %1286 = vmatpush2.msra.mxu0 0.0
    %1287 = vmatprep.subr.mxu0 0.0
    %1288 = vmatpush2.msra.mxu0 0.0
    %1289 = vmatprep.subr.mxu0 0.0
    %1290 = vmatpush2.msra.mxu0 0.0
    %1291 = vmatprep.subr.mxu0 0.0
    %1292 = vmatpush2.msra.mxu0 0.0
    %1293 = vmatprep.subr.mxu0 0.0
    %1294 = vmatpush2.msra.mxu0 0.0
    %1295 = vmatprep.subr.mxu0 0.0
    %1296 = vmatpush2.msra.mxu0 0.0
    %1297 = vmatprep.subr.mxu0 0.0
    %1298 = vmatpush2.msra.mxu0 0.0
    %1299 = vmatprep.subr.mxu0 0.0
    %1300 = vmatpush2.msra.mxu0 0.0
    %1301 = vmatprep.subr.mxu0 0.0
    %1302 = vmatpush2.msra.mxu0 0.0
    %1303 = vmatprep.subr.mxu0 0.0
    %1304 = vmatpush2.msra.mxu0 0.0
    %1305 = vmatprep.subr.mxu0 0.0
    %1306 = vmatpush2.msra.mxu0 0.0
    %1307 = vmatprep.subr.mxu0 0.0
    %1308 = vmatpush2.msra.mxu0 0.0
    %1309 = vmatprep.subr.mxu0 0.0
    %1310 = vmatpush2.msra.mxu0 0.0
    %1311 = vmatprep.subr.mxu0 0.0
    %1312 = vmatpush2.msra.mxu0 0.0
    %1313 = vmatprep.subr.mxu0 0.0
    %1314 = vmatpush2.msra.mxu0 0.0
    %1315 = vmatprep.subr.mxu0 0.0
    %1316 = vmatpush2.msra.mxu0 0.0
    %1317 = vmatprep.mubr.f32.mxu0 0.0
    %1318 = vmatmul.mubr.f32.gmra.mxu0 %v1236
    %v1319 = vpop.f32.mrf.mxu0
    %v1320 = vadd.f32 0.0, %v1319
    %v1321 = vpop.f32.mrf.mxu0
    %1322 = vmatprep.mubr.f32.mxu0 0.0
    %1323 = vmatmul.mubr.f32.gmra.mxu0 %v1239
    %v1324 = vpop.f32.mrf.mxu0
    %v1325 = vadd.f32 0.0, %v1324
    %v1326 = vpop.f32.mrf.mxu0
    %1327 = vmatprep.mubr.f32.mxu0 0.0
    %1328 = vmatmul.mubr.f32.gmra.mxu0 %v1242
    %v1329 = vpop.f32.mrf.mxu0
    %v1330 = vadd.f32 0.0, %v1329
    %v1331 = vpop.f32.mrf.mxu0
    %1332 = vmatprep.mubr.f32.mxu0 0.0
    %1333 = vmatmul.mubr.f32.gmra.mxu0 %v1245
    %v1334 = vpop.f32.mrf.mxu0
    %v1335 = vadd.f32 0.0, %v1334
    %v1336 = vpop.f32.mrf.mxu0
    %1337 = vmatprep.mubr.f32.mxu0 0.0
    %1338 = vmatmul.mubr.f32.gmra.mxu0 %v1248
    %v1339 = vpop.f32.mrf.mxu0
    %v1340 = vadd.f32 0.0, %v1339
    %v1341 = vpop.f32.mrf.mxu0
    %1342 = vmatprep.mubr.f32.mxu0 0.0
    %1343 = vmatmul.mubr.f32.gmra.mxu0 %v1251
    %v1344 = vpop.f32.mrf.mxu0
    %v1345 = vadd.f32 0.0, %v1344
    %v1346 = vpop.f32.mrf.mxu0
    %1347 = vdwg.mxu0
    %v1349 = vsel %vm65, %v1320, 0
    %v1352 = vsel %vm65, %v1325, 0
    %1354 = vmatprep.subr.mxu0 0.0
    %1355 = vmatpush1.msra.mxu0 0.0
    %1356 = vmatprep.subr.mxu0 0.0
    %1357 = vmatpush1.msra.mxu0 0.0
    %1358 = vmatprep.subr.mxu0 0.0
    %1359 = vmatpush1.msra.mxu0 0.0
    %1360 = vmatprep.subr.mxu0 0.0
    %1361 = vmatpush1.msra.mxu0 0.0
    %1362 = vmatprep.subr.mxu0 0.0
    %1363 = vmatpush1.msra.mxu0 0.0
    %1364 = vmatprep.subr.mxu0 0.0
    %1365 = vmatpush1.msra.mxu0 0.0
    %1366 = vmatprep.subr.mxu0 0.0
    %1367 = vmatpush1.msra.mxu0 0.0
    %1368 = vmatprep.subr.mxu0 0.0
    %1369 = vmatpush1.msra.mxu0 0.0
    %1370 = vmatprep.subr.mxu0 0.0
    %1371 = vmatpush1.msra.mxu0 0.0
    %1372 = vmatprep.subr.mxu0 0.0
    %1373 = vmatpush1.msra.mxu0 0.0
    %1374 = vmatprep.subr.mxu0 0.0
    %1375 = vmatpush1.msra.mxu0 0.0
    %1376 = vmatprep.subr.mxu0 0.0
    %1377 = vmatpush1.msra.mxu0 0.0
    %1378 = vmatprep.subr.mxu0 0.0
    %1379 = vmatpush1.msra.mxu0 %v868
    %1380 = vmatprep.subr.mxu0 0.0
    %1381 = vmatpush1.msra.mxu0 %v867
    %1382 = vmatprep.subr.mxu0 0.0
    %1383 = vmatpush1.msra.mxu0 %v866
    %1384 = vmatprep.subr.mxu0 0.0
    %1385 = vmatpush1.msra.mxu0 %v865
    %1386 = vmatprep.subr.mxu0 0.0
    %1387 = vmatpush2.msra.mxu0 0.0
    %1388 = vmatprep.subr.mxu0 0.0
    %1389 = vmatpush2.msra.mxu0 0.0
    %1390 = vmatprep.subr.mxu0 0.0
    %1391 = vmatpush2.msra.mxu0 0.0
    %1392 = vmatprep.subr.mxu0 0.0
    %1393 = vmatpush2.msra.mxu0 0.0
    %1394 = vmatprep.subr.mxu0 0.0
    %1395 = vmatpush2.msra.mxu0 0.0
    %1396 = vmatprep.subr.mxu0 0.0
    %1397 = vmatpush2.msra.mxu0 0.0
    %1398 = vmatprep.subr.mxu0 0.0
    %1399 = vmatpush2.msra.mxu0 0.0
    %1400 = vmatprep.subr.mxu0 0.0
    %1401 = vmatpush2.msra.mxu0 0.0
    %1402 = vmatprep.subr.mxu0 0.0
    %1403 = vmatpush2.msra.mxu0 0.0
    %1404 = vmatprep.subr.mxu0 0.0
    %1405 = vmatpush2.msra.mxu0 0.0
    %1406 = vmatprep.subr.mxu0 0.0
    %1407 = vmatpush2.msra.mxu0 0.0
    %1408 = vmatprep.subr.mxu0 0.0
    %1409 = vmatpush2.msra.mxu0 0.0
    %1410 = vmatprep.subr.mxu0 0.0
    %1411 = vmatpush2.msra.mxu0 0.0
    %1412 = vmatprep.subr.mxu0 0.0
    %1413 = vmatpush2.msra.mxu0 0.0
    %1414 = vmatprep.subr.mxu0 0.0
    %1415 = vmatpush2.msra.mxu0 0.0
    %1416 = vmatprep.subr.mxu0 0.0
    %1417 = vmatpush2.msra.mxu0 0.0
    %1418 = vmatprep.mubr.f32.mxu0 0.0
    %1419 = vmatmul.mubr.f32.gmra.mxu0 %v1349
    %v1420 = vpop.f32.mrf.mxu0
    %v1421 = vadd.f32 0.0, %v1420
    %v1422 = vpop.f32.mrf.mxu0
    %1423 = vmatprep.mubr.f32.mxu0 0.0
    %1424 = vmatmul.mubr.f32.gmra.mxu0 %v1352
    %v1425 = vpop.f32.mrf.mxu0
    %v1426 = vadd.f32 0.0, %v1425
    %v1427 = vpop.f32.mrf.mxu0
    %1428 = vdwg.mxu0
    %v1429 = vadd.f32 %v1330, %v1421
    %v1430 = vadd.f32 %v1335, %v1426
    %v1432 = vsel %vm65, %v1340, 0
    %v1435 = vsel %vm65, %v1345, 0
    %1437 = vmatprep.subr.mxu0 0.0
    %1438 = vmatpush1.msra.mxu0 0.0
    %1439 = vmatprep.subr.mxu0 0.0
    %1440 = vmatpush1.msra.mxu0 0.0
    %1441 = vmatprep.subr.mxu0 0.0
    %1442 = vmatpush1.msra.mxu0 0.0
    %1443 = vmatprep.subr.mxu0 0.0
    %1444 = vmatpush1.msra.mxu0 0.0
    %1445 = vmatprep.subr.mxu0 0.0
    %1446 = vmatpush1.msra.mxu0 0.0
    %1447 = vmatprep.subr.mxu0 0.0
    %1448 = vmatpush1.msra.mxu0 0.0
    %1449 = vmatprep.subr.mxu0 0.0
    %1450 = vmatpush1.msra.mxu0 0.0
    %1451 = vmatprep.subr.mxu0 0.0
    %1452 = vmatpush1.msra.mxu0 0.0
    %1453 = vmatprep.subr.mxu0 0.0
    %1454 = vmatpush1.msra.mxu0 0.0
    %1455 = vmatprep.subr.mxu0 0.0
    %1456 = vmatpush1.msra.mxu0 0.0
    %1457 = vmatprep.subr.mxu0 0.0
    %1458 = vmatpush1.msra.mxu0 0.0
    %1459 = vmatprep.subr.mxu0 0.0
    %1460 = vmatpush1.msra.mxu0 0.0
    %1461 = vmatprep.subr.mxu0 0.0
    %1462 = vmatpush1.msra.mxu0 %v955
    %1463 = vmatprep.subr.mxu0 0.0
    %1464 = vmatpush1.msra.mxu0 %v954
    %1465 = vmatprep.subr.mxu0 0.0
    %1466 = vmatpush1.msra.mxu0 %v953
    %1467 = vmatprep.subr.mxu0 0.0
    %1468 = vmatpush1.msra.mxu0 %v952
    %1469 = vmatprep.subr.mxu0 0.0
    %1470 = vmatpush2.msra.mxu0 0.0
    %1471 = vmatprep.subr.mxu0 0.0
    %1472 = vmatpush2.msra.mxu0 0.0
    %1473 = vmatprep.subr.mxu0 0.0
    %1474 = vmatpush2.msra.mxu0 0.0
    %1475 = vmatprep.subr.mxu0 0.0
    %1476 = vmatpush2.msra.mxu0 0.0
    %1477 = vmatprep.subr.mxu0 0.0
    %1478 = vmatpush2.msra.mxu0 0.0
    %1479 = vmatprep.subr.mxu0 0.0
    %1480 = vmatpush2.msra.mxu0 0.0
    %1481 = vmatprep.subr.mxu0 0.0
    %1482 = vmatpush2.msra.mxu0 0.0
    %1483 = vmatprep.subr.mxu0 0.0
    %1484 = vmatpush2.msra.mxu0 0.0
    %1485 = vmatprep.subr.mxu0 0.0
    %1486 = vmatpush2.msra.mxu0 0.0
    %1487 = vmatprep.subr.mxu0 0.0
    %1488 = vmatpush2.msra.mxu0 0.0
    %1489 = vmatprep.subr.mxu0 0.0
    %1490 = vmatpush2.msra.mxu0 0.0
    %1491 = vmatprep.subr.mxu0 0.0
    %1492 = vmatpush2.msra.mxu0 0.0
    %1493 = vmatprep.subr.mxu0 0.0
    %1494 = vmatpush2.msra.mxu0 0.0
    %1495 = vmatprep.subr.mxu0 0.0
    %1496 = vmatpush2.msra.mxu0 0.0
    %1497 = vmatprep.subr.mxu0 0.0
    %1498 = vmatpush2.msra.mxu0 0.0
    %1499 = vmatprep.subr.mxu0 0.0
    %1500 = vmatpush2.msra.mxu0 0.0
    %1501 = vmatprep.mubr.f32.mxu0 0.0
    %1502 = vmatmul.mubr.f32.gmra.mxu0 %v1432
    %v1503 = vpop.f32.mrf.mxu0
    %v1504 = vadd.f32 0.0, %v1503
    %v1505 = vpop.f32.mrf.mxu0
    %1506 = vmatprep.mubr.f32.mxu0 0.0
    %1507 = vmatmul.mubr.f32.gmra.mxu0 %v1435
    %v1508 = vpop.f32.mrf.mxu0
    %v1509 = vadd.f32 0.0, %v1508
    %v1510 = vpop.f32.mrf.mxu0
    %1511 = vdwg.mxu0
    %v1512 = vadd.f32 %v1429, %v1504
    %v1513 = vadd.f32 %v1430, %v1509
    %v1514 = vld [vmem:[#allocation7 + $0xe0] sm:$0xff]
    %v1515 = vld [vmem:[#allocation7 + $0xe8] sm:$0xff]
    %1517 = vset.pattern.permute.xlu0 64
    %1518 = vperm.xlu0 %1517, %v1514
    %v1519 = vpop.permute.xlu0 %1518
    %1522 = vset.pattern.permute.xlu0 64
    %1523 = vperm.xlu0 %1522, %v1515
    %v1524 = vpop.permute.xlu0 %1523
    %v1526 = vadd.f32 %v1512, %v1519
    %v1527 = vadd.f32 %v1513, %v1524
    %v1528 = vmax.f32 %v1526, 0.0
    %v1529 = vmax.f32 %v1527, 0.0
    %v1530 = vld [vmem:[#allocation7 + $0x140] sm:$0xff]
    %v1531 = vld [vmem:[#allocation7 + $0x148] sm:$0xff]
    %1533 = vset.pattern.permute.xlu0 64
    %1534 = vperm.xlu0 %1533, %v1530
    %v1535 = vpop.permute.xlu0 %1534
    %1538 = vset.pattern.permute.xlu0 64
    %1539 = vperm.xlu0 %1538, %v1531
    %v1540 = vpop.permute.xlu0 %1539
    %v1542 = vsel %vm513, %v1530, 0
    %v1544 = vsel %vm513, %v1531, 0
    %1546 = vmatprep.subr.mxu0 0.0
    %1547 = vmatpush1.msra.mxu0 0.0
    %1548 = vmatprep.subr.mxu0 0.0
    %1549 = vmatpush1.msra.mxu0 0.0
    %1550 = vmatprep.subr.mxu0 0.0
    %1551 = vmatpush1.msra.mxu0 0.0
    %1552 = vmatprep.subr.mxu0 0.0
    %1553 = vmatpush1.msra.mxu0 0.0
    %1554 = vmatprep.subr.mxu0 0.0
    %1555 = vmatpush1.msra.mxu0 0.0
    %1556 = vmatprep.subr.mxu0 0.0
    %1557 = vmatpush1.msra.mxu0 0.0
    %1558 = vmatprep.subr.mxu0 0.0
    %1559 = vmatpush1.msra.mxu0 0.0
    %1560 = vmatprep.subr.mxu0 0.0
    %1561 = vmatpush1.msra.mxu0 0.0
    %1562 = vmatprep.subr.mxu0 0.0
    %1563 = vmatpush1.msra.mxu0 0.0
    %1564 = vmatprep.subr.mxu0 0.0
    %1565 = vmatpush1.msra.mxu0 0.0
    %1566 = vmatprep.subr.mxu0 0.0
    %1567 = vmatpush1.msra.mxu0 0.0
    %1568 = vmatprep.subr.mxu0 0.0
    %1569 = vmatpush1.msra.mxu0 0.0
    %1570 = vmatprep.subr.mxu0 0.0
    %1571 = vmatpush1.msra.mxu0 0.0
    %1572 = vmatprep.subr.mxu0 0.0
    %1573 = vmatpush1.msra.mxu0 0.0
    %1574 = vmatprep.subr.mxu0 0.0
    %1575 = vmatpush1.msra.mxu0 %v1228
    %1576 = vmatprep.subr.mxu0 0.0
    %1577 = vmatpush1.msra.mxu0 %v1227
    %1578 = vmatprep.subr.mxu0 0.0
    %1579 = vmatpush2.msra.mxu0 0.0
    %1580 = vmatprep.subr.mxu0 0.0
    %1581 = vmatpush2.msra.mxu0 0.0
    %1582 = vmatprep.subr.mxu0 0.0
    %1583 = vmatpush2.msra.mxu0 0.0
    %1584 = vmatprep.subr.mxu0 0.0
    %1585 = vmatpush2.msra.mxu0 0.0
    %1586 = vmatprep.subr.mxu0 0.0
    %1587 = vmatpush2.msra.mxu0 0.0
    %1588 = vmatprep.subr.mxu0 0.0
    %1589 = vmatpush2.msra.mxu0 0.0
    %1590 = vmatprep.subr.mxu0 0.0
    %1591 = vmatpush2.msra.mxu0 0.0
    %1592 = vmatprep.subr.mxu0 0.0
    %1593 = vmatpush2.msra.mxu0 0.0
    %1594 = vmatprep.subr.mxu0 0.0
    %1595 = vmatpush2.msra.mxu0 0.0
    %1596 = vmatprep.subr.mxu0 0.0
    %1597 = vmatpush2.msra.mxu0 0.0
    %1598 = vmatprep.subr.mxu0 0.0
    %1599 = vmatpush2.msra.mxu0 0.0
    %1600 = vmatprep.subr.mxu0 0.0
    %1601 = vmatpush2.msra.mxu0 0.0
    %1602 = vmatprep.subr.mxu0 0.0
    %1603 = vmatpush2.msra.mxu0 0.0
    %1604 = vmatprep.subr.mxu0 0.0
    %1605 = vmatpush2.msra.mxu0 0.0
    %1606 = vmatprep.subr.mxu0 0.0
    %1607 = vmatpush2.msra.mxu0 0.0
    %1608 = vmatprep.subr.mxu0 0.0
    %1609 = vmatpush2.msra.mxu0 0.0
    %1610 = vmatprep.mubr.f32.mxu0 0.0
    %1611 = vmatmul.mubr.f32.gmra.mxu0 %v1542
    %v1612 = vpop.f32.mrf.mxu0
    %v1613 = vadd.f32 %v1535, %v1612
    %v1614 = vpop.f32.mrf.mxu0
    %1615 = vmatprep.mubr.f32.mxu0 0.0
    %1616 = vmatmul.mubr.f32.gmra.mxu0 %v1544
    %v1617 = vpop.f32.mrf.mxu0
    %v1618 = vadd.f32 %v1540, %v1617
    %v1619 = vpop.f32.mrf.mxu0
    %1620 = vdwg.mxu0
    %v1621 = vld [vmem:[#allocation7 + $0x110] sm:$0xff]
    %v1622 = vld [vmem:[#allocation7 + $0x118] sm:$0xff]
    %v1623 = vld [vmem:[#allocation7 + $0x120] sm:$0xff]
    %v1624 = vld [vmem:[#allocation7 + $0x128] sm:$0xff]
    %v1625 = vld [vmem:[#allocation7 + $0x130] sm:$0xff]
    %v1626 = vld [vmem:[#allocation7 + $0x138] sm:$0xff]
    %v1628 = vsel %vm513, %v1621, 0
    %v1631 = vsel %vm513, %v1622, 0
    %v1634 = vsel %vm513, %v1623, 0
    %v1637 = vsel %vm513, %v1624, 0
    %v1640 = vsel %vm513, %v1625, 0
    %v1643 = vsel %vm513, %v1626, 0
    %1645 = vmatprep.subr.mxu0 0.0
    %1646 = vmatpush1.msra.mxu0 0.0
    %1647 = vmatprep.subr.mxu0 0.0
    %1648 = vmatpush1.msra.mxu0 0.0
    %1649 = vmatprep.subr.mxu0 0.0
    %1650 = vmatpush1.msra.mxu0 0.0
    %1651 = vmatprep.subr.mxu0 0.0
    %1652 = vmatpush1.msra.mxu0 0.0
    %1653 = vmatprep.subr.mxu0 0.0
    %1654 = vmatpush1.msra.mxu0 0.0
    %1655 = vmatprep.subr.mxu0 0.0
    %1656 = vmatpush1.msra.mxu0 0.0
    %1657 = vmatprep.subr.mxu0 0.0
    %1658 = vmatpush1.msra.mxu0 0.0
    %1659 = vmatprep.subr.mxu0 0.0
    %1660 = vmatpush1.msra.mxu0 0.0
    %1661 = vmatprep.subr.mxu0 0.0
    %1662 = vmatpush1.msra.mxu0 0.0
    %1663 = vmatprep.subr.mxu0 0.0
    %1664 = vmatpush1.msra.mxu0 0.0
    %1665 = vmatprep.subr.mxu0 0.0
    %1666 = vmatpush1.msra.mxu0 0.0
    %1667 = vmatprep.subr.mxu0 0.0
    %1668 = vmatpush1.msra.mxu0 0.0
    %1669 = vmatprep.subr.mxu0 0.0
    %1670 = vmatpush1.msra.mxu0 0.0
    %1671 = vmatprep.subr.mxu0 0.0
    %1672 = vmatpush1.msra.mxu0 0.0
    %1673 = vmatprep.subr.mxu0 0.0
    %1674 = vmatpush1.msra.mxu0 %v1529
    %1675 = vmatprep.subr.mxu0 0.0
    %1676 = vmatpush1.msra.mxu0 %v1528
    %1677 = vmatprep.subr.mxu0 0.0
    %1678 = vmatpush2.msra.mxu0 0.0
    %1679 = vmatprep.subr.mxu0 0.0
    %1680 = vmatpush2.msra.mxu0 0.0
    %1681 = vmatprep.subr.mxu0 0.0
    %1682 = vmatpush2.msra.mxu0 0.0
    %1683 = vmatprep.subr.mxu0 0.0
    %1684 = vmatpush2.msra.mxu0 0.0
    %1685 = vmatprep.subr.mxu0 0.0
    %1686 = vmatpush2.msra.mxu0 0.0
    %1687 = vmatprep.subr.mxu0 0.0
    %1688 = vmatpush2.msra.mxu0 0.0
    %1689 = vmatprep.subr.mxu0 0.0
    %1690 = vmatpush2.msra.mxu0 0.0
    %1691 = vmatprep.subr.mxu0 0.0
    %1692 = vmatpush2.msra.mxu0 0.0
    %1693 = vmatprep.subr.mxu0 0.0
    %1694 = vmatpush2.msra.mxu0 0.0
    %1695 = vmatprep.subr.mxu0 0.0
    %1696 = vmatpush2.msra.mxu0 0.0
    %1697 = vmatprep.subr.mxu0 0.0
    %1698 = vmatpush2.msra.mxu0 0.0
    %1699 = vmatprep.subr.mxu0 0.0
    %1700 = vmatpush2.msra.mxu0 0.0
    %1701 = vmatprep.subr.mxu0 0.0
    %1702 = vmatpush2.msra.mxu0 0.0
    %1703 = vmatprep.subr.mxu0 0.0
    %1704 = vmatpush2.msra.mxu0 0.0
    %1705 = vmatprep.subr.mxu0 0.0
    %1706 = vmatpush2.msra.mxu0 0.0
    %1707 = vmatprep.subr.mxu0 0.0
    %1708 = vmatpush2.msra.mxu0 0.0
    %1709 = vmatprep.mubr.f32.mxu0 0.0
    %1710 = vmatmul.mubr.f32.gmra.mxu0 %v1628
    %v1711 = vpop.f32.mrf.mxu0
    %v1712 = vadd.f32 0.0, %v1711
    %v1713 = vpop.f32.mrf.mxu0
    %1714 = vmatprep.mubr.f32.mxu0 0.0
    %1715 = vmatmul.mubr.f32.gmra.mxu0 %v1631
    %v1716 = vpop.f32.mrf.mxu0
    %v1717 = vadd.f32 0.0, %v1716
    %v1718 = vpop.f32.mrf.mxu0
    %1719 = vmatprep.mubr.f32.mxu0 0.0
    %1720 = vmatmul.mubr.f32.gmra.mxu0 %v1634
    %v1721 = vpop.f32.mrf.mxu0
    %v1722 = vadd.f32 0.0, %v1721
    %v1723 = vpop.f32.mrf.mxu0
    %1724 = vmatprep.mubr.f32.mxu0 0.0
    %1725 = vmatmul.mubr.f32.gmra.mxu0 %v1637
    %v1726 = vpop.f32.mrf.mxu0
    %v1727 = vadd.f32 0.0, %v1726
    %v1728 = vpop.f32.mrf.mxu0
    %1729 = vmatprep.mubr.f32.mxu0 0.0
    %1730 = vmatmul.mubr.f32.gmra.mxu0 %v1640
    %v1731 = vpop.f32.mrf.mxu0
    %v1732 = vadd.f32 0.0, %v1731
    %v1733 = vpop.f32.mrf.mxu0
    %1734 = vmatprep.mubr.f32.mxu0 0.0
    %1735 = vmatmul.mubr.f32.gmra.mxu0 %v1643
    %v1736 = vpop.f32.mrf.mxu0
    %v1737 = vadd.f32 0.0, %v1736
    %v1738 = vpop.f32.mrf.mxu0
    %1739 = vdwg.mxu0
    %v1741 = vsel %vm65, %v1712, 0
    %v1744 = vsel %vm65, %v1717, 0
    %1746 = vmatprep.subr.mxu0 0.0
    %1747 = vmatpush1.msra.mxu0 0.0
    %1748 = vmatprep.subr.mxu0 0.0
    %1749 = vmatpush1.msra.mxu0 0.0
    %1750 = vmatprep.subr.mxu0 0.0
    %1751 = vmatpush1.msra.mxu0 0.0
    %1752 = vmatprep.subr.mxu0 0.0
    %1753 = vmatpush1.msra.mxu0 0.0
    %1754 = vmatprep.subr.mxu0 0.0
    %1755 = vmatpush1.msra.mxu0 0.0
    %1756 = vmatprep.subr.mxu0 0.0
    %1757 = vmatpush1.msra.mxu0 0.0
    %1758 = vmatprep.subr.mxu0 0.0
    %1759 = vmatpush1.msra.mxu0 0.0
    %1760 = vmatprep.subr.mxu0 0.0
    %1761 = vmatpush1.msra.mxu0 0.0
    %1762 = vmatprep.subr.mxu0 0.0
    %1763 = vmatpush1.msra.mxu0 0.0
    %1764 = vmatprep.subr.mxu0 0.0
    %1765 = vmatpush1.msra.mxu0 0.0
    %1766 = vmatprep.subr.mxu0 0.0
    %1767 = vmatpush1.msra.mxu0 0.0
    %1768 = vmatprep.subr.mxu0 0.0
    %1769 = vmatpush1.msra.mxu0 0.0
    %1770 = vmatprep.subr.mxu0 0.0
    %1771 = vmatpush1.msra.mxu0 %v868
    %1772 = vmatprep.subr.mxu0 0.0
    %1773 = vmatpush1.msra.mxu0 %v867
    %1774 = vmatprep.subr.mxu0 0.0
    %1775 = vmatpush1.msra.mxu0 %v866
    %1776 = vmatprep.subr.mxu0 0.0
    %1777 = vmatpush1.msra.mxu0 %v865
    %1778 = vmatprep.subr.mxu0 0.0
    %1779 = vmatpush2.msra.mxu0 0.0
    %1780 = vmatprep.subr.mxu0 0.0
    %1781 = vmatpush2.msra.mxu0 0.0
    %1782 = vmatprep.subr.mxu0 0.0
    %1783 = vmatpush2.msra.mxu0 0.0
    %1784 = vmatprep.subr.mxu0 0.0
    %1785 = vmatpush2.msra.mxu0 0.0
    %1786 = vmatprep.subr.mxu0 0.0
    %1787 = vmatpush2.msra.mxu0 0.0
    %1788 = vmatprep.subr.mxu0 0.0
    %1789 = vmatpush2.msra.mxu0 0.0
    %1790 = vmatprep.subr.mxu0 0.0
    %1791 = vmatpush2.msra.mxu0 0.0
    %1792 = vmatprep.subr.mxu0 0.0
    %1793 = vmatpush2.msra.mxu0 0.0
    %1794 = vmatprep.subr.mxu0 0.0
    %1795 = vmatpush2.msra.mxu0 0.0
    %1796 = vmatprep.subr.mxu0 0.0
    %1797 = vmatpush2.msra.mxu0 0.0
    %1798 = vmatprep.subr.mxu0 0.0
    %1799 = vmatpush2.msra.mxu0 0.0
    %1800 = vmatprep.subr.mxu0 0.0
    %1801 = vmatpush2.msra.mxu0 0.0
    %1802 = vmatprep.subr.mxu0 0.0
    %1803 = vmatpush2.msra.mxu0 0.0
    %1804 = vmatprep.subr.mxu0 0.0
    %1805 = vmatpush2.msra.mxu0 0.0
    %1806 = vmatprep.subr.mxu0 0.0
    %1807 = vmatpush2.msra.mxu0 0.0
    %1808 = vmatprep.subr.mxu0 0.0
    %1809 = vmatpush2.msra.mxu0 0.0
    %1810 = vmatprep.mubr.f32.mxu0 0.0
    %1811 = vmatmul.mubr.f32.gmra.mxu0 %v1741
    %v1812 = vpop.f32.mrf.mxu0
    %v1813 = vadd.f32 0.0, %v1812
    %v1814 = vpop.f32.mrf.mxu0
    %1815 = vmatprep.mubr.f32.mxu0 0.0
    %1816 = vmatmul.mubr.f32.gmra.mxu0 %v1744
    %v1817 = vpop.f32.mrf.mxu0
    %v1818 = vadd.f32 0.0, %v1817
    %v1819 = vpop.f32.mrf.mxu0
    %1820 = vdwg.mxu0
    %v1821 = vadd.f32 %v1722, %v1813
    %v1822 = vadd.f32 %v1727, %v1818
    %v1824 = vsel %vm65, %v1732, 0
    %v1827 = vsel %vm65, %v1737, 0
    %1829 = vmatprep.subr.mxu0 0.0
    %1830 = vmatpush1.msra.mxu0 0.0
    %1831 = vmatprep.subr.mxu0 0.0
    %1832 = vmatpush1.msra.mxu0 0.0
    %1833 = vmatprep.subr.mxu0 0.0
    %1834 = vmatpush1.msra.mxu0 0.0
    %1835 = vmatprep.subr.mxu0 0.0
    %1836 = vmatpush1.msra.mxu0 0.0
    %1837 = vmatprep.subr.mxu0 0.0
    %1838 = vmatpush1.msra.mxu0 0.0
    %1839 = vmatprep.subr.mxu0 0.0
    %1840 = vmatpush1.msra.mxu0 0.0
    %1841 = vmatprep.subr.mxu0 0.0
    %1842 = vmatpush1.msra.mxu0 0.0
    %1843 = vmatprep.subr.mxu0 0.0
    %1844 = vmatpush1.msra.mxu0 0.0
    %1845 = vmatprep.subr.mxu0 0.0
    %1846 = vmatpush1.msra.mxu0 0.0
    %1847 = vmatprep.subr.mxu0 0.0
    %1848 = vmatpush1.msra.mxu0 0.0
    %1849 = vmatprep.subr.mxu0 0.0
    %1850 = vmatpush1.msra.mxu0 0.0
    %1851 = vmatprep.subr.mxu0 0.0
    %1852 = vmatpush1.msra.mxu0 0.0
    %1853 = vmatprep.subr.mxu0 0.0
    %1854 = vmatpush1.msra.mxu0 %v955
    %1855 = vmatprep.subr.mxu0 0.0
    %1856 = vmatpush1.msra.mxu0 %v954
    %1857 = vmatprep.subr.mxu0 0.0
    %1858 = vmatpush1.msra.mxu0 %v953
    %1859 = vmatprep.subr.mxu0 0.0
    %1860 = vmatpush1.msra.mxu0 %v952
    %1861 = vmatprep.subr.mxu0 0.0
    %1862 = vmatpush2.msra.mxu0 0.0
    %1863 = vmatprep.subr.mxu0 0.0
    %1864 = vmatpush2.msra.mxu0 0.0
    %1865 = vmatprep.subr.mxu0 0.0
    %1866 = vmatpush2.msra.mxu0 0.0
    %1867 = vmatprep.subr.mxu0 0.0
    %1868 = vmatpush2.msra.mxu0 0.0
    %1869 = vmatprep.subr.mxu0 0.0
    %1870 = vmatpush2.msra.mxu0 0.0
    %1871 = vmatprep.subr.mxu0 0.0
    %1872 = vmatpush2.msra.mxu0 0.0
    %1873 = vmatprep.subr.mxu0 0.0
    %1874 = vmatpush2.msra.mxu0 0.0
    %1875 = vmatprep.subr.mxu0 0.0
    %1876 = vmatpush2.msra.mxu0 0.0
    %1877 = vmatprep.subr.mxu0 0.0
    %1878 = vmatpush2.msra.mxu0 0.0
    %1879 = vmatprep.subr.mxu0 0.0
    %1880 = vmatpush2.msra.mxu0 0.0
    %1881 = vmatprep.subr.mxu0 0.0
    %1882 = vmatpush2.msra.mxu0 0.0
    %1883 = vmatprep.subr.mxu0 0.0
    %1884 = vmatpush2.msra.mxu0 0.0
    %1885 = vmatprep.subr.mxu0 0.0
    %1886 = vmatpush2.msra.mxu0 0.0
    %1887 = vmatprep.subr.mxu0 0.0
    %1888 = vmatpush2.msra.mxu0 0.0
    %1889 = vmatprep.subr.mxu0 0.0
    %1890 = vmatpush2.msra.mxu0 0.0
    %1891 = vmatprep.subr.mxu0 0.0
    %1892 = vmatpush2.msra.mxu0 0.0
    %1893 = vmatprep.mubr.f32.mxu0 0.0
    %1894 = vmatmul.mubr.f32.gmra.mxu0 %v1824
    %v1895 = vpop.f32.mrf.mxu0
    %v1896 = vadd.f32 0.0, %v1895
    %v1897 = vpop.f32.mrf.mxu0
    %1898 = vmatprep.mubr.f32.mxu0 0.0
    %1899 = vmatmul.mubr.f32.gmra.mxu0 %v1827
    %v1900 = vpop.f32.mrf.mxu0
    %v1901 = vadd.f32 0.0, %v1900
    %v1902 = vpop.f32.mrf.mxu0
    %1903 = vdwg.mxu0
    %v1904 = vadd.f32 %v1821, %v1896
    %v1905 = vadd.f32 %v1822, %v1901
    %v1906 = vld [vmem:[#allocation7 + $0x110] sm:$0xff]
    %v1907 = vld [vmem:[#allocation7 + $0x118] sm:$0xff]
    %1909 = vset.pattern.permute.xlu0 64
    %1910 = vperm.xlu0 %1909, %v1906
    %v1911 = vpop.permute.xlu0 %1910
    %1914 = vset.pattern.permute.xlu0 64
    %1915 = vperm.xlu0 %1914, %v1907
    %v1916 = vpop.permute.xlu0 %1915
    %v1918 = vadd.f32 %v1904, %v1911
    %v1919 = vadd.f32 %v1905, %v1916
    %v1920 = vmax.f32 %v1918, 0.0
    %v1921 = vmax.f32 %v1919, 0.0
    %v1922 = vadd.f32 %v1920, %v1613
    %v1923 = vadd.f32 %v1921, %v1618
    %v1924 = vld [vmem:[#allocation7 + $0x150] sm:$0xff]
    %v1925 = vld [vmem:[#allocation7 + $0x158] sm:$0xff]
    %v1926 = vld [vmem:[#allocation7 + $0x160] sm:$0xff]
    %v1927 = vld [vmem:[#allocation7 + $0x168] sm:$0xff]
    %v1928 = vld [vmem:[#allocation7 + $0x170] sm:$0xff]
    %v1929 = vld [vmem:[#allocation7 + $0x178] sm:$0xff]
    %v1931 = vsel %vm513, %v1924, 0
    %v1934 = vsel %vm513, %v1925, 0
    %v1937 = vsel %vm513, %v1926, 0
    %v1940 = vsel %vm513, %v1927, 0
    %v1943 = vsel %vm513, %v1928, 0
    %v1946 = vsel %vm513, %v1929, 0
    %1948 = vmatprep.subr.mxu0 0.0
    %1949 = vmatpush1.msra.mxu0 0.0
    %1950 = vmatprep.subr.mxu0 0.0
    %1951 = vmatpush1.msra.mxu0 0.0
    %1952 = vmatprep.subr.mxu0 0.0
    %1953 = vmatpush1.msra.mxu0 0.0
    %1954 = vmatprep.subr.mxu0 0.0
    %1955 = vmatpush1.msra.mxu0 0.0
    %1956 = vmatprep.subr.mxu0 0.0
    %1957 = vmatpush1.msra.mxu0 0.0
    %1958 = vmatprep.subr.mxu0 0.0
    %1959 = vmatpush1.msra.mxu0 0.0
    %1960 = vmatprep.subr.mxu0 0.0
    %1961 = vmatpush1.msra.mxu0 0.0
    %1962 = vmatprep.subr.mxu0 0.0
    %1963 = vmatpush1.msra.mxu0 0.0
    %1964 = vmatprep.subr.mxu0 0.0
    %1965 = vmatpush1.msra.mxu0 0.0
    %1966 = vmatprep.subr.mxu0 0.0
    %1967 = vmatpush1.msra.mxu0 0.0
    %1968 = vmatprep.subr.mxu0 0.0
    %1969 = vmatpush1.msra.mxu0 0.0
    %1970 = vmatprep.subr.mxu0 0.0
    %1971 = vmatpush1.msra.mxu0 0.0
    %1972 = vmatprep.subr.mxu0 0.0
    %1973 = vmatpush1.msra.mxu0 0.0
    %1974 = vmatprep.subr.mxu0 0.0
    %1975 = vmatpush1.msra.mxu0 0.0
    %1976 = vmatprep.subr.mxu0 0.0
    %1977 = vmatpush1.msra.mxu0 %v1923
    %1978 = vmatprep.subr.mxu0 0.0
    %1979 = vmatpush1.msra.mxu0 %v1922
    %1980 = vmatprep.subr.mxu0 0.0
    %1981 = vmatpush2.msra.mxu0 0.0
    %1982 = vmatprep.subr.mxu0 0.0
    %1983 = vmatpush2.msra.mxu0 0.0
    %1984 = vmatprep.subr.mxu0 0.0
    %1985 = vmatpush2.msra.mxu0 0.0
    %1986 = vmatprep.subr.mxu0 0.0
    %1987 = vmatpush2.msra.mxu0 0.0
    %1988 = vmatprep.subr.mxu0 0.0
    %1989 = vmatpush2.msra.mxu0 0.0
    %1990 = vmatprep.subr.mxu0 0.0
    %1991 = vmatpush2.msra.mxu0 0.0
    %1992 = vmatprep.subr.mxu0 0.0
    %1993 = vmatpush2.msra.mxu0 0.0
    %1994 = vmatprep.subr.mxu0 0.0
    %1995 = vmatpush2.msra.mxu0 0.0
    %1996 = vmatprep.subr.mxu0 0.0
    %1997 = vmatpush2.msra.mxu0 0.0
    %1998 = vmatprep.subr.mxu0 0.0
    %1999 = vmatpush2.msra.mxu0 0.0
    %2000 = vmatprep.subr.mxu0 0.0
    %2001 = vmatpush2.msra.mxu0 0.0
    %2002 = vmatprep.subr.mxu0 0.0
    %2003 = vmatpush2.msra.mxu0 0.0
    %2004 = vmatprep.subr.mxu0 0.0
    %2005 = vmatpush2.msra.mxu0 0.0
    %2006 = vmatprep.subr.mxu0 0.0
    %2007 = vmatpush2.msra.mxu0 0.0
    %2008 = vmatprep.subr.mxu0 0.0
    %2009 = vmatpush2.msra.mxu0 0.0
    %2010 = vmatprep.subr.mxu0 0.0
    %2011 = vmatpush2.msra.mxu0 0.0
    %2012 = vmatprep.mubr.f32.mxu0 0.0
    %2013 = vmatmul.mubr.f32.gmra.mxu0 %v1931
    %v2014 = vpop.f32.mrf.mxu0
    %v2015 = vadd.f32 0.0, %v2014
    %v2016 = vpop.f32.mrf.mxu0
    %2017 = vmatprep.mubr.f32.mxu0 0.0
    %2018 = vmatmul.mubr.f32.gmra.mxu0 %v1934
    %v2019 = vpop.f32.mrf.mxu0
    %v2020 = vadd.f32 0.0, %v2019
    %v2021 = vpop.f32.mrf.mxu0
    %2022 = vmatprep.mubr.f32.mxu0 0.0
    %2023 = vmatmul.mubr.f32.gmra.mxu0 %v1937
    %v2024 = vpop.f32.mrf.mxu0
    %v2025 = vadd.f32 0.0, %v2024
    %v2026 = vpop.f32.mrf.mxu0
    %2027 = vmatprep.mubr.f32.mxu0 0.0
    %2028 = vmatmul.mubr.f32.gmra.mxu0 %v1940
    %v2029 = vpop.f32.mrf.mxu0
    %v2030 = vadd.f32 0.0, %v2029
    %v2031 = vpop.f32.mrf.mxu0
    %2032 = vmatprep.mubr.f32.mxu0 0.0
    %2033 = vmatmul.mubr.f32.gmra.mxu0 %v1943
    %v2034 = vpop.f32.mrf.mxu0
    %v2035 = vadd.f32 0.0, %v2034
    %v2036 = vpop.f32.mrf.mxu0
    %2037 = vmatprep.mubr.f32.mxu0 0.0
    %2038 = vmatmul.mubr.f32.gmra.mxu0 %v1946
    %v2039 = vpop.f32.mrf.mxu0
    %v2040 = vadd.f32 0.0, %v2039
    %v2041 = vpop.f32.mrf.mxu0
    %2042 = vdwg.mxu0
    %v2044 = vsel %vm65, %v2015, 0
    %v2047 = vsel %vm65, %v2020, 0
    %2049 = vmatprep.subr.mxu0 0.0
    %2050 = vmatpush1.msra.mxu0 0.0
    %2051 = vmatprep.subr.mxu0 0.0
    %2052 = vmatpush1.msra.mxu0 0.0
    %2053 = vmatprep.subr.mxu0 0.0
    %2054 = vmatpush1.msra.mxu0 0.0
    %2055 = vmatprep.subr.mxu0 0.0
    %2056 = vmatpush1.msra.mxu0 0.0
    %2057 = vmatprep.subr.mxu0 0.0
    %2058 = vmatpush1.msra.mxu0 0.0
    %2059 = vmatprep.subr.mxu0 0.0
    %2060 = vmatpush1.msra.mxu0 0.0
    %2061 = vmatprep.subr.mxu0 0.0
    %2062 = vmatpush1.msra.mxu0 0.0
    %2063 = vmatprep.subr.mxu0 0.0
    %2064 = vmatpush1.msra.mxu0 0.0
    %2065 = vmatprep.subr.mxu0 0.0
    %2066 = vmatpush1.msra.mxu0 0.0
    %2067 = vmatprep.subr.mxu0 0.0
    %2068 = vmatpush1.msra.mxu0 0.0
    %2069 = vmatprep.subr.mxu0 0.0
    %2070 = vmatpush1.msra.mxu0 0.0
    %2071 = vmatprep.subr.mxu0 0.0
    %2072 = vmatpush1.msra.mxu0 0.0
    %2073 = vmatprep.subr.mxu0 0.0
    %2074 = vmatpush1.msra.mxu0 %v868
    %2075 = vmatprep.subr.mxu0 0.0
    %2076 = vmatpush1.msra.mxu0 %v867
    %2077 = vmatprep.subr.mxu0 0.0
    %2078 = vmatpush1.msra.mxu0 %v866
    %2079 = vmatprep.subr.mxu0 0.0
    %2080 = vmatpush1.msra.mxu0 %v865
    %2081 = vmatprep.subr.mxu0 0.0
    %2082 = vmatpush2.msra.mxu0 0.0
    %2083 = vmatprep.subr.mxu0 0.0
    %2084 = vmatpush2.msra.mxu0 0.0
    %2085 = vmatprep.subr.mxu0 0.0
    %2086 = vmatpush2.msra.mxu0 0.0
    %2087 = vmatprep.subr.mxu0 0.0
    %2088 = vmatpush2.msra.mxu0 0.0
    %2089 = vmatprep.subr.mxu0 0.0
    %2090 = vmatpush2.msra.mxu0 0.0
    %2091 = vmatprep.subr.mxu0 0.0
    %2092 = vmatpush2.msra.mxu0 0.0
    %2093 = vmatprep.subr.mxu0 0.0
    %2094 = vmatpush2.msra.mxu0 0.0
    %2095 = vmatprep.subr.mxu0 0.0
    %2096 = vmatpush2.msra.mxu0 0.0
    %2097 = vmatprep.subr.mxu0 0.0
    %2098 = vmatpush2.msra.mxu0 0.0
    %2099 = vmatprep.subr.mxu0 0.0
    %2100 = vmatpush2.msra.mxu0 0.0
    %2101 = vmatprep.subr.mxu0 0.0
    %2102 = vmatpush2.msra.mxu0 0.0
    %2103 = vmatprep.subr.mxu0 0.0
    %2104 = vmatpush2.msra.mxu0 0.0
    %2105 = vmatprep.subr.mxu0 0.0
    %2106 = vmatpush2.msra.mxu0 0.0
    %2107 = vmatprep.subr.mxu0 0.0
    %2108 = vmatpush2.msra.mxu0 0.0
    %2109 = vmatprep.subr.mxu0 0.0
    %2110 = vmatpush2.msra.mxu0 0.0
    %2111 = vmatprep.subr.mxu0 0.0
    %2112 = vmatpush2.msra.mxu0 0.0
    %2113 = vmatprep.mubr.f32.mxu0 0.0
    %2114 = vmatmul.mubr.f32.gmra.mxu0 %v2044
    %v2115 = vpop.f32.mrf.mxu0
    %v2116 = vadd.f32 0.0, %v2115
    %v2117 = vpop.f32.mrf.mxu0
    %2118 = vmatprep.mubr.f32.mxu0 0.0
    %2119 = vmatmul.mubr.f32.gmra.mxu0 %v2047
    %v2120 = vpop.f32.mrf.mxu0
    %v2121 = vadd.f32 0.0, %v2120
    %v2122 = vpop.f32.mrf.mxu0
    %2123 = vdwg.mxu0
    %v2124 = vadd.f32 %v2025, %v2116
    %v2125 = vadd.f32 %v2030, %v2121
    %v2127 = vsel %vm65, %v2035, 0
    %v2130 = vsel %vm65, %v2040, 0
    %2132 = vmatprep.subr.mxu0 0.0
    %2133 = vmatpush1.msra.mxu0 0.0
    %2134 = vmatprep.subr.mxu0 0.0
    %2135 = vmatpush1.msra.mxu0 0.0
    %2136 = vmatprep.subr.mxu0 0.0
    %2137 = vmatpush1.msra.mxu0 0.0
    %2138 = vmatprep.subr.mxu0 0.0
    %2139 = vmatpush1.msra.mxu0 0.0
    %2140 = vmatprep.subr.mxu0 0.0
    %2141 = vmatpush1.msra.mxu0 0.0
    %2142 = vmatprep.subr.mxu0 0.0
    %2143 = vmatpush1.msra.mxu0 0.0
    %2144 = vmatprep.subr.mxu0 0.0
    %2145 = vmatpush1.msra.mxu0 0.0
    %2146 = vmatprep.subr.mxu0 0.0
    %2147 = vmatpush1.msra.mxu0 0.0
    %2148 = vmatprep.subr.mxu0 0.0
    %2149 = vmatpush1.msra.mxu0 0.0
    %2150 = vmatprep.subr.mxu0 0.0
    %2151 = vmatpush1.msra.mxu0 0.0
    %2152 = vmatprep.subr.mxu0 0.0
    %2153 = vmatpush1.msra.mxu0 0.0
    %2154 = vmatprep.subr.mxu0 0.0
    %2155 = vmatpush1.msra.mxu0 0.0
    %2156 = vmatprep.subr.mxu0 0.0
    %2157 = vmatpush1.msra.mxu0 %v955
    %2158 = vmatprep.subr.mxu0 0.0
    %2159 = vmatpush1.msra.mxu0 %v954
    %2160 = vmatprep.subr.mxu0 0.0
    %2161 = vmatpush1.msra.mxu0 %v953
    %2162 = vmatprep.subr.mxu0 0.0
    %2163 = vmatpush1.msra.mxu0 %v952
    %2164 = vmatprep.subr.mxu0 0.0
    %2165 = vmatpush2.msra.mxu0 0.0
    %2166 = vmatprep.subr.mxu0 0.0
    %2167 = vmatpush2.msra.mxu0 0.0
    %2168 = vmatprep.subr.mxu0 0.0
    %2169 = vmatpush2.msra.mxu0 0.0
    %2170 = vmatprep.subr.mxu0 0.0
    %2171 = vmatpush2.msra.mxu0 0.0
    %2172 = vmatprep.subr.mxu0 0.0
    %2173 = vmatpush2.msra.mxu0 0.0
    %2174 = vmatprep.subr.mxu0 0.0
    %2175 = vmatpush2.msra.mxu0 0.0
    %2176 = vmatprep.subr.mxu0 0.0
    %2177 = vmatpush2.msra.mxu0 0.0
    %2178 = vmatprep.subr.mxu0 0.0
    %2179 = vmatpush2.msra.mxu0 0.0
    %2180 = vmatprep.subr.mxu0 0.0
    %2181 = vmatpush2.msra.mxu0 0.0
    %2182 = vmatprep.subr.mxu0 0.0
    %2183 = vmatpush2.msra.mxu0 0.0
    %2184 = vmatprep.subr.mxu0 0.0
    %2185 = vmatpush2.msra.mxu0 0.0
    %2186 = vmatprep.subr.mxu0 0.0
    %2187 = vmatpush2.msra.mxu0 0.0
    %2188 = vmatprep.subr.mxu0 0.0
    %2189 = vmatpush2.msra.mxu0 0.0
    %2190 = vmatprep.subr.mxu0 0.0
    %2191 = vmatpush2.msra.mxu0 0.0
    %2192 = vmatprep.subr.mxu0 0.0
    %2193 = vmatpush2.msra.mxu0 0.0
    %2194 = vmatprep.subr.mxu0 0.0
    %2195 = vmatpush2.msra.mxu0 0.0
    %2196 = vmatprep.mubr.f32.mxu0 0.0
    %2197 = vmatmul.mubr.f32.gmra.mxu0 %v2127
    %v2198 = vpop.f32.mrf.mxu0
    %v2199 = vadd.f32 0.0, %v2198
    %v2200 = vpop.f32.mrf.mxu0
    %2201 = vmatprep.mubr.f32.mxu0 0.0
    %2202 = vmatmul.mubr.f32.gmra.mxu0 %v2130
    %v2203 = vpop.f32.mrf.mxu0
    %v2204 = vadd.f32 0.0, %v2203
    %v2205 = vpop.f32.mrf.mxu0
    %2206 = vdwg.mxu0
    %v2207 = vadd.f32 %v2124, %v2199
    %v2208 = vadd.f32 %v2125, %v2204
    %v2209 = vld [vmem:[#allocation7 + $0x150] sm:$0xff]
    %v2210 = vld [vmem:[#allocation7 + $0x158] sm:$0xff]
    %2212 = vset.pattern.permute.xlu0 64
    %2213 = vperm.xlu0 %2212, %v2209
    %v2214 = vpop.permute.xlu0 %2213
    %2217 = vset.pattern.permute.xlu0 64
    %2218 = vperm.xlu0 %2217, %v2210
    %v2219 = vpop.permute.xlu0 %2218
    %v2221 = vadd.f32 %v2207, %v2214
    %v2222 = vadd.f32 %v2208, %v2219
    %v2223 = vmax.f32 %v2221, 0.0
    %v2224 = vmax.f32 %v2222, 0.0
    %v2225 = vld [vmem:[#allocation7 + $0x180] sm:$0xff]
    %v2226 = vld [vmem:[#allocation7 + $0x188] sm:$0xff]
    %v2227 = vld [vmem:[#allocation7 + $0x190] sm:$0xff]
    %v2228 = vld [vmem:[#allocation7 + $0x198] sm:$0xff]
    %v2229 = vld [vmem:[#allocation7 + $0x1a0] sm:$0xff]
    %v2230 = vld [vmem:[#allocation7 + $0x1a8] sm:$0xff]
    %v2232 = vsel %vm513, %v2225, 0
    %v2235 = vsel %vm513, %v2226, 0
    %v2238 = vsel %vm513, %v2227, 0
    %v2241 = vsel %vm513, %v2228, 0
    %v2244 = vsel %vm513, %v2229, 0
    %v2247 = vsel %vm513, %v2230, 0
    %2249 = vmatprep.subr.mxu0 0.0
    %2250 = vmatpush1.msra.mxu0 0.0
    %2251 = vmatprep.subr.mxu0 0.0
    %2252 = vmatpush1.msra.mxu0 0.0
    %2253 = vmatprep.subr.mxu0 0.0
    %2254 = vmatpush1.msra.mxu0 0.0
    %2255 = vmatprep.subr.mxu0 0.0
    %2256 = vmatpush1.msra.mxu0 0.0
    %2257 = vmatprep.subr.mxu0 0.0
    %2258 = vmatpush1.msra.mxu0 0.0
    %2259 = vmatprep.subr.mxu0 0.0
    %2260 = vmatpush1.msra.mxu0 0.0
    %2261 = vmatprep.subr.mxu0 0.0
    %2262 = vmatpush1.msra.mxu0 0.0
    %2263 = vmatprep.subr.mxu0 0.0
    %2264 = vmatpush1.msra.mxu0 0.0
    %2265 = vmatprep.subr.mxu0 0.0
    %2266 = vmatpush1.msra.mxu0 0.0
    %2267 = vmatprep.subr.mxu0 0.0
    %2268 = vmatpush1.msra.mxu0 0.0
    %2269 = vmatprep.subr.mxu0 0.0
    %2270 = vmatpush1.msra.mxu0 0.0
    %2271 = vmatprep.subr.mxu0 0.0
    %2272 = vmatpush1.msra.mxu0 0.0
    %2273 = vmatprep.subr.mxu0 0.0
    %2274 = vmatpush1.msra.mxu0 0.0
    %2275 = vmatprep.subr.mxu0 0.0
    %2276 = vmatpush1.msra.mxu0 0.0
    %2277 = vmatprep.subr.mxu0 0.0
    %2278 = vmatpush1.msra.mxu0 %v2224
    %2279 = vmatprep.subr.mxu0 0.0
    %2280 = vmatpush1.msra.mxu0 %v2223
    %2281 = vmatprep.subr.mxu0 0.0
    %2282 = vmatpush2.msra.mxu0 0.0
    %2283 = vmatprep.subr.mxu0 0.0
    %2284 = vmatpush2.msra.mxu0 0.0
    %2285 = vmatprep.subr.mxu0 0.0
    %2286 = vmatpush2.msra.mxu0 0.0
    %2287 = vmatprep.subr.mxu0 0.0
    %2288 = vmatpush2.msra.mxu0 0.0
    %2289 = vmatprep.subr.mxu0 0.0
    %2290 = vmatpush2.msra.mxu0 0.0
    %2291 = vmatprep.subr.mxu0 0.0
    %2292 = vmatpush2.msra.mxu0 0.0
    %2293 = vmatprep.subr.mxu0 0.0
    %2294 = vmatpush2.msra.mxu0 0.0
    %2295 = vmatprep.subr.mxu0 0.0
    %2296 = vmatpush2.msra.mxu0 0.0
    %2297 = vmatprep.subr.mxu0 0.0
    %2298 = vmatpush2.msra.mxu0 0.0
    %2299 = vmatprep.subr.mxu0 0.0
    %2300 = vmatpush2.msra.mxu0 0.0
    %2301 = vmatprep.subr.mxu0 0.0
    %2302 = vmatpush2.msra.mxu0 0.0
    %2303 = vmatprep.subr.mxu0 0.0
    %2304 = vmatpush2.msra.mxu0 0.0
    %2305 = vmatprep.subr.mxu0 0.0
    %2306 = vmatpush2.msra.mxu0 0.0
    %2307 = vmatprep.subr.mxu0 0.0
    %2308 = vmatpush2.msra.mxu0 0.0
    %2309 = vmatprep.subr.mxu0 0.0
    %2310 = vmatpush2.msra.mxu0 0.0
    %2311 = vmatprep.subr.mxu0 0.0
    %2312 = vmatpush2.msra.mxu0 0.0
    %2313 = vmatprep.mubr.f32.mxu0 0.0
    %2314 = vmatmul.mubr.f32.gmra.mxu0 %v2232
    %v2315 = vpop.f32.mrf.mxu0
    %v2316 = vadd.f32 0.0, %v2315
    %v2317 = vpop.f32.mrf.mxu0
    %2318 = vmatprep.mubr.f32.mxu0 0.0
    %2319 = vmatmul.mubr.f32.gmra.mxu0 %v2235
    %v2320 = vpop.f32.mrf.mxu0
    %v2321 = vadd.f32 0.0, %v2320
    %v2322 = vpop.f32.mrf.mxu0
    %2323 = vmatprep.mubr.f32.mxu0 0.0
    %2324 = vmatmul.mubr.f32.gmra.mxu0 %v2238
    %v2325 = vpop.f32.mrf.mxu0
    %v2326 = vadd.f32 0.0, %v2325
    %v2327 = vpop.f32.mrf.mxu0
    %2328 = vmatprep.mubr.f32.mxu0 0.0
    %2329 = vmatmul.mubr.f32.gmra.mxu0 %v2241
    %v2330 = vpop.f32.mrf.mxu0
    %v2331 = vadd.f32 0.0, %v2330
    %v2332 = vpop.f32.mrf.mxu0
    %2333 = vmatprep.mubr.f32.mxu0 0.0
    %2334 = vmatmul.mubr.f32.gmra.mxu0 %v2244
    %v2335 = vpop.f32.mrf.mxu0
    %v2336 = vadd.f32 0.0, %v2335
    %v2337 = vpop.f32.mrf.mxu0
    %2338 = vmatprep.mubr.f32.mxu0 0.0
    %2339 = vmatmul.mubr.f32.gmra.mxu0 %v2247
    %v2340 = vpop.f32.mrf.mxu0
    %v2341 = vadd.f32 0.0, %v2340
    %v2342 = vpop.f32.mrf.mxu0
    %2343 = vdwg.mxu0
    %v2345 = vsel %vm65, %v2316, 0
    %v2348 = vsel %vm65, %v2321, 0
    %2350 = vmatprep.subr.mxu0 0.0
    %2351 = vmatpush1.msra.mxu0 0.0
    %2352 = vmatprep.subr.mxu0 0.0
    %2353 = vmatpush1.msra.mxu0 0.0
    %2354 = vmatprep.subr.mxu0 0.0
    %2355 = vmatpush1.msra.mxu0 0.0
    %2356 = vmatprep.subr.mxu0 0.0
    %2357 = vmatpush1.msra.mxu0 0.0
    %2358 = vmatprep.subr.mxu0 0.0
    %2359 = vmatpush1.msra.mxu0 0.0
    %2360 = vmatprep.subr.mxu0 0.0
    %2361 = vmatpush1.msra.mxu0 0.0
    %2362 = vmatprep.subr.mxu0 0.0
    %2363 = vmatpush1.msra.mxu0 0.0
    %2364 = vmatprep.subr.mxu0 0.0
    %2365 = vmatpush1.msra.mxu0 0.0
    %2366 = vmatprep.subr.mxu0 0.0
    %2367 = vmatpush1.msra.mxu0 0.0
    %2368 = vmatprep.subr.mxu0 0.0
    %2369 = vmatpush1.msra.mxu0 0.0
    %2370 = vmatprep.subr.mxu0 0.0
    %2371 = vmatpush1.msra.mxu0 0.0
    %2372 = vmatprep.subr.mxu0 0.0
    %2373 = vmatpush1.msra.mxu0 0.0
    %2374 = vmatprep.subr.mxu0 0.0
    %2375 = vmatpush1.msra.mxu0 %v868
    %2376 = vmatprep.subr.mxu0 0.0
    %2377 = vmatpush1.msra.mxu0 %v867
    %2378 = vmatprep.subr.mxu0 0.0
    %2379 = vmatpush1.msra.mxu0 %v866
    %2380 = vmatprep.subr.mxu0 0.0
    %2381 = vmatpush1.msra.mxu0 %v865
    %2382 = vmatprep.subr.mxu0 0.0
    %2383 = vmatpush2.msra.mxu0 0.0
    %2384 = vmatprep.subr.mxu0 0.0
    %2385 = vmatpush2.msra.mxu0 0.0
    %2386 = vmatprep.subr.mxu0 0.0
    %2387 = vmatpush2.msra.mxu0 0.0
    %2388 = vmatprep.subr.mxu0 0.0
    %2389 = vmatpush2.msra.mxu0 0.0
    %2390 = vmatprep.subr.mxu0 0.0
    %2391 = vmatpush2.msra.mxu0 0.0
    %2392 = vmatprep.subr.mxu0 0.0
    %2393 = vmatpush2.msra.mxu0 0.0
    %2394 = vmatprep.subr.mxu0 0.0
    %2395 = vmatpush2.msra.mxu0 0.0
    %2396 = vmatprep.subr.mxu0 0.0
    %2397 = vmatpush2.msra.mxu0 0.0
    %2398 = vmatprep.subr.mxu0 0.0
    %2399 = vmatpush2.msra.mxu0 0.0
    %2400 = vmatprep.subr.mxu0 0.0
    %2401 = vmatpush2.msra.mxu0 0.0
    %2402 = vmatprep.subr.mxu0 0.0
    %2403 = vmatpush2.msra.mxu0 0.0
    %2404 = vmatprep.subr.mxu0 0.0
    %2405 = vmatpush2.msra.mxu0 0.0
    %2406 = vmatprep.subr.mxu0 0.0
    %2407 = vmatpush2.msra.mxu0 0.0
    %2408 = vmatprep.subr.mxu0 0.0
    %2409 = vmatpush2.msra.mxu0 0.0
    %2410 = vmatprep.subr.mxu0 0.0
    %2411 = vmatpush2.msra.mxu0 0.0
    %2412 = vmatprep.subr.mxu0 0.0
    %2413 = vmatpush2.msra.mxu0 0.0
    %2414 = vmatprep.mubr.f32.mxu0 0.0
    %2415 = vmatmul.mubr.f32.gmra.mxu0 %v2345
    %v2416 = vpop.f32.mrf.mxu0
    %v2417 = vadd.f32 0.0, %v2416
    %v2418 = vpop.f32.mrf.mxu0
    %2419 = vmatprep.mubr.f32.mxu0 0.0
    %2420 = vmatmul.mubr.f32.gmra.mxu0 %v2348
    %v2421 = vpop.f32.mrf.mxu0
    %v2422 = vadd.f32 0.0, %v2421
    %v2423 = vpop.f32.mrf.mxu0
    %2424 = vdwg.mxu0
    %v2425 = vadd.f32 %v2326, %v2417
    %v2426 = vadd.f32 %v2331, %v2422
    %v2428 = vsel %vm65, %v2336, 0
    %v2431 = vsel %vm65, %v2341, 0
    %2433 = vmatprep.subr.mxu0 0.0
    %2434 = vmatpush1.msra.mxu0 0.0
    %2435 = vmatprep.subr.mxu0 0.0
    %2436 = vmatpush1.msra.mxu0 0.0
    %2437 = vmatprep.subr.mxu0 0.0
    %2438 = vmatpush1.msra.mxu0 0.0
    %2439 = vmatprep.subr.mxu0 0.0
    %2440 = vmatpush1.msra.mxu0 0.0
    %2441 = vmatprep.subr.mxu0 0.0
    %2442 = vmatpush1.msra.mxu0 0.0
    %2443 = vmatprep.subr.mxu0 0.0
    %2444 = vmatpush1.msra.mxu0 0.0
    %2445 = vmatprep.subr.mxu0 0.0
    %2446 = vmatpush1.msra.mxu0 0.0
    %2447 = vmatprep.subr.mxu0 0.0
    %2448 = vmatpush1.msra.mxu0 0.0
    %2449 = vmatprep.subr.mxu0 0.0
    %2450 = vmatpush1.msra.mxu0 0.0
    %2451 = vmatprep.subr.mxu0 0.0
    %2452 = vmatpush1.msra.mxu0 0.0
    %2453 = vmatprep.subr.mxu0 0.0
    %2454 = vmatpush1.msra.mxu0 0.0
    %2455 = vmatprep.subr.mxu0 0.0
    %2456 = vmatpush1.msra.mxu0 0.0
    %2457 = vmatprep.subr.mxu0 0.0
    %2458 = vmatpush1.msra.mxu0 %v955
    %2459 = vmatprep.subr.mxu0 0.0
    %2460 = vmatpush1.msra.mxu0 %v954
    %2461 = vmatprep.subr.mxu0 0.0
    %2462 = vmatpush1.msra.mxu0 %v953
    %2463 = vmatprep.subr.mxu0 0.0
    %2464 = vmatpush1.msra.mxu0 %v952
    %2465 = vmatprep.subr.mxu0 0.0
    %2466 = vmatpush2.msra.mxu0 0.0
    %2467 = vmatprep.subr.mxu0 0.0
    %2468 = vmatpush2.msra.mxu0 0.0
    %2469 = vmatprep.subr.mxu0 0.0
    %2470 = vmatpush2.msra.mxu0 0.0
    %2471 = vmatprep.subr.mxu0 0.0
    %2472 = vmatpush2.msra.mxu0 0.0
    %2473 = vmatprep.subr.mxu0 0.0
    %2474 = vmatpush2.msra.mxu0 0.0
    %2475 = vmatprep.subr.mxu0 0.0
    %2476 = vmatpush2.msra.mxu0 0.0
    %2477 = vmatprep.subr.mxu0 0.0
    %2478 = vmatpush2.msra.mxu0 0.0
    %2479 = vmatprep.subr.mxu0 0.0
    %2480 = vmatpush2.msra.mxu0 0.0
    %2481 = vmatprep.subr.mxu0 0.0
    %2482 = vmatpush2.msra.mxu0 0.0
    %2483 = vmatprep.subr.mxu0 0.0
    %2484 = vmatpush2.msra.mxu0 0.0
    %2485 = vmatprep.subr.mxu0 0.0
    %2486 = vmatpush2.msra.mxu0 0.0
    %2487 = vmatprep.subr.mxu0 0.0
    %2488 = vmatpush2.msra.mxu0 0.0
    %2489 = vmatprep.subr.mxu0 0.0
    %2490 = vmatpush2.msra.mxu0 0.0
    %2491 = vmatprep.subr.mxu0 0.0
    %2492 = vmatpush2.msra.mxu0 0.0
    %2493 = vmatprep.subr.mxu0 0.0
    %2494 = vmatpush2.msra.mxu0 0.0
    %2495 = vmatprep.subr.mxu0 0.0
    %2496 = vmatpush2.msra.mxu0 0.0
    %2497 = vmatprep.mubr.f32.mxu0 0.0
    %2498 = vmatmul.mubr.f32.gmra.mxu0 %v2428
    %v2499 = vpop.f32.mrf.mxu0
    %v2500 = vadd.f32 0.0, %v2499
    %v2501 = vpop.f32.mrf.mxu0
    %2502 = vmatprep.mubr.f32.mxu0 0.0
    %2503 = vmatmul.mubr.f32.gmra.mxu0 %v2431
    %v2504 = vpop.f32.mrf.mxu0
    %v2505 = vadd.f32 0.0, %v2504
    %v2506 = vpop.f32.mrf.mxu0
    %2507 = vdwg.mxu0
    %v2508 = vadd.f32 %v2425, %v2500
    %v2509 = vadd.f32 %v2426, %v2505
    %v2510 = vld [vmem:[#allocation7 + $0x180] sm:$0xff]
    %v2511 = vld [vmem:[#allocation7 + $0x188] sm:$0xff]
    %2513 = vset.pattern.permute.xlu0 64
    %2514 = vperm.xlu0 %2513, %v2510
    %v2515 = vpop.permute.xlu0 %2514
    %2518 = vset.pattern.permute.xlu0 64
    %2519 = vperm.xlu0 %2518, %v2511
    %v2520 = vpop.permute.xlu0 %2519
    %v2522 = vadd.f32 %v2508, %v2515
    %v2523 = vadd.f32 %v2509, %v2520
    %v2524 = vmax.f32 %v2522, 0.0
    %v2525 = vmax.f32 %v2523, 0.0
    %v2526 = vadd.f32 %v2524, %v1922
    %v2527 = vadd.f32 %v2525, %v1923
    %v2528 = vld [vmem:[#allocation7 + $0x1b0] sm:$0xff]
    %v2529 = vld [vmem:[#allocation7 + $0x1b8] sm:$0xff]
    %v2530 = vld [vmem:[#allocation7 + $0x1c0] sm:$0xff]
    %v2531 = vld [vmem:[#allocation7 + $0x1c8] sm:$0xff]
    %v2532 = vld [vmem:[#allocation7 + $0x1d0] sm:$0xff]
    %v2533 = vld [vmem:[#allocation7 + $0x1d8] sm:$0xff]
    %v2534 = vld [vmem:[#allocation7 + $0x1e0] sm:$0xff]
    %v2535 = vld [vmem:[#allocation7 + $0x1e8] sm:$0xff]
    %v2536 = vld [vmem:[#allocation7 + $0x1f0] sm:$0xff]
    %v2537 = vld [vmem:[#allocation7 + $0x1f8] sm:$0xff]
    %v2538 = vld [vmem:[#allocation7 + $0x200] sm:$0xff]
    %v2539 = vld [vmem:[#allocation7 + $0x208] sm:$0xff]
    %v2541 = vsel %vm513, %v2528, 0
    %v2544 = vsel %vm513, %v2529, 0
    %v2547 = vsel %vm513, %v2530, 0
    %v2550 = vsel %vm513, %v2531, 0
    %v2553 = vsel %vm513, %v2532, 0
    %v2556 = vsel %vm513, %v2533, 0
    %v2559 = vsel %vm513, %v2534, 0
    %v2562 = vsel %vm513, %v2535, 0
    %v2565 = vsel %vm513, %v2536, 0
    %v2568 = vsel %vm513, %v2537, 0
    %v2571 = vsel %vm513, %v2538, 0
    %v2574 = vsel %vm513, %v2539, 0
    %2576 = vmatprep.subr.mxu0 0.0
    %2577 = vmatpush1.msra.mxu0 0.0
    %2578 = vmatprep.subr.mxu0 0.0
    %2579 = vmatpush1.msra.mxu0 0.0
    %2580 = vmatprep.subr.mxu0 0.0
    %2581 = vmatpush1.msra.mxu0 0.0
    %2582 = vmatprep.subr.mxu0 0.0
    %2583 = vmatpush1.msra.mxu0 0.0
    %2584 = vmatprep.subr.mxu0 0.0
    %2585 = vmatpush1.msra.mxu0 0.0
    %2586 = vmatprep.subr.mxu0 0.0
    %2587 = vmatpush1.msra.mxu0 0.0
    %2588 = vmatprep.subr.mxu0 0.0
    %2589 = vmatpush1.msra.mxu0 0.0
    %2590 = vmatprep.subr.mxu0 0.0
    %2591 = vmatpush1.msra.mxu0 0.0
    %2592 = vmatprep.subr.mxu0 0.0
    %2593 = vmatpush1.msra.mxu0 0.0
    %2594 = vmatprep.subr.mxu0 0.0
    %2595 = vmatpush1.msra.mxu0 0.0
    %2596 = vmatprep.subr.mxu0 0.0
    %2597 = vmatpush1.msra.mxu0 0.0
    %2598 = vmatprep.subr.mxu0 0.0
    %2599 = vmatpush1.msra.mxu0 0.0
    %2600 = vmatprep.subr.mxu0 0.0
    %2601 = vmatpush1.msra.mxu0 0.0
    %2602 = vmatprep.subr.mxu0 0.0
    %2603 = vmatpush1.msra.mxu0 0.0
    %2604 = vmatprep.subr.mxu0 0.0
    %2605 = vmatpush1.msra.mxu0 %v2527
    %2606 = vmatprep.subr.mxu0 0.0
    %2607 = vmatpush1.msra.mxu0 %v2526
    %2608 = vmatprep.subr.mxu0 0.0
    %2609 = vmatpush2.msra.mxu0 0.0
    %2610 = vmatprep.subr.mxu0 0.0
    %2611 = vmatpush2.msra.mxu0 0.0
    %2612 = vmatprep.subr.mxu0 0.0
    %2613 = vmatpush2.msra.mxu0 0.0
    %2614 = vmatprep.subr.mxu0 0.0
    %2615 = vmatpush2.msra.mxu0 0.0
    %2616 = vmatprep.subr.mxu0 0.0
    %2617 = vmatpush2.msra.mxu0 0.0
    %2618 = vmatprep.subr.mxu0 0.0
    %2619 = vmatpush2.msra.mxu0 0.0
    %2620 = vmatprep.subr.mxu0 0.0
    %2621 = vmatpush2.msra.mxu0 0.0
    %2622 = vmatprep.subr.mxu0 0.0
    %2623 = vmatpush2.msra.mxu0 0.0
    %2624 = vmatprep.subr.mxu0 0.0
    %2625 = vmatpush2.msra.mxu0 0.0
    %2626 = vmatprep.subr.mxu0 0.0
    %2627 = vmatpush2.msra.mxu0 0.0
    %2628 = vmatprep.subr.mxu0 0.0
    %2629 = vmatpush2.msra.mxu0 0.0
    %2630 = vmatprep.subr.mxu0 0.0
    %2631 = vmatpush2.msra.mxu0 0.0
    %2632 = vmatprep.subr.mxu0 0.0
    %2633 = vmatpush2.msra.mxu0 0.0
    %2634 = vmatprep.subr.mxu0 0.0
    %2635 = vmatpush2.msra.mxu0 0.0
    %2636 = vmatprep.subr.mxu0 0.0
    %2637 = vmatpush2.msra.mxu0 0.0
    %2638 = vmatprep.subr.mxu0 0.0
    %2639 = vmatpush2.msra.mxu0 0.0
    %2640 = vmatprep.mubr.f32.mxu0 0.0
    %2641 = vmatmul.mubr.f32.gmra.mxu0 %v2541
    %v2642 = vpop.f32.mrf.mxu0
    %v2643 = vadd.f32 0.0, %v2642
    %v2644 = vpop.f32.mrf.mxu0
    %2645 = vmatprep.mubr.f32.mxu0 0.0
    %2646 = vmatmul.mubr.f32.gmra.mxu0 %v2544
    %v2647 = vpop.f32.mrf.mxu0
    %v2648 = vadd.f32 0.0, %v2647
    %v2649 = vpop.f32.mrf.mxu0
    %2650 = vmatprep.mubr.f32.mxu0 0.0
    %2651 = vmatmul.mubr.f32.gmra.mxu0 %v2547
    %v2652 = vpop.f32.mrf.mxu0
    %v2653 = vadd.f32 0.0, %v2652
    %v2654 = vpop.f32.mrf.mxu0
    %2655 = vmatprep.mubr.f32.mxu0 0.0
    %2656 = vmatmul.mubr.f32.gmra.mxu0 %v2550
    %v2657 = vpop.f32.mrf.mxu0
    %v2658 = vadd.f32 0.0, %v2657
    %v2659 = vpop.f32.mrf.mxu0
    %2660 = vmatprep.mubr.f32.mxu0 0.0
    %2661 = vmatmul.mubr.f32.gmra.mxu0 %v2553
    %v2662 = vpop.f32.mrf.mxu0
    %v2663 = vadd.f32 0.0, %v2662
    %v2664 = vpop.f32.mrf.mxu0
    %2665 = vmatprep.mubr.f32.mxu0 0.0
    %2666 = vmatmul.mubr.f32.gmra.mxu0 %v2556
    %v2667 = vpop.f32.mrf.mxu0
    %v2668 = vadd.f32 0.0, %v2667
    %v2669 = vpop.f32.mrf.mxu0
    %2670 = vmatprep.mubr.f32.mxu0 0.0
    %2671 = vmatmul.mubr.f32.gmra.mxu0 %v2559
    %v2672 = vpop.f32.mrf.mxu0
    %v2673 = vadd.f32 0.0, %v2672
    %v2674 = vpop.f32.mrf.mxu0
    %2675 = vmatprep.mubr.f32.mxu0 0.0
    %2676 = vmatmul.mubr.f32.gmra.mxu0 %v2562
    %v2677 = vpop.f32.mrf.mxu0
    %v2678 = vadd.f32 0.0, %v2677
    %v2679 = vpop.f32.mrf.mxu0
    %2680 = vmatprep.mubr.f32.mxu0 0.0
    %2681 = vmatmul.mubr.f32.gmra.mxu0 %v2565
    %v2682 = vpop.f32.mrf.mxu0
    %v2683 = vadd.f32 0.0, %v2682
    %v2684 = vpop.f32.mrf.mxu0
    %2685 = vmatprep.mubr.f32.mxu0 0.0
    %2686 = vmatmul.mubr.f32.gmra.mxu0 %v2568
    %v2687 = vpop.f32.mrf.mxu0
    %v2688 = vadd.f32 0.0, %v2687
    %v2689 = vpop.f32.mrf.mxu0
    %2690 = vmatprep.mubr.f32.mxu0 0.0
    %2691 = vmatmul.mubr.f32.gmra.mxu0 %v2571
    %v2692 = vpop.f32.mrf.mxu0
    %v2693 = vadd.f32 0.0, %v2692
    %v2694 = vpop.f32.mrf.mxu0
    %2695 = vmatprep.mubr.f32.mxu0 0.0
    %2696 = vmatmul.mubr.f32.gmra.mxu0 %v2574
    %v2697 = vpop.f32.mrf.mxu0
    %v2698 = vadd.f32 0.0, %v2697
    %v2699 = vpop.f32.mrf.mxu0
    %2700 = vdwg.mxu0
    %v2702 = vsel %vm65, %v2643, 0
    %v2705 = vsel %vm65, %v2648, 0
    %v2708 = vsel %vm65, %v2653, 0
    %v2711 = vsel %vm65, %v2658, 0
    %2713 = vmatprep.subr.mxu0 0.0
    %2714 = vmatpush1.msra.mxu0 0.0
    %2715 = vmatprep.subr.mxu0 0.0
    %2716 = vmatpush1.msra.mxu0 0.0
    %2717 = vmatprep.subr.mxu0 0.0
    %2718 = vmatpush1.msra.mxu0 0.0
    %2719 = vmatprep.subr.mxu0 0.0
    %2720 = vmatpush1.msra.mxu0 0.0
    %2721 = vmatprep.subr.mxu0 0.0
    %2722 = vmatpush1.msra.mxu0 0.0
    %2723 = vmatprep.subr.mxu0 0.0
    %2724 = vmatpush1.msra.mxu0 0.0
    %2725 = vmatprep.subr.mxu0 0.0
    %2726 = vmatpush1.msra.mxu0 0.0
    %2727 = vmatprep.subr.mxu0 0.0
    %2728 = vmatpush1.msra.mxu0 0.0
    %2729 = vmatprep.subr.mxu0 0.0
    %2730 = vmatpush1.msra.mxu0 0.0
    %2731 = vmatprep.subr.mxu0 0.0
    %2732 = vmatpush1.msra.mxu0 0.0
    %2733 = vmatprep.subr.mxu0 0.0
    %2734 = vmatpush1.msra.mxu0 0.0
    %2735 = vmatprep.subr.mxu0 0.0
    %2736 = vmatpush1.msra.mxu0 0.0
    %2737 = vmatprep.subr.mxu0 0.0
    %2738 = vmatpush1.msra.mxu0 %v868
    %2739 = vmatprep.subr.mxu0 0.0
    %2740 = vmatpush1.msra.mxu0 %v867
    %2741 = vmatprep.subr.mxu0 0.0
    %2742 = vmatpush1.msra.mxu0 %v866
    %2743 = vmatprep.subr.mxu0 0.0
    %2744 = vmatpush1.msra.mxu0 %v865
    %2745 = vmatprep.subr.mxu0 0.0
    %2746 = vmatpush2.msra.mxu0 0.0
    %2747 = vmatprep.subr.mxu0 0.0
    %2748 = vmatpush2.msra.mxu0 0.0
    %2749 = vmatprep.subr.mxu0 0.0
    %2750 = vmatpush2.msra.mxu0 0.0
    %2751 = vmatprep.subr.mxu0 0.0
    %2752 = vmatpush2.msra.mxu0 0.0
    %2753 = vmatprep.subr.mxu0 0.0
    %2754 = vmatpush2.msra.mxu0 0.0
    %2755 = vmatprep.subr.mxu0 0.0
    %2756 = vmatpush2.msra.mxu0 0.0
    %2757 = vmatprep.subr.mxu0 0.0
    %2758 = vmatpush2.msra.mxu0 0.0
    %2759 = vmatprep.subr.mxu0 0.0
    %2760 = vmatpush2.msra.mxu0 0.0
    %2761 = vmatprep.subr.mxu0 0.0
    %2762 = vmatpush2.msra.mxu0 0.0
    %2763 = vmatprep.subr.mxu0 0.0
    %2764 = vmatpush2.msra.mxu0 0.0
    %2765 = vmatprep.subr.mxu0 0.0
    %2766 = vmatpush2.msra.mxu0 0.0
    %2767 = vmatprep.subr.mxu0 0.0
    %2768 = vmatpush2.msra.mxu0 0.0
    %2769 = vmatprep.subr.mxu0 0.0
    %2770 = vmatpush2.msra.mxu0 0.0
    %2771 = vmatprep.subr.mxu0 0.0
    %2772 = vmatpush2.msra.mxu0 0.0
    %2773 = vmatprep.subr.mxu0 0.0
    %2774 = vmatpush2.msra.mxu0 0.0
    %2775 = vmatprep.subr.mxu0 0.0
    %2776 = vmatpush2.msra.mxu0 0.0
    %2777 = vmatprep.mubr.f32.mxu0 0.0
    %2778 = vmatmul.mubr.f32.gmra.mxu0 %v2702
    %v2779 = vpop.f32.mrf.mxu0
    %v2780 = vadd.f32 0.0, %v2779
    %v2781 = vpop.f32.mrf.mxu0
    %2782 = vmatprep.mubr.f32.mxu0 0.0
    %2783 = vmatmul.mubr.f32.gmra.mxu0 %v2705
    %v2784 = vpop.f32.mrf.mxu0
    %v2785 = vadd.f32 0.0, %v2784
    %v2786 = vpop.f32.mrf.mxu0
    %2787 = vmatprep.mubr.f32.mxu0 0.0
    %2788 = vmatmul.mubr.f32.gmra.mxu0 %v2708
    %v2789 = vpop.f32.mrf.mxu0
    %v2790 = vadd.f32 0.0, %v2789
    %v2791 = vpop.f32.mrf.mxu0
    %2792 = vmatprep.mubr.f32.mxu0 0.0
    %2793 = vmatmul.mubr.f32.gmra.mxu0 %v2711
    %v2794 = vpop.f32.mrf.mxu0
    %v2795 = vadd.f32 0.0, %v2794
    %v2796 = vpop.f32.mrf.mxu0
    %2797 = vdwg.mxu0
    %v2798 = vadd.f32 %v2663, %v2780
    %v2799 = vadd.f32 %v2668, %v2785
    %v2800 = vadd.f32 %v2673, %v2790
    %v2801 = vadd.f32 %v2678, %v2795
    %v2803 = vsel %vm65, %v2683, 0
    %v2806 = vsel %vm65, %v2688, 0
    %v2809 = vsel %vm65, %v2693, 0
    %v2812 = vsel %vm65, %v2698, 0
    %2814 = vmatprep.subr.mxu0 0.0
    %2815 = vmatpush1.msra.mxu0 0.0
    %2816 = vmatprep.subr.mxu0 0.0
    %2817 = vmatpush1.msra.mxu0 0.0
    %2818 = vmatprep.subr.mxu0 0.0
    %2819 = vmatpush1.msra.mxu0 0.0
    %2820 = vmatprep.subr.mxu0 0.0
    %2821 = vmatpush1.msra.mxu0 0.0
    %2822 = vmatprep.subr.mxu0 0.0
    %2823 = vmatpush1.msra.mxu0 0.0
    %2824 = vmatprep.subr.mxu0 0.0
    %2825 = vmatpush1.msra.mxu0 0.0
    %2826 = vmatprep.subr.mxu0 0.0
    %2827 = vmatpush1.msra.mxu0 0.0
    %2828 = vmatprep.subr.mxu0 0.0
    %2829 = vmatpush1.msra.mxu0 0.0
    %2830 = vmatprep.subr.mxu0 0.0
    %2831 = vmatpush1.msra.mxu0 0.0
    %2832 = vmatprep.subr.mxu0 0.0
    %2833 = vmatpush1.msra.mxu0 0.0
    %2834 = vmatprep.subr.mxu0 0.0
    %2835 = vmatpush1.msra.mxu0 0.0
    %2836 = vmatprep.subr.mxu0 0.0
    %2837 = vmatpush1.msra.mxu0 0.0
    %2838 = vmatprep.subr.mxu0 0.0
    %2839 = vmatpush1.msra.mxu0 %v955
    %2840 = vmatprep.subr.mxu0 0.0
    %2841 = vmatpush1.msra.mxu0 %v954
    %2842 = vmatprep.subr.mxu0 0.0
    %2843 = vmatpush1.msra.mxu0 %v953
    %2844 = vmatprep.subr.mxu0 0.0
    %2845 = vmatpush1.msra.mxu0 %v952
    %2846 = vmatprep.subr.mxu0 0.0
    %2847 = vmatpush2.msra.mxu0 0.0
    %2848 = vmatprep.subr.mxu0 0.0
    %2849 = vmatpush2.msra.mxu0 0.0
    %2850 = vmatprep.subr.mxu0 0.0
    %2851 = vmatpush2.msra.mxu0 0.0
    %2852 = vmatprep.subr.mxu0 0.0
    %2853 = vmatpush2.msra.mxu0 0.0
    %2854 = vmatprep.subr.mxu0 0.0
    %2855 = vmatpush2.msra.mxu0 0.0
    %2856 = vmatprep.subr.mxu0 0.0
    %2857 = vmatpush2.msra.mxu0 0.0
    %2858 = vmatprep.subr.mxu0 0.0
    %2859 = vmatpush2.msra.mxu0 0.0
    %2860 = vmatprep.subr.mxu0 0.0
    %2861 = vmatpush2.msra.mxu0 0.0
    %2862 = vmatprep.subr.mxu0 0.0
    %2863 = vmatpush2.msra.mxu0 0.0
    %2864 = vmatprep.subr.mxu0 0.0
    %2865 = vmatpush2.msra.mxu0 0.0
    %2866 = vmatprep.subr.mxu0 0.0
    %2867 = vmatpush2.msra.mxu0 0.0
    %2868 = vmatprep.subr.mxu0 0.0
    %2869 = vmatpush2.msra.mxu0 0.0
    %2870 = vmatprep.subr.mxu0 0.0
    %2871 = vmatpush2.msra.mxu0 0.0
    %2872 = vmatprep.subr.mxu0 0.0
    %2873 = vmatpush2.msra.mxu0 0.0
    %2874 = vmatprep.subr.mxu0 0.0
    %2875 = vmatpush2.msra.mxu0 0.0
    %2876 = vmatprep.subr.mxu0 0.0
    %2877 = vmatpush2.msra.mxu0 0.0
    %2878 = vmatprep.mubr.f32.mxu0 0.0
    %2879 = vmatmul.mubr.f32.gmra.mxu0 %v2803
    %v2880 = vpop.f32.mrf.mxu0
    %v2881 = vadd.f32 0.0, %v2880
    %v2882 = vpop.f32.mrf.mxu0
    %2883 = vmatprep.mubr.f32.mxu0 0.0
    %2884 = vmatmul.mubr.f32.gmra.mxu0 %v2806
    %v2885 = vpop.f32.mrf.mxu0
    %v2886 = vadd.f32 0.0, %v2885
    %v2887 = vpop.f32.mrf.mxu0
    %2888 = vmatprep.mubr.f32.mxu0 0.0
    %2889 = vmatmul.mubr.f32.gmra.mxu0 %v2809
    %v2890 = vpop.f32.mrf.mxu0
    %v2891 = vadd.f32 0.0, %v2890
    %v2892 = vpop.f32.mrf.mxu0
    %2893 = vmatprep.mubr.f32.mxu0 0.0
    %2894 = vmatmul.mubr.f32.gmra.mxu0 %v2812
    %v2895 = vpop.f32.mrf.mxu0
    %v2896 = vadd.f32 0.0, %v2895
    %v2897 = vpop.f32.mrf.mxu0
    %2898 = vdwg.mxu0
    %v2899 = vadd.f32 %v2798, %v2881
    %v2900 = vadd.f32 %v2799, %v2886
    %v2901 = vadd.f32 %v2800, %v2891
    %v2902 = vadd.f32 %v2801, %v2896
    %v2903 = vld [vmem:[#allocation7 + $0x1b0] sm:$0xff]
    %v2904 = vld [vmem:[#allocation7 + $0x1b8] sm:$0xff]
    %v2905 = vld [vmem:[#allocation7 + $0x1c0] sm:$0xff]
    %v2906 = vld [vmem:[#allocation7 + $0x1c8] sm:$0xff]
    %2908 = vset.pattern.permute.xlu0 64
    %2909 = vperm.xlu0 %2908, %v2903
    %v2910 = vpop.permute.xlu0 %2909
    %2913 = vset.pattern.permute.xlu0 64
    %2914 = vperm.xlu0 %2913, %v2904
    %v2915 = vpop.permute.xlu0 %2914
    %2918 = vset.pattern.permute.xlu0 64
    %2919 = vperm.xlu0 %2918, %v2905
    %v2920 = vpop.permute.xlu0 %2919
    %2923 = vset.pattern.permute.xlu0 64
    %2924 = vperm.xlu0 %2923, %v2906
    %v2925 = vpop.permute.xlu0 %2924
    %v2927 = vadd.f32 %v2899, %v2910
    %v2928 = vadd.f32 %v2900, %v2915
    %v2929 = vadd.f32 %v2901, %v2920
    %v2930 = vadd.f32 %v2902, %v2925
    %v2931 = vmax.f32 %v2927, 0.0
    %v2932 = vmax.f32 %v2928, 0.0
    %v2933 = vmax.f32 %v2929, 0.0
    %v2934 = vmax.f32 %v2930, 0.0
    %v2935 = vld [vmem:[#allocation7 + $0x270] sm:$0xff]
    %v2936 = vld [vmem:[#allocation7 + $0x278] sm:$0xff]
    %v2937 = vld [vmem:[#allocation7 + $0x280] sm:$0xff]
    %v2938 = vld [vmem:[#allocation7 + $0x288] sm:$0xff]
    %2940 = vset.pattern.permute.xlu0 64
    %2941 = vperm.xlu0 %2940, %v2935
    %v2942 = vpop.permute.xlu0 %2941
    %2945 = vset.pattern.permute.xlu0 64
    %2946 = vperm.xlu0 %2945, %v2936
    %v2947 = vpop.permute.xlu0 %2946
    %2950 = vset.pattern.permute.xlu0 64
    %2951 = vperm.xlu0 %2950, %v2937
    %v2952 = vpop.permute.xlu0 %2951
    %2955 = vset.pattern.permute.xlu0 64
    %2956 = vperm.xlu0 %2955, %v2938
    %v2957 = vpop.permute.xlu0 %2956
    %v2959 = vsel %vm513, %v2935, 0
    %v2961 = vsel %vm513, %v2936, 0
    %v2963 = vsel %vm513, %v2937, 0
    %v2965 = vsel %vm513, %v2938, 0
    %2967 = vmatprep.subr.mxu0 0.0
    %2968 = vmatpush1.msra.mxu0 0.0
    %2969 = vmatprep.subr.mxu0 0.0
    %2970 = vmatpush1.msra.mxu0 0.0
    %2971 = vmatprep.subr.mxu0 0.0
    %2972 = vmatpush1.msra.mxu0 0.0
    %2973 = vmatprep.subr.mxu0 0.0
    %2974 = vmatpush1.msra.mxu0 0.0
    %2975 = vmatprep.subr.mxu0 0.0
    %2976 = vmatpush1.msra.mxu0 0.0
    %2977 = vmatprep.subr.mxu0 0.0
    %2978 = vmatpush1.msra.mxu0 0.0
    %2979 = vmatprep.subr.mxu0 0.0
    %2980 = vmatpush1.msra.mxu0 0.0
    %2981 = vmatprep.subr.mxu0 0.0
    %2982 = vmatpush1.msra.mxu0 0.0
    %2983 = vmatprep.subr.mxu0 0.0
    %2984 = vmatpush1.msra.mxu0 0.0
    %2985 = vmatprep.subr.mxu0 0.0
    %2986 = vmatpush1.msra.mxu0 0.0
    %2987 = vmatprep.subr.mxu0 0.0
    %2988 = vmatpush1.msra.mxu0 0.0
    %2989 = vmatprep.subr.mxu0 0.0
    %2990 = vmatpush1.msra.mxu0 0.0
    %2991 = vmatprep.subr.mxu0 0.0
    %2992 = vmatpush1.msra.mxu0 0.0
    %2993 = vmatprep.subr.mxu0 0.0
    %2994 = vmatpush1.msra.mxu0 0.0
    %2995 = vmatprep.subr.mxu0 0.0
    %2996 = vmatpush1.msra.mxu0 %v2527
    %2997 = vmatprep.subr.mxu0 0.0
    %2998 = vmatpush1.msra.mxu0 %v2526
    %2999 = vmatprep.subr.mxu0 0.0
    %3000 = vmatpush2.msra.mxu0 0.0
    %3001 = vmatprep.subr.mxu0 0.0
    %3002 = vmatpush2.msra.mxu0 0.0
    %3003 = vmatprep.subr.mxu0 0.0
    %3004 = vmatpush2.msra.mxu0 0.0
    %3005 = vmatprep.subr.mxu0 0.0
    %3006 = vmatpush2.msra.mxu0 0.0
    %3007 = vmatprep.subr.mxu0 0.0
    %3008 = vmatpush2.msra.mxu0 0.0
    %3009 = vmatprep.subr.mxu0 0.0
    %3010 = vmatpush2.msra.mxu0 0.0
    %3011 = vmatprep.subr.mxu0 0.0
    %3012 = vmatpush2.msra.mxu0 0.0
    %3013 = vmatprep.subr.mxu0 0.0
    %3014 = vmatpush2.msra.mxu0 0.0
    %3015 = vmatprep.subr.mxu0 0.0
    %3016 = vmatpush2.msra.mxu0 0.0
    %3017 = vmatprep.subr.mxu0 0.0
    %3018 = vmatpush2.msra.mxu0 0.0
    %3019 = vmatprep.subr.mxu0 0.0
    %3020 = vmatpush2.msra.mxu0 0.0
    %3021 = vmatprep.subr.mxu0 0.0
    %3022 = vmatpush2.msra.mxu0 0.0
    %3023 = vmatprep.subr.mxu0 0.0
    %3024 = vmatpush2.msra.mxu0 0.0
    %3025 = vmatprep.subr.mxu0 0.0
    %3026 = vmatpush2.msra.mxu0 0.0
    %3027 = vmatprep.subr.mxu0 0.0
    %3028 = vmatpush2.msra.mxu0 0.0
    %3029 = vmatprep.subr.mxu0 0.0
    %3030 = vmatpush2.msra.mxu0 0.0
    %3031 = vmatprep.mubr.f32.mxu0 0.0
    %3032 = vmatmul.mubr.f32.gmra.mxu0 %v2959
    %v3033 = vpop.f32.mrf.mxu0
    %v3034 = vadd.f32 %v2942, %v3033
    %v3035 = vpop.f32.mrf.mxu0
    %3036 = vmatprep.mubr.f32.mxu0 0.0
    %3037 = vmatmul.mubr.f32.gmra.mxu0 %v2961
    %v3038 = vpop.f32.mrf.mxu0
    %v3039 = vadd.f32 %v2947, %v3038
    %v3040 = vpop.f32.mrf.mxu0
    %3041 = vmatprep.mubr.f32.mxu0 0.0
    %3042 = vmatmul.mubr.f32.gmra.mxu0 %v2963
    %v3043 = vpop.f32.mrf.mxu0
    %v3044 = vadd.f32 %v2952, %v3043
    %v3045 = vpop.f32.mrf.mxu0
    %3046 = vmatprep.mubr.f32.mxu0 0.0
    %3047 = vmatmul.mubr.f32.gmra.mxu0 %v2965
    %v3048 = vpop.f32.mrf.mxu0
    %v3049 = vadd.f32 %v2957, %v3048
    %v3050 = vpop.f32.mrf.mxu0
    %3051 = vdwg.mxu0
    %v3052 = vld [vmem:[#allocation7 + $0x210] sm:$0xff]
    %v3053 = vld [vmem:[#allocation7 + $0x218] sm:$0xff]
    %v3054 = vld [vmem:[#allocation7 + $0x220] sm:$0xff]
    %v3055 = vld [vmem:[#allocation7 + $0x228] sm:$0xff]
    %v3056 = vld [vmem:[#allocation7 + $0x230] sm:$0xff]
    %v3057 = vld [vmem:[#allocation7 + $0x238] sm:$0xff]
    %v3058 = vld [vmem:[#allocation7 + $0x240] sm:$0xff]
    %v3059 = vld [vmem:[#allocation7 + $0x248] sm:$0xff]
    %v3060 = vld [vmem:[#allocation7 + $0x250] sm:$0xff]
    %v3061 = vld [vmem:[#allocation7 + $0x258] sm:$0xff]
    %v3062 = vld [vmem:[#allocation7 + $0x260] sm:$0xff]
    %v3063 = vld [vmem:[#allocation7 + $0x268] sm:$0xff]
    %v3065 = vsel %vm65, %v3052, 0
    %v3068 = vsel %vm65, %v3053, 0
    %v3071 = vsel %vm65, %v3054, 0
    %v3074 = vsel %vm65, %v3055, 0
    %v3077 = vsel %vm65, %v3056, 0
    %v3080 = vsel %vm65, %v3057, 0
    %v3083 = vsel %vm65, %v3058, 0
    %v3086 = vsel %vm65, %v3059, 0
    %v3089 = vsel %vm65, %v3060, 0
    %v3092 = vsel %vm65, %v3061, 0
    %v3095 = vsel %vm65, %v3062, 0
    %v3098 = vsel %vm65, %v3063, 0
    %3100 = vmatprep.subr.mxu0 0.0
    %3101 = vmatpush1.msra.mxu0 0.0
    %3102 = vmatprep.subr.mxu0 0.0
    %3103 = vmatpush1.msra.mxu0 0.0
    %3104 = vmatprep.subr.mxu0 0.0
    %3105 = vmatpush1.msra.mxu0 0.0
    %3106 = vmatprep.subr.mxu0 0.0
    %3107 = vmatpush1.msra.mxu0 0.0
    %3108 = vmatprep.subr.mxu0 0.0
    %3109 = vmatpush1.msra.mxu0 0.0
    %3110 = vmatprep.subr.mxu0 0.0
    %3111 = vmatpush1.msra.mxu0 0.0
    %3112 = vmatprep.subr.mxu0 0.0
    %3113 = vmatpush1.msra.mxu0 0.0
    %3114 = vmatprep.subr.mxu0 0.0
    %3115 = vmatpush1.msra.mxu0 0.0
    %3116 = vmatprep.subr.mxu0 0.0
    %3117 = vmatpush1.msra.mxu0 0.0
    %3118 = vmatprep.subr.mxu0 0.0
    %3119 = vmatpush1.msra.mxu0 0.0
    %3120 = vmatprep.subr.mxu0 0.0
    %3121 = vmatpush1.msra.mxu0 0.0
    %3122 = vmatprep.subr.mxu0 0.0
    %3123 = vmatpush1.msra.mxu0 0.0
    %3124 = vmatprep.subr.mxu0 0.0
    %3125 = vmatpush1.msra.mxu0 %v2934
    %3126 = vmatprep.subr.mxu0 0.0
    %3127 = vmatpush1.msra.mxu0 %v2933
    %3128 = vmatprep.subr.mxu0 0.0
    %3129 = vmatpush1.msra.mxu0 %v2932
    %3130 = vmatprep.subr.mxu0 0.0
    %3131 = vmatpush1.msra.mxu0 %v2931
    %3132 = vmatprep.subr.mxu0 0.0
    %3133 = vmatpush2.msra.mxu0 0.0
    %3134 = vmatprep.subr.mxu0 0.0
    %3135 = vmatpush2.msra.mxu0 0.0
    %3136 = vmatprep.subr.mxu0 0.0
    %3137 = vmatpush2.msra.mxu0 0.0
    %3138 = vmatprep.subr.mxu0 0.0
    %3139 = vmatpush2.msra.mxu0 0.0
    %3140 = vmatprep.subr.mxu0 0.0
    %3141 = vmatpush2.msra.mxu0 0.0
    %3142 = vmatprep.subr.mxu0 0.0
    %3143 = vmatpush2.msra.mxu0 0.0
    %3144 = vmatprep.subr.mxu0 0.0
    %3145 = vmatpush2.msra.mxu0 0.0
    %3146 = vmatprep.subr.mxu0 0.0
    %3147 = vmatpush2.msra.mxu0 0.0
    %3148 = vmatprep.subr.mxu0 0.0
    %3149 = vmatpush2.msra.mxu0 0.0
    %3150 = vmatprep.subr.mxu0 0.0
    %3151 = vmatpush2.msra.mxu0 0.0
    %3152 = vmatprep.subr.mxu0 0.0
    %3153 = vmatpush2.msra.mxu0 0.0
    %3154 = vmatprep.subr.mxu0 0.0
    %3155 = vmatpush2.msra.mxu0 0.0
    %3156 = vmatprep.subr.mxu0 0.0
    %3157 = vmatpush2.msra.mxu0 0.0
    %3158 = vmatprep.subr.mxu0 0.0
    %3159 = vmatpush2.msra.mxu0 0.0
    %3160 = vmatprep.subr.mxu0 0.0
    %3161 = vmatpush2.msra.mxu0 0.0
    %3162 = vmatprep.subr.mxu0 0.0
    %3163 = vmatpush2.msra.mxu0 0.0
    %3164 = vmatprep.mubr.f32.mxu0 0.0
    %3165 = vmatmul.mubr.f32.gmra.mxu0 %v3065
    %v3166 = vpop.f32.mrf.mxu0
    %v3167 = vadd.f32 0.0, %v3166
    %v3168 = vpop.f32.mrf.mxu0
    %3169 = vmatprep.mubr.f32.mxu0 0.0
    %3170 = vmatmul.mubr.f32.gmra.mxu0 %v3068
    %v3171 = vpop.f32.mrf.mxu0
    %v3172 = vadd.f32 0.0, %v3171
    %v3173 = vpop.f32.mrf.mxu0
    %3174 = vmatprep.mubr.f32.mxu0 0.0
    %3175 = vmatmul.mubr.f32.gmra.mxu0 %v3071
    %v3176 = vpop.f32.mrf.mxu0
    %v3177 = vadd.f32 0.0, %v3176
    %v3178 = vpop.f32.mrf.mxu0
    %3179 = vmatprep.mubr.f32.mxu0 0.0
    %3180 = vmatmul.mubr.f32.gmra.mxu0 %v3074
    %v3181 = vpop.f32.mrf.mxu0
    %v3182 = vadd.f32 0.0, %v3181
    %v3183 = vpop.f32.mrf.mxu0
    %3184 = vmatprep.mubr.f32.mxu0 0.0
    %3185 = vmatmul.mubr.f32.gmra.mxu0 %v3077
    %v3186 = vpop.f32.mrf.mxu0
    %v3187 = vadd.f32 0.0, %v3186
    %v3188 = vpop.f32.mrf.mxu0
    %3189 = vmatprep.mubr.f32.mxu0 0.0
    %3190 = vmatmul.mubr.f32.gmra.mxu0 %v3080
    %v3191 = vpop.f32.mrf.mxu0
    %v3192 = vadd.f32 0.0, %v3191
    %v3193 = vpop.f32.mrf.mxu0
    %3194 = vmatprep.mubr.f32.mxu0 0.0
    %3195 = vmatmul.mubr.f32.gmra.mxu0 %v3083
    %v3196 = vpop.f32.mrf.mxu0
    %v3197 = vadd.f32 0.0, %v3196
    %v3198 = vpop.f32.mrf.mxu0
    %3199 = vmatprep.mubr.f32.mxu0 0.0
    %3200 = vmatmul.mubr.f32.gmra.mxu0 %v3086
    %v3201 = vpop.f32.mrf.mxu0
    %v3202 = vadd.f32 0.0, %v3201
    %v3203 = vpop.f32.mrf.mxu0
    %3204 = vmatprep.mubr.f32.mxu0 0.0
    %3205 = vmatmul.mubr.f32.gmra.mxu0 %v3089
    %v3206 = vpop.f32.mrf.mxu0
    %v3207 = vadd.f32 0.0, %v3206
    %v3208 = vpop.f32.mrf.mxu0
    %3209 = vmatprep.mubr.f32.mxu0 0.0
    %3210 = vmatmul.mubr.f32.gmra.mxu0 %v3092
    %v3211 = vpop.f32.mrf.mxu0
    %v3212 = vadd.f32 0.0, %v3211
    %v3213 = vpop.f32.mrf.mxu0
    %3214 = vmatprep.mubr.f32.mxu0 0.0
    %3215 = vmatmul.mubr.f32.gmra.mxu0 %v3095
    %v3216 = vpop.f32.mrf.mxu0
    %v3217 = vadd.f32 0.0, %v3216
    %v3218 = vpop.f32.mrf.mxu0
    %3219 = vmatprep.mubr.f32.mxu0 0.0
    %3220 = vmatmul.mubr.f32.gmra.mxu0 %v3098
    %v3221 = vpop.f32.mrf.mxu0
    %v3222 = vadd.f32 0.0, %v3221
    %v3223 = vpop.f32.mrf.mxu0
    %3224 = vdwg.mxu0
    %v3226 = vsel %vm65, %v3167, 0
    %v3229 = vsel %vm65, %v3172, 0
    %v3232 = vsel %vm65, %v3177, 0
    %v3235 = vsel %vm65, %v3182, 0
    %3237 = vmatprep.subr.mxu0 0.0
    %3238 = vmatpush1.msra.mxu0 0.0
    %3239 = vmatprep.subr.mxu0 0.0
    %3240 = vmatpush1.msra.mxu0 0.0
    %3241 = vmatprep.subr.mxu0 0.0
    %3242 = vmatpush1.msra.mxu0 0.0
    %3243 = vmatprep.subr.mxu0 0.0
    %3244 = vmatpush1.msra.mxu0 0.0
    %3245 = vmatprep.subr.mxu0 0.0
    %3246 = vmatpush1.msra.mxu0 0.0
    %3247 = vmatprep.subr.mxu0 0.0
    %3248 = vmatpush1.msra.mxu0 0.0
    %3249 = vmatprep.subr.mxu0 0.0
    %3250 = vmatpush1.msra.mxu0 0.0
    %3251 = vmatprep.subr.mxu0 0.0
    %3252 = vmatpush1.msra.mxu0 0.0
    %3253 = vmatprep.subr.mxu0 0.0
    %3254 = vmatpush1.msra.mxu0 0.0
    %3255 = vmatprep.subr.mxu0 0.0
    %3256 = vmatpush1.msra.mxu0 0.0
    %3257 = vmatprep.subr.mxu0 0.0
    %3258 = vmatpush1.msra.mxu0 0.0
    %3259 = vmatprep.subr.mxu0 0.0
    %3260 = vmatpush1.msra.mxu0 0.0
    %3261 = vmatprep.subr.mxu0 0.0
    %3262 = vmatpush1.msra.mxu0 %v868
    %3263 = vmatprep.subr.mxu0 0.0
    %3264 = vmatpush1.msra.mxu0 %v867
    %3265 = vmatprep.subr.mxu0 0.0
    %3266 = vmatpush1.msra.mxu0 %v866
    %3267 = vmatprep.subr.mxu0 0.0
    %3268 = vmatpush1.msra.mxu0 %v865
    %3269 = vmatprep.subr.mxu0 0.0
    %3270 = vmatpush2.msra.mxu0 0.0
    %3271 = vmatprep.subr.mxu0 0.0
    %3272 = vmatpush2.msra.mxu0 0.0
    %3273 = vmatprep.subr.mxu0 0.0
    %3274 = vmatpush2.msra.mxu0 0.0
    %3275 = vmatprep.subr.mxu0 0.0
    %3276 = vmatpush2.msra.mxu0 0.0
    %3277 = vmatprep.subr.mxu0 0.0
    %3278 = vmatpush2.msra.mxu0 0.0
    %3279 = vmatprep.subr.mxu0 0.0
    %3280 = vmatpush2.msra.mxu0 0.0
    %3281 = vmatprep.subr.mxu0 0.0
    %3282 = vmatpush2.msra.mxu0 0.0
    %3283 = vmatprep.subr.mxu0 0.0
    %3284 = vmatpush2.msra.mxu0 0.0
    %3285 = vmatprep.subr.mxu0 0.0
    %3286 = vmatpush2.msra.mxu0 0.0
    %3287 = vmatprep.subr.mxu0 0.0
    %3288 = vmatpush2.msra.mxu0 0.0
    %3289 = vmatprep.subr.mxu0 0.0
    %3290 = vmatpush2.msra.mxu0 0.0
    %3291 = vmatprep.subr.mxu0 0.0
    %3292 = vmatpush2.msra.mxu0 0.0
    %3293 = vmatprep.subr.mxu0 0.0
    %3294 = vmatpush2.msra.mxu0 0.0
    %3295 = vmatprep.subr.mxu0 0.0
    %3296 = vmatpush2.msra.mxu0 0.0
    %3297 = vmatprep.subr.mxu0 0.0
    %3298 = vmatpush2.msra.mxu0 0.0
    %3299 = vmatprep.subr.mxu0 0.0
    %3300 = vmatpush2.msra.mxu0 0.0
    %3301 = vmatprep.mubr.f32.mxu0 0.0
    %3302 = vmatmul.mubr.f32.gmra.mxu0 %v3226
    %v3303 = vpop.f32.mrf.mxu0
    %v3304 = vadd.f32 0.0, %v3303
    %v3305 = vpop.f32.mrf.mxu0
    %3306 = vmatprep.mubr.f32.mxu0 0.0
    %3307 = vmatmul.mubr.f32.gmra.mxu0 %v3229
    %v3308 = vpop.f32.mrf.mxu0
    %v3309 = vadd.f32 0.0, %v3308
    %v3310 = vpop.f32.mrf.mxu0
    %3311 = vmatprep.mubr.f32.mxu0 0.0
    %3312 = vmatmul.mubr.f32.gmra.mxu0 %v3232
    %v3313 = vpop.f32.mrf.mxu0
    %v3314 = vadd.f32 0.0, %v3313
    %v3315 = vpop.f32.mrf.mxu0
    %3316 = vmatprep.mubr.f32.mxu0 0.0
    %3317 = vmatmul.mubr.f32.gmra.mxu0 %v3235
    %v3318 = vpop.f32.mrf.mxu0
    %v3319 = vadd.f32 0.0, %v3318
    %v3320 = vpop.f32.mrf.mxu0
    %3321 = vdwg.mxu0
    %v3322 = vadd.f32 %v3187, %v3304
    %v3323 = vadd.f32 %v3192, %v3309
    %v3324 = vadd.f32 %v3197, %v3314
    %v3325 = vadd.f32 %v3202, %v3319
    %v3327 = vsel %vm65, %v3207, 0
    %v3330 = vsel %vm65, %v3212, 0
    %v3333 = vsel %vm65, %v3217, 0
    %v3336 = vsel %vm65, %v3222, 0
    %3338 = vmatprep.subr.mxu0 0.0
    %3339 = vmatpush1.msra.mxu0 0.0
    %3340 = vmatprep.subr.mxu0 0.0
    %3341 = vmatpush1.msra.mxu0 0.0
    %3342 = vmatprep.subr.mxu0 0.0
    %3343 = vmatpush1.msra.mxu0 0.0
    %3344 = vmatprep.subr.mxu0 0.0
    %3345 = vmatpush1.msra.mxu0 0.0
    %3346 = vmatprep.subr.mxu0 0.0
    %3347 = vmatpush1.msra.mxu0 0.0
    %3348 = vmatprep.subr.mxu0 0.0
    %3349 = vmatpush1.msra.mxu0 0.0
    %3350 = vmatprep.subr.mxu0 0.0
    %3351 = vmatpush1.msra.mxu0 0.0
    %3352 = vmatprep.subr.mxu0 0.0
    %3353 = vmatpush1.msra.mxu0 0.0
    %3354 = vmatprep.subr.mxu0 0.0
    %3355 = vmatpush1.msra.mxu0 0.0
    %3356 = vmatprep.subr.mxu0 0.0
    %3357 = vmatpush1.msra.mxu0 0.0
    %3358 = vmatprep.subr.mxu0 0.0
    %3359 = vmatpush1.msra.mxu0 0.0
    %3360 = vmatprep.subr.mxu0 0.0
    %3361 = vmatpush1.msra.mxu0 0.0
    %3362 = vmatprep.subr.mxu0 0.0
    %3363 = vmatpush1.msra.mxu0 %v955
    %3364 = vmatprep.subr.mxu0 0.0
    %3365 = vmatpush1.msra.mxu0 %v954
    %3366 = vmatprep.subr.mxu0 0.0
    %3367 = vmatpush1.msra.mxu0 %v953
    %3368 = vmatprep.subr.mxu0 0.0
    %3369 = vmatpush1.msra.mxu0 %v952
    %3370 = vmatprep.subr.mxu0 0.0
    %3371 = vmatpush2.msra.mxu0 0.0
    %3372 = vmatprep.subr.mxu0 0.0
    %3373 = vmatpush2.msra.mxu0 0.0
    %3374 = vmatprep.subr.mxu0 0.0
    %3375 = vmatpush2.msra.mxu0 0.0
    %3376 = vmatprep.subr.mxu0 0.0
    %3377 = vmatpush2.msra.mxu0 0.0
    %3378 = vmatprep.subr.mxu0 0.0
    %3379 = vmatpush2.msra.mxu0 0.0
    %3380 = vmatprep.subr.mxu0 0.0
    %3381 = vmatpush2.msra.mxu0 0.0
    %3382 = vmatprep.subr.mxu0 0.0
    %3383 = vmatpush2.msra.mxu0 0.0
    %3384 = vmatprep.subr.mxu0 0.0
    %3385 = vmatpush2.msra.mxu0 0.0
    %3386 = vmatprep.subr.mxu0 0.0
    %3387 = vmatpush2.msra.mxu0 0.0
    %3388 = vmatprep.subr.mxu0 0.0
    %3389 = vmatpush2.msra.mxu0 0.0
    %3390 = vmatprep.subr.mxu0 0.0
    %3391 = vmatpush2.msra.mxu0 0.0
    %3392 = vmatprep.subr.mxu0 0.0
    %3393 = vmatpush2.msra.mxu0 0.0
    %3394 = vmatprep.subr.mxu0 0.0
    %3395 = vmatpush2.msra.mxu0 0.0
    %3396 = vmatprep.subr.mxu0 0.0
    %3397 = vmatpush2.msra.mxu0 0.0
    %3398 = vmatprep.subr.mxu0 0.0
    %3399 = vmatpush2.msra.mxu0 0.0
    %3400 = vmatprep.subr.mxu0 0.0
    %3401 = vmatpush2.msra.mxu0 0.0
    %3402 = vmatprep.mubr.f32.mxu0 0.0
    %3403 = vmatmul.mubr.f32.gmra.mxu0 %v3327
    %v3404 = vpop.f32.mrf.mxu0
    %v3405 = vadd.f32 0.0, %v3404
    %v3406 = vpop.f32.mrf.mxu0
    %3407 = vmatprep.mubr.f32.mxu0 0.0
    %3408 = vmatmul.mubr.f32.gmra.mxu0 %v3330
    %v3409 = vpop.f32.mrf.mxu0
    %v3410 = vadd.f32 0.0, %v3409
    %v3411 = vpop.f32.mrf.mxu0
    %3412 = vmatprep.mubr.f32.mxu0 0.0
    %3413 = vmatmul.mubr.f32.gmra.mxu0 %v3333
    %v3414 = vpop.f32.mrf.mxu0
    %v3415 = vadd.f32 0.0, %v3414
    %v3416 = vpop.f32.mrf.mxu0
    %3417 = vmatprep.mubr.f32.mxu0 0.0
    %3418 = vmatmul.mubr.f32.gmra.mxu0 %v3336
    %v3419 = vpop.f32.mrf.mxu0
    %v3420 = vadd.f32 0.0, %v3419
    %v3421 = vpop.f32.mrf.mxu0
    %3422 = vdwg.mxu0
    %v3423 = vadd.f32 %v3322, %v3405
    %v3424 = vadd.f32 %v3323, %v3410
    %v3425 = vadd.f32 %v3324, %v3415
    %v3426 = vadd.f32 %v3325, %v3420
    %v3427 = vld [vmem:[#allocation7 + $0x210] sm:$0xff]
    %v3428 = vld [vmem:[#allocation7 + $0x218] sm:$0xff]
    %v3429 = vld [vmem:[#allocation7 + $0x220] sm:$0xff]
    %v3430 = vld [vmem:[#allocation7 + $0x228] sm:$0xff]
    %3432 = vset.pattern.permute.xlu0 64
    %3433 = vperm.xlu0 %3432, %v3427
    %v3434 = vpop.permute.xlu0 %3433
    %3437 = vset.pattern.permute.xlu0 64
    %3438 = vperm.xlu0 %3437, %v3428
    %v3439 = vpop.permute.xlu0 %3438
    %3442 = vset.pattern.permute.xlu0 64
    %3443 = vperm.xlu0 %3442, %v3429
    %v3444 = vpop.permute.xlu0 %3443
    %3447 = vset.pattern.permute.xlu0 64
    %3448 = vperm.xlu0 %3447, %v3430
    %v3449 = vpop.permute.xlu0 %3448
    %v3451 = vadd.f32 %v3423, %v3434
    %v3452 = vadd.f32 %v3424, %v3439
    %v3453 = vadd.f32 %v3425, %v3444
    %v3454 = vadd.f32 %v3426, %v3449
    %v3455 = vmax.f32 %v3451, 0.0
    %v3456 = vmax.f32 %v3452, 0.0
    %v3457 = vmax.f32 %v3453, 0.0
    %v3458 = vmax.f32 %v3454, 0.0
    %v3459 = vadd.f32 %v3455, %v3034
    %v3460 = vadd.f32 %v3456, %v3039
    %v3461 = vadd.f32 %v3457, %v3044
    %v3462 = vadd.f32 %v3458, %v3049
    %v3463 = vld [vmem:[#allocation7 + $0x290] sm:$0xff]
    %v3464 = vld [vmem:[#allocation7 + $0x298] sm:$0xff]
    %v3465 = vld [vmem:[#allocation7 + $0x2a0] sm:$0xff]
    %v3466 = vld [vmem:[#allocation7 + $0x2a8] sm:$0xff]
    %v3467 = vld [vmem:[#allocation7 + $0x2b0] sm:$0xff]
    %v3468 = vld [vmem:[#allocation7 + $0x2b8] sm:$0xff]
    %v3469 = vld [vmem:[#allocation7 + $0x2c0] sm:$0xff]
    %v3470 = vld [vmem:[#allocation7 + $0x2c8] sm:$0xff]
    %v3471 = vld [vmem:[#allocation7 + $0x2d0] sm:$0xff]
    %v3472 = vld [vmem:[#allocation7 + $0x2d8] sm:$0xff]
    %v3473 = vld [vmem:[#allocation7 + $0x2e0] sm:$0xff]
    %v3474 = vld [vmem:[#allocation7 + $0x2e8] sm:$0xff]
    %v3476 = vsel %vm65, %v3463, 0
    %v3479 = vsel %vm65, %v3464, 0
    %v3482 = vsel %vm65, %v3465, 0
    %v3485 = vsel %vm65, %v3466, 0
    %v3488 = vsel %vm65, %v3467, 0
    %v3491 = vsel %vm65, %v3468, 0
    %v3494 = vsel %vm65, %v3469, 0
    %v3497 = vsel %vm65, %v3470, 0
    %v3500 = vsel %vm65, %v3471, 0
    %v3503 = vsel %vm65, %v3472, 0
    %v3506 = vsel %vm65, %v3473, 0
    %v3509 = vsel %vm65, %v3474, 0
    %3511 = vmatprep.subr.mxu0 0.0
    %3512 = vmatpush1.msra.mxu0 0.0
    %3513 = vmatprep.subr.mxu0 0.0
    %3514 = vmatpush1.msra.mxu0 0.0
    %3515 = vmatprep.subr.mxu0 0.0
    %3516 = vmatpush1.msra.mxu0 0.0
    %3517 = vmatprep.subr.mxu0 0.0
    %3518 = vmatpush1.msra.mxu0 0.0
    %3519 = vmatprep.subr.mxu0 0.0
    %3520 = vmatpush1.msra.mxu0 0.0
    %3521 = vmatprep.subr.mxu0 0.0
    %3522 = vmatpush1.msra.mxu0 0.0
    %3523 = vmatprep.subr.mxu0 0.0
    %3524 = vmatpush1.msra.mxu0 0.0
    %3525 = vmatprep.subr.mxu0 0.0
    %3526 = vmatpush1.msra.mxu0 0.0
    %3527 = vmatprep.subr.mxu0 0.0
    %3528 = vmatpush1.msra.mxu0 0.0
    %3529 = vmatprep.subr.mxu0 0.0
    %3530 = vmatpush1.msra.mxu0 0.0
    %3531 = vmatprep.subr.mxu0 0.0
    %3532 = vmatpush1.msra.mxu0 0.0
    %3533 = vmatprep.subr.mxu0 0.0
    %3534 = vmatpush1.msra.mxu0 0.0
    %3535 = vmatprep.subr.mxu0 0.0
    %3536 = vmatpush1.msra.mxu0 %v3462
    %3537 = vmatprep.subr.mxu0 0.0
    %3538 = vmatpush1.msra.mxu0 %v3461
    %3539 = vmatprep.subr.mxu0 0.0
    %3540 = vmatpush1.msra.mxu0 %v3460
    %3541 = vmatprep.subr.mxu0 0.0
    %3542 = vmatpush1.msra.mxu0 %v3459
    %3543 = vmatprep.subr.mxu0 0.0
    %3544 = vmatpush2.msra.mxu0 0.0
    %3545 = vmatprep.subr.mxu0 0.0
    %3546 = vmatpush2.msra.mxu0 0.0
    %3547 = vmatprep.subr.mxu0 0.0
    %3548 = vmatpush2.msra.mxu0 0.0
    %3549 = vmatprep.subr.mxu0 0.0
    %3550 = vmatpush2.msra.mxu0 0.0
    %3551 = vmatprep.subr.mxu0 0.0
    %3552 = vmatpush2.msra.mxu0 0.0
    %3553 = vmatprep.subr.mxu0 0.0
    %3554 = vmatpush2.msra.mxu0 0.0
    %3555 = vmatprep.subr.mxu0 0.0
    %3556 = vmatpush2.msra.mxu0 0.0
    %3557 = vmatprep.subr.mxu0 0.0
    %3558 = vmatpush2.msra.mxu0 0.0
    %3559 = vmatprep.subr.mxu0 0.0
    %3560 = vmatpush2.msra.mxu0 0.0
    %3561 = vmatprep.subr.mxu0 0.0
    %3562 = vmatpush2.msra.mxu0 0.0
    %3563 = vmatprep.subr.mxu0 0.0
    %3564 = vmatpush2.msra.mxu0 0.0
    %3565 = vmatprep.subr.mxu0 0.0
    %3566 = vmatpush2.msra.mxu0 0.0
    %3567 = vmatprep.subr.mxu0 0.0
    %3568 = vmatpush2.msra.mxu0 0.0
    %3569 = vmatprep.subr.mxu0 0.0
    %3570 = vmatpush2.msra.mxu0 0.0
    %3571 = vmatprep.subr.mxu0 0.0
    %3572 = vmatpush2.msra.mxu0 0.0
    %3573 = vmatprep.subr.mxu0 0.0
    %3574 = vmatpush2.msra.mxu0 0.0
    %3575 = vmatprep.mubr.f32.mxu0 0.0
    %3576 = vmatmul.mubr.f32.gmra.mxu0 %v3476
    %v3577 = vpop.f32.mrf.mxu0
    %v3578 = vadd.f32 0.0, %v3577
    %v3579 = vpop.f32.mrf.mxu0
    %3580 = vmatprep.mubr.f32.mxu0 0.0
    %3581 = vmatmul.mubr.f32.gmra.mxu0 %v3479
    %v3582 = vpop.f32.mrf.mxu0
    %v3583 = vadd.f32 0.0, %v3582
    %v3584 = vpop.f32.mrf.mxu0
    %3585 = vmatprep.mubr.f32.mxu0 0.0
    %3586 = vmatmul.mubr.f32.gmra.mxu0 %v3482
    %v3587 = vpop.f32.mrf.mxu0
    %v3588 = vadd.f32 0.0, %v3587
    %v3589 = vpop.f32.mrf.mxu0
    %3590 = vmatprep.mubr.f32.mxu0 0.0
    %3591 = vmatmul.mubr.f32.gmra.mxu0 %v3485
    %v3592 = vpop.f32.mrf.mxu0
    %v3593 = vadd.f32 0.0, %v3592
    %v3594 = vpop.f32.mrf.mxu0
    %3595 = vmatprep.mubr.f32.mxu0 0.0
    %3596 = vmatmul.mubr.f32.gmra.mxu0 %v3488
    %v3597 = vpop.f32.mrf.mxu0
    %v3598 = vadd.f32 0.0, %v3597
    %v3599 = vpop.f32.mrf.mxu0
    %3600 = vmatprep.mubr.f32.mxu0 0.0
    %3601 = vmatmul.mubr.f32.gmra.mxu0 %v3491
    %v3602 = vpop.f32.mrf.mxu0
    %v3603 = vadd.f32 0.0, %v3602
    %v3604 = vpop.f32.mrf.mxu0
    %3605 = vmatprep.mubr.f32.mxu0 0.0
    %3606 = vmatmul.mubr.f32.gmra.mxu0 %v3494
    %v3607 = vpop.f32.mrf.mxu0
    %v3608 = vadd.f32 0.0, %v3607
    %v3609 = vpop.f32.mrf.mxu0
    %3610 = vmatprep.mubr.f32.mxu0 0.0
    %3611 = vmatmul.mubr.f32.gmra.mxu0 %v3497
    %v3612 = vpop.f32.mrf.mxu0
    %v3613 = vadd.f32 0.0, %v3612
    %v3614 = vpop.f32.mrf.mxu0
    %3615 = vmatprep.mubr.f32.mxu0 0.0
    %3616 = vmatmul.mubr.f32.gmra.mxu0 %v3500
    %v3617 = vpop.f32.mrf.mxu0
    %v3618 = vadd.f32 0.0, %v3617
    %v3619 = vpop.f32.mrf.mxu0
    %3620 = vmatprep.mubr.f32.mxu0 0.0
    %3621 = vmatmul.mubr.f32.gmra.mxu0 %v3503
    %v3622 = vpop.f32.mrf.mxu0
    %v3623 = vadd.f32 0.0, %v3622
    %v3624 = vpop.f32.mrf.mxu0
    %3625 = vmatprep.mubr.f32.mxu0 0.0
    %3626 = vmatmul.mubr.f32.gmra.mxu0 %v3506
    %v3627 = vpop.f32.mrf.mxu0
    %v3628 = vadd.f32 0.0, %v3627
    %v3629 = vpop.f32.mrf.mxu0
    %3630 = vmatprep.mubr.f32.mxu0 0.0
    %3631 = vmatmul.mubr.f32.gmra.mxu0 %v3509
    %v3632 = vpop.f32.mrf.mxu0
    %v3633 = vadd.f32 0.0, %v3632
    %v3634 = vpop.f32.mrf.mxu0
    %3635 = vdwg.mxu0
    %v3637 = vsel %vm65, %v3578, 0
    %v3640 = vsel %vm65, %v3583, 0
    %v3643 = vsel %vm65, %v3588, 0
    %v3646 = vsel %vm65, %v3593, 0
    %3648 = vmatprep.subr.mxu0 0.0
    %3649 = vmatpush1.msra.mxu0 0.0
    %3650 = vmatprep.subr.mxu0 0.0
    %3651 = vmatpush1.msra.mxu0 0.0
    %3652 = vmatprep.subr.mxu0 0.0
    %3653 = vmatpush1.msra.mxu0 0.0
    %3654 = vmatprep.subr.mxu0 0.0
    %3655 = vmatpush1.msra.mxu0 0.0
    %3656 = vmatprep.subr.mxu0 0.0
    %3657 = vmatpush1.msra.mxu0 0.0
    %3658 = vmatprep.subr.mxu0 0.0
    %3659 = vmatpush1.msra.mxu0 0.0
    %3660 = vmatprep.subr.mxu0 0.0
    %3661 = vmatpush1.msra.mxu0 0.0
    %3662 = vmatprep.subr.mxu0 0.0
    %3663 = vmatpush1.msra.mxu0 0.0
    %3664 = vmatprep.subr.mxu0 0.0
    %3665 = vmatpush1.msra.mxu0 0.0
    %3666 = vmatprep.subr.mxu0 0.0
    %3667 = vmatpush1.msra.mxu0 0.0
    %3668 = vmatprep.subr.mxu0 0.0
    %3669 = vmatpush1.msra.mxu0 0.0
    %3670 = vmatprep.subr.mxu0 0.0
    %3671 = vmatpush1.msra.mxu0 0.0
    %3672 = vmatprep.subr.mxu0 0.0
    %3673 = vmatpush1.msra.mxu0 %v868
    %3674 = vmatprep.subr.mxu0 0.0
    %3675 = vmatpush1.msra.mxu0 %v867
    %3676 = vmatprep.subr.mxu0 0.0
    %3677 = vmatpush1.msra.mxu0 %v866
    %3678 = vmatprep.subr.mxu0 0.0
    %3679 = vmatpush1.msra.mxu0 %v865
    %3680 = vmatprep.subr.mxu0 0.0
    %3681 = vmatpush2.msra.mxu0 0.0
    %3682 = vmatprep.subr.mxu0 0.0
    %3683 = vmatpush2.msra.mxu0 0.0
    %3684 = vmatprep.subr.mxu0 0.0
    %3685 = vmatpush2.msra.mxu0 0.0
    %3686 = vmatprep.subr.mxu0 0.0
    %3687 = vmatpush2.msra.mxu0 0.0
    %3688 = vmatprep.subr.mxu0 0.0
    %3689 = vmatpush2.msra.mxu0 0.0
    %3690 = vmatprep.subr.mxu0 0.0
    %3691 = vmatpush2.msra.mxu0 0.0
    %3692 = vmatprep.subr.mxu0 0.0
    %3693 = vmatpush2.msra.mxu0 0.0
    %3694 = vmatprep.subr.mxu0 0.0
    %3695 = vmatpush2.msra.mxu0 0.0
    %3696 = vmatprep.subr.mxu0 0.0
    %3697 = vmatpush2.msra.mxu0 0.0
    %3698 = vmatprep.subr.mxu0 0.0
    %3699 = vmatpush2.msra.mxu0 0.0
    %3700 = vmatprep.subr.mxu0 0.0
    %3701 = vmatpush2.msra.mxu0 0.0
    %3702 = vmatprep.subr.mxu0 0.0
    %3703 = vmatpush2.msra.mxu0 0.0
    %3704 = vmatprep.subr.mxu0 0.0
    %3705 = vmatpush2.msra.mxu0 0.0
    %3706 = vmatprep.subr.mxu0 0.0
    %3707 = vmatpush2.msra.mxu0 0.0
    %3708 = vmatprep.subr.mxu0 0.0
    %3709 = vmatpush2.msra.mxu0 0.0
    %3710 = vmatprep.subr.mxu0 0.0
    %3711 = vmatpush2.msra.mxu0 0.0
    %3712 = vmatprep.mubr.f32.mxu0 0.0
    %3713 = vmatmul.mubr.f32.gmra.mxu0 %v3637
    %v3714 = vpop.f32.mrf.mxu0
    %v3715 = vadd.f32 0.0, %v3714
    %v3716 = vpop.f32.mrf.mxu0
    %3717 = vmatprep.mubr.f32.mxu0 0.0
    %3718 = vmatmul.mubr.f32.gmra.mxu0 %v3640
    %v3719 = vpop.f32.mrf.mxu0
    %v3720 = vadd.f32 0.0, %v3719
    %v3721 = vpop.f32.mrf.mxu0
    %3722 = vmatprep.mubr.f32.mxu0 0.0
    %3723 = vmatmul.mubr.f32.gmra.mxu0 %v3643
    %v3724 = vpop.f32.mrf.mxu0
    %v3725 = vadd.f32 0.0, %v3724
    %v3726 = vpop.f32.mrf.mxu0
    %3727 = vmatprep.mubr.f32.mxu0 0.0
    %3728 = vmatmul.mubr.f32.gmra.mxu0 %v3646
    %v3729 = vpop.f32.mrf.mxu0
    %v3730 = vadd.f32 0.0, %v3729
    %v3731 = vpop.f32.mrf.mxu0
    %3732 = vdwg.mxu0
    %v3733 = vadd.f32 %v3598, %v3715
    %v3734 = vadd.f32 %v3603, %v3720
    %v3735 = vadd.f32 %v3608, %v3725
    %v3736 = vadd.f32 %v3613, %v3730
    %v3738 = vsel %vm65, %v3618, 0
    %v3741 = vsel %vm65, %v3623, 0
    %v3744 = vsel %vm65, %v3628, 0
    %v3747 = vsel %vm65, %v3633, 0
    %3749 = vmatprep.subr.mxu0 0.0
    %3750 = vmatpush1.msra.mxu0 0.0
    %3751 = vmatprep.subr.mxu0 0.0
    %3752 = vmatpush1.msra.mxu0 0.0
    %3753 = vmatprep.subr.mxu0 0.0
    %3754 = vmatpush1.msra.mxu0 0.0
    %3755 = vmatprep.subr.mxu0 0.0
    %3756 = vmatpush1.msra.mxu0 0.0
    %3757 = vmatprep.subr.mxu0 0.0
    %3758 = vmatpush1.msra.mxu0 0.0
    %3759 = vmatprep.subr.mxu0 0.0
    %3760 = vmatpush1.msra.mxu0 0.0
    %3761 = vmatprep.subr.mxu0 0.0
    %3762 = vmatpush1.msra.mxu0 0.0
    %3763 = vmatprep.subr.mxu0 0.0
    %3764 = vmatpush1.msra.mxu0 0.0
    %3765 = vmatprep.subr.mxu0 0.0
    %3766 = vmatpush1.msra.mxu0 0.0
    %3767 = vmatprep.subr.mxu0 0.0
    %3768 = vmatpush1.msra.mxu0 0.0
    %3769 = vmatprep.subr.mxu0 0.0
    %3770 = vmatpush1.msra.mxu0 0.0
    %3771 = vmatprep.subr.mxu0 0.0
    %3772 = vmatpush1.msra.mxu0 0.0
    %3773 = vmatprep.subr.mxu0 0.0
    %3774 = vmatpush1.msra.mxu0 %v955
    %3775 = vmatprep.subr.mxu0 0.0
    %3776 = vmatpush1.msra.mxu0 %v954
    %3777 = vmatprep.subr.mxu0 0.0
    %3778 = vmatpush1.msra.mxu0 %v953
    %3779 = vmatprep.subr.mxu0 0.0
    %3780 = vmatpush1.msra.mxu0 %v952
    %3781 = vmatprep.subr.mxu0 0.0
    %3782 = vmatpush2.msra.mxu0 0.0
    %3783 = vmatprep.subr.mxu0 0.0
    %3784 = vmatpush2.msra.mxu0 0.0
    %3785 = vmatprep.subr.mxu0 0.0
    %3786 = vmatpush2.msra.mxu0 0.0
    %3787 = vmatprep.subr.mxu0 0.0
    %3788 = vmatpush2.msra.mxu0 0.0
    %3789 = vmatprep.subr.mxu0 0.0
    %3790 = vmatpush2.msra.mxu0 0.0
    %3791 = vmatprep.subr.mxu0 0.0
    %3792 = vmatpush2.msra.mxu0 0.0
    %3793 = vmatprep.subr.mxu0 0.0
    %3794 = vmatpush2.msra.mxu0 0.0
    %3795 = vmatprep.subr.mxu0 0.0
    %3796 = vmatpush2.msra.mxu0 0.0
    %3797 = vmatprep.subr.mxu0 0.0
    %3798 = vmatpush2.msra.mxu0 0.0
    %3799 = vmatprep.subr.mxu0 0.0
    %3800 = vmatpush2.msra.mxu0 0.0
    %3801 = vmatprep.subr.mxu0 0.0
    %3802 = vmatpush2.msra.mxu0 0.0
    %3803 = vmatprep.subr.mxu0 0.0
    %3804 = vmatpush2.msra.mxu0 0.0
    %3805 = vmatprep.subr.mxu0 0.0
    %3806 = vmatpush2.msra.mxu0 0.0
    %3807 = vmatprep.subr.mxu0 0.0
    %3808 = vmatpush2.msra.mxu0 0.0
    %3809 = vmatprep.subr.mxu0 0.0
    %3810 = vmatpush2.msra.mxu0 0.0
    %3811 = vmatprep.subr.mxu0 0.0
    %3812 = vmatpush2.msra.mxu0 0.0
    %3813 = vmatprep.mubr.f32.mxu0 0.0
    %3814 = vmatmul.mubr.f32.gmra.mxu0 %v3738
    %v3815 = vpop.f32.mrf.mxu0
    %v3816 = vadd.f32 0.0, %v3815
    %v3817 = vpop.f32.mrf.mxu0
    %3818 = vmatprep.mubr.f32.mxu0 0.0
    %3819 = vmatmul.mubr.f32.gmra.mxu0 %v3741
    %v3820 = vpop.f32.mrf.mxu0
    %v3821 = vadd.f32 0.0, %v3820
    %v3822 = vpop.f32.mrf.mxu0
    %3823 = vmatprep.mubr.f32.mxu0 0.0
    %3824 = vmatmul.mubr.f32.gmra.mxu0 %v3744
    %v3825 = vpop.f32.mrf.mxu0
    %v3826 = vadd.f32 0.0, %v3825
    %v3827 = vpop.f32.mrf.mxu0
    %3828 = vmatprep.mubr.f32.mxu0 0.0
    %3829 = vmatmul.mubr.f32.gmra.mxu0 %v3747
    %v3830 = vpop.f32.mrf.mxu0
    %v3831 = vadd.f32 0.0, %v3830
    %v3832 = vpop.f32.mrf.mxu0
    %3833 = vdwg.mxu0
    %v3834 = vadd.f32 %v3733, %v3816
    %v3835 = vadd.f32 %v3734, %v3821
    %v3836 = vadd.f32 %v3735, %v3826
    %v3837 = vadd.f32 %v3736, %v3831
    %v3838 = vld [vmem:[#allocation7 + $0x290] sm:$0xff]
    %v3839 = vld [vmem:[#allocation7 + $0x298] sm:$0xff]
    %v3840 = vld [vmem:[#allocation7 + $0x2a0] sm:$0xff]
    %v3841 = vld [vmem:[#allocation7 + $0x2a8] sm:$0xff]
    %3843 = vset.pattern.permute.xlu0 64
    %3844 = vperm.xlu0 %3843, %v3838
    %v3845 = vpop.permute.xlu0 %3844
    %3848 = vset.pattern.permute.xlu0 64
    %3849 = vperm.xlu0 %3848, %v3839
    %v3850 = vpop.permute.xlu0 %3849
    %3853 = vset.pattern.permute.xlu0 64
    %3854 = vperm.xlu0 %3853, %v3840
    %v3855 = vpop.permute.xlu0 %3854
    %3858 = vset.pattern.permute.xlu0 64
    %3859 = vperm.xlu0 %3858, %v3841
    %v3860 = vpop.permute.xlu0 %3859
    %v3862 = vadd.f32 %v3834, %v3845
    %v3863 = vadd.f32 %v3835, %v3850
    %v3864 = vadd.f32 %v3836, %v3855
    %v3865 = vadd.f32 %v3837, %v3860
    %v3866 = vmax.f32 %v3862, 0.0
    %v3867 = vmax.f32 %v3863, 0.0
    %v3868 = vmax.f32 %v3864, 0.0
    %v3869 = vmax.f32 %v3865, 0.0
    %v3870 = vld [vmem:[#allocation7 + $0x2f0] sm:$0xff]
    %v3871 = vld [vmem:[#allocation7 + $0x2f8] sm:$0xff]
    %v3872 = vld [vmem:[#allocation7 + $0x300] sm:$0xff]
    %v3873 = vld [vmem:[#allocation7 + $0x308] sm:$0xff]
    %v3874 = vld [vmem:[#allocation7 + $0x310] sm:$0xff]
    %v3875 = vld [vmem:[#allocation7 + $0x318] sm:$0xff]
    %v3876 = vld [vmem:[#allocation7 + $0x320] sm:$0xff]
    %v3877 = vld [vmem:[#allocation7 + $0x328] sm:$0xff]
    %v3878 = vld [vmem:[#allocation7 + $0x330] sm:$0xff]
    %v3879 = vld [vmem:[#allocation7 + $0x338] sm:$0xff]
    %v3880 = vld [vmem:[#allocation7 + $0x340] sm:$0xff]
    %v3881 = vld [vmem:[#allocation7 + $0x348] sm:$0xff]
    %v3883 = vsel %vm65, %v3870, 0
    %v3886 = vsel %vm65, %v3871, 0
    %v3889 = vsel %vm65, %v3872, 0
    %v3892 = vsel %vm65, %v3873, 0
    %v3895 = vsel %vm65, %v3874, 0
    %v3898 = vsel %vm65, %v3875, 0
    %v3901 = vsel %vm65, %v3876, 0
    %v3904 = vsel %vm65, %v3877, 0
    %v3907 = vsel %vm65, %v3878, 0
    %v3910 = vsel %vm65, %v3879, 0
    %v3913 = vsel %vm65, %v3880, 0
    %v3916 = vsel %vm65, %v3881, 0
    %3918 = vmatprep.subr.mxu0 0.0
    %3919 = vmatpush1.msra.mxu0 0.0
    %3920 = vmatprep.subr.mxu0 0.0
    %3921 = vmatpush1.msra.mxu0 0.0
    %3922 = vmatprep.subr.mxu0 0.0
    %3923 = vmatpush1.msra.mxu0 0.0
    %3924 = vmatprep.subr.mxu0 0.0
    %3925 = vmatpush1.msra.mxu0 0.0
    %3926 = vmatprep.subr.mxu0 0.0
    %3927 = vmatpush1.msra.mxu0 0.0
    %3928 = vmatprep.subr.mxu0 0.0
    %3929 = vmatpush1.msra.mxu0 0.0
    %3930 = vmatprep.subr.mxu0 0.0
    %3931 = vmatpush1.msra.mxu0 0.0
    %3932 = vmatprep.subr.mxu0 0.0
    %3933 = vmatpush1.msra.mxu0 0.0
    %3934 = vmatprep.subr.mxu0 0.0
    %3935 = vmatpush1.msra.mxu0 0.0
    %3936 = vmatprep.subr.mxu0 0.0
    %3937 = vmatpush1.msra.mxu0 0.0
    %3938 = vmatprep.subr.mxu0 0.0
    %3939 = vmatpush1.msra.mxu0 0.0
    %3940 = vmatprep.subr.mxu0 0.0
    %3941 = vmatpush1.msra.mxu0 0.0
    %3942 = vmatprep.subr.mxu0 0.0
    %3943 = vmatpush1.msra.mxu0 %v3869
    %3944 = vmatprep.subr.mxu0 0.0
    %3945 = vmatpush1.msra.mxu0 %v3868
    %3946 = vmatprep.subr.mxu0 0.0
    %3947 = vmatpush1.msra.mxu0 %v3867
    %3948 = vmatprep.subr.mxu0 0.0
    %3949 = vmatpush1.msra.mxu0 %v3866
    %3950 = vmatprep.subr.mxu0 0.0
    %3951 = vmatpush2.msra.mxu0 0.0
    %3952 = vmatprep.subr.mxu0 0.0
    %3953 = vmatpush2.msra.mxu0 0.0
    %3954 = vmatprep.subr.mxu0 0.0
    %3955 = vmatpush2.msra.mxu0 0.0
    %3956 = vmatprep.subr.mxu0 0.0
    %3957 = vmatpush2.msra.mxu0 0.0
    %3958 = vmatprep.subr.mxu0 0.0
    %3959 = vmatpush2.msra.mxu0 0.0
    %3960 = vmatprep.subr.mxu0 0.0
    %3961 = vmatpush2.msra.mxu0 0.0
    %3962 = vmatprep.subr.mxu0 0.0
    %3963 = vmatpush2.msra.mxu0 0.0
    %3964 = vmatprep.subr.mxu0 0.0
    %3965 = vmatpush2.msra.mxu0 0.0
    %3966 = vmatprep.subr.mxu0 0.0
    %3967 = vmatpush2.msra.mxu0 0.0
    %3968 = vmatprep.subr.mxu0 0.0
    %3969 = vmatpush2.msra.mxu0 0.0
    %3970 = vmatprep.subr.mxu0 0.0
    %3971 = vmatpush2.msra.mxu0 0.0
    %3972 = vmatprep.subr.mxu0 0.0
    %3973 = vmatpush2.msra.mxu0 0.0
    %3974 = vmatprep.subr.mxu0 0.0
    %3975 = vmatpush2.msra.mxu0 0.0
    %3976 = vmatprep.subr.mxu0 0.0
    %3977 = vmatpush2.msra.mxu0 0.0
    %3978 = vmatprep.subr.mxu0 0.0
    %3979 = vmatpush2.msra.mxu0 0.0
    %3980 = vmatprep.subr.mxu0 0.0
    %3981 = vmatpush2.msra.mxu0 0.0
    %3982 = vmatprep.mubr.f32.mxu0 0.0
    %3983 = vmatmul.mubr.f32.gmra.mxu0 %v3883
    %v3984 = vpop.f32.mrf.mxu0
    %v3985 = vadd.f32 0.0, %v3984
    %v3986 = vpop.f32.mrf.mxu0
    %3987 = vmatprep.mubr.f32.mxu0 0.0
    %3988 = vmatmul.mubr.f32.gmra.mxu0 %v3886
    %v3989 = vpop.f32.mrf.mxu0
    %v3990 = vadd.f32 0.0, %v3989
    %v3991 = vpop.f32.mrf.mxu0
    %3992 = vmatprep.mubr.f32.mxu0 0.0
    %3993 = vmatmul.mubr.f32.gmra.mxu0 %v3889
    %v3994 = vpop.f32.mrf.mxu0
    %v3995 = vadd.f32 0.0, %v3994
    %v3996 = vpop.f32.mrf.mxu0
    %3997 = vmatprep.mubr.f32.mxu0 0.0
    %3998 = vmatmul.mubr.f32.gmra.mxu0 %v3892
    %v3999 = vpop.f32.mrf.mxu0
    %v4000 = vadd.f32 0.0, %v3999
    %v4001 = vpop.f32.mrf.mxu0
    %4002 = vmatprep.mubr.f32.mxu0 0.0
    %4003 = vmatmul.mubr.f32.gmra.mxu0 %v3895
    %v4004 = vpop.f32.mrf.mxu0
    %v4005 = vadd.f32 0.0, %v4004
    %v4006 = vpop.f32.mrf.mxu0
    %4007 = vmatprep.mubr.f32.mxu0 0.0
    %4008 = vmatmul.mubr.f32.gmra.mxu0 %v3898
    %v4009 = vpop.f32.mrf.mxu0
    %v4010 = vadd.f32 0.0, %v4009
    %v4011 = vpop.f32.mrf.mxu0
    %4012 = vmatprep.mubr.f32.mxu0 0.0
    %4013 = vmatmul.mubr.f32.gmra.mxu0 %v3901
    %v4014 = vpop.f32.mrf.mxu0
    %v4015 = vadd.f32 0.0, %v4014
    %v4016 = vpop.f32.mrf.mxu0
    %4017 = vmatprep.mubr.f32.mxu0 0.0
    %4018 = vmatmul.mubr.f32.gmra.mxu0 %v3904
    %v4019 = vpop.f32.mrf.mxu0
    %v4020 = vadd.f32 0.0, %v4019
    %v4021 = vpop.f32.mrf.mxu0
    %4022 = vmatprep.mubr.f32.mxu0 0.0
    %4023 = vmatmul.mubr.f32.gmra.mxu0 %v3907
    %v4024 = vpop.f32.mrf.mxu0
    %v4025 = vadd.f32 0.0, %v4024
    %v4026 = vpop.f32.mrf.mxu0
    %4027 = vmatprep.mubr.f32.mxu0 0.0
    %4028 = vmatmul.mubr.f32.gmra.mxu0 %v3910
    %v4029 = vpop.f32.mrf.mxu0
    %v4030 = vadd.f32 0.0, %v4029
    %v4031 = vpop.f32.mrf.mxu0
    %4032 = vmatprep.mubr.f32.mxu0 0.0
    %4033 = vmatmul.mubr.f32.gmra.mxu0 %v3913
    %v4034 = vpop.f32.mrf.mxu0
    %v4035 = vadd.f32 0.0, %v4034
    %v4036 = vpop.f32.mrf.mxu0
    %4037 = vmatprep.mubr.f32.mxu0 0.0
    %4038 = vmatmul.mubr.f32.gmra.mxu0 %v3916
    %v4039 = vpop.f32.mrf.mxu0
    %v4040 = vadd.f32 0.0, %v4039
    %v4041 = vpop.f32.mrf.mxu0
    %4042 = vdwg.mxu0
    %v4044 = vsel %vm65, %v3985, 0
    %v4047 = vsel %vm65, %v3990, 0
    %v4050 = vsel %vm65, %v3995, 0
    %v4053 = vsel %vm65, %v4000, 0
    %4055 = vmatprep.subr.mxu0 0.0
    %4056 = vmatpush1.msra.mxu0 0.0
    %4057 = vmatprep.subr.mxu0 0.0
    %4058 = vmatpush1.msra.mxu0 0.0
    %4059 = vmatprep.subr.mxu0 0.0
    %4060 = vmatpush1.msra.mxu0 0.0
    %4061 = vmatprep.subr.mxu0 0.0
    %4062 = vmatpush1.msra.mxu0 0.0
    %4063 = vmatprep.subr.mxu0 0.0
    %4064 = vmatpush1.msra.mxu0 0.0
    %4065 = vmatprep.subr.mxu0 0.0
    %4066 = vmatpush1.msra.mxu0 0.0
    %4067 = vmatprep.subr.mxu0 0.0
    %4068 = vmatpush1.msra.mxu0 0.0
    %4069 = vmatprep.subr.mxu0 0.0
    %4070 = vmatpush1.msra.mxu0 0.0
    %4071 = vmatprep.subr.mxu0 0.0
    %4072 = vmatpush1.msra.mxu0 0.0
    %4073 = vmatprep.subr.mxu0 0.0
    %4074 = vmatpush1.msra.mxu0 0.0
    %4075 = vmatprep.subr.mxu0 0.0
    %4076 = vmatpush1.msra.mxu0 0.0
    %4077 = vmatprep.subr.mxu0 0.0
    %4078 = vmatpush1.msra.mxu0 0.0
    %4079 = vmatprep.subr.mxu0 0.0
    %4080 = vmatpush1.msra.mxu0 %v868
    %4081 = vmatprep.subr.mxu0 0.0
    %4082 = vmatpush1.msra.mxu0 %v867
    %4083 = vmatprep.subr.mxu0 0.0
    %4084 = vmatpush1.msra.mxu0 %v866
    %4085 = vmatprep.subr.mxu0 0.0
    %4086 = vmatpush1.msra.mxu0 %v865
    %4087 = vmatprep.subr.mxu0 0.0
    %4088 = vmatpush2.msra.mxu0 0.0
    %4089 = vmatprep.subr.mxu0 0.0
    %4090 = vmatpush2.msra.mxu0 0.0
    %4091 = vmatprep.subr.mxu0 0.0
    %4092 = vmatpush2.msra.mxu0 0.0
    %4093 = vmatprep.subr.mxu0 0.0
    %4094 = vmatpush2.msra.mxu0 0.0
    %4095 = vmatprep.subr.mxu0 0.0
    %4096 = vmatpush2.msra.mxu0 0.0
    %4097 = vmatprep.subr.mxu0 0.0
    %4098 = vmatpush2.msra.mxu0 0.0
    %4099 = vmatprep.subr.mxu0 0.0
    %4100 = vmatpush2.msra.mxu0 0.0
    %4101 = vmatprep.subr.mxu0 0.0
    %4102 = vmatpush2.msra.mxu0 0.0
    %4103 = vmatprep.subr.mxu0 0.0
    %4104 = vmatpush2.msra.mxu0 0.0
    %4105 = vmatprep.subr.mxu0 0.0
    %4106 = vmatpush2.msra.mxu0 0.0
    %4107 = vmatprep.subr.mxu0 0.0
    %4108 = vmatpush2.msra.mxu0 0.0
    %4109 = vmatprep.subr.mxu0 0.0
    %4110 = vmatpush2.msra.mxu0 0.0
    %4111 = vmatprep.subr.mxu0 0.0
    %4112 = vmatpush2.msra.mxu0 0.0
    %4113 = vmatprep.subr.mxu0 0.0
    %4114 = vmatpush2.msra.mxu0 0.0
    %4115 = vmatprep.subr.mxu0 0.0
    %4116 = vmatpush2.msra.mxu0 0.0
    %4117 = vmatprep.subr.mxu0 0.0
    %4118 = vmatpush2.msra.mxu0 0.0
    %4119 = vmatprep.mubr.f32.mxu0 0.0
    %4120 = vmatmul.mubr.f32.gmra.mxu0 %v4044
    %v4121 = vpop.f32.mrf.mxu0
    %v4122 = vadd.f32 0.0, %v4121
    %v4123 = vpop.f32.mrf.mxu0
    %4124 = vmatprep.mubr.f32.mxu0 0.0
    %4125 = vmatmul.mubr.f32.gmra.mxu0 %v4047
    %v4126 = vpop.f32.mrf.mxu0
    %v4127 = vadd.f32 0.0, %v4126
    %v4128 = vpop.f32.mrf.mxu0
    %4129 = vmatprep.mubr.f32.mxu0 0.0
    %4130 = vmatmul.mubr.f32.gmra.mxu0 %v4050
    %v4131 = vpop.f32.mrf.mxu0
    %v4132 = vadd.f32 0.0, %v4131
    %v4133 = vpop.f32.mrf.mxu0
    %4134 = vmatprep.mubr.f32.mxu0 0.0
    %4135 = vmatmul.mubr.f32.gmra.mxu0 %v4053
    %v4136 = vpop.f32.mrf.mxu0
    %v4137 = vadd.f32 0.0, %v4136
    %v4138 = vpop.f32.mrf.mxu0
    %4139 = vdwg.mxu0
    %v4140 = vadd.f32 %v4005, %v4122
    %v4141 = vadd.f32 %v4010, %v4127
    %v4142 = vadd.f32 %v4015, %v4132
    %v4143 = vadd.f32 %v4020, %v4137
    %v4145 = vsel %vm65, %v4025, 0
    %v4148 = vsel %vm65, %v4030, 0
    %v4151 = vsel %vm65, %v4035, 0
    %v4154 = vsel %vm65, %v4040, 0
    %4156 = vmatprep.subr.mxu0 0.0
    %4157 = vmatpush1.msra.mxu0 0.0
    %4158 = vmatprep.subr.mxu0 0.0
    %4159 = vmatpush1.msra.mxu0 0.0
    %4160 = vmatprep.subr.mxu0 0.0
    %4161 = vmatpush1.msra.mxu0 0.0
    %4162 = vmatprep.subr.mxu0 0.0
    %4163 = vmatpush1.msra.mxu0 0.0
    %4164 = vmatprep.subr.mxu0 0.0
    %4165 = vmatpush1.msra.mxu0 0.0
    %4166 = vmatprep.subr.mxu0 0.0
    %4167 = vmatpush1.msra.mxu0 0.0
    %4168 = vmatprep.subr.mxu0 0.0
    %4169 = vmatpush1.msra.mxu0 0.0
    %4170 = vmatprep.subr.mxu0 0.0
    %4171 = vmatpush1.msra.mxu0 0.0
    %4172 = vmatprep.subr.mxu0 0.0
    %4173 = vmatpush1.msra.mxu0 0.0
    %4174 = vmatprep.subr.mxu0 0.0
    %4175 = vmatpush1.msra.mxu0 0.0
    %4176 = vmatprep.subr.mxu0 0.0
    %4177 = vmatpush1.msra.mxu0 0.0
    %4178 = vmatprep.subr.mxu0 0.0
    %4179 = vmatpush1.msra.mxu0 0.0
    %4180 = vmatprep.subr.mxu0 0.0
    %4181 = vmatpush1.msra.mxu0 %v955
    %4182 = vmatprep.subr.mxu0 0.0
    %4183 = vmatpush1.msra.mxu0 %v954
    %4184 = vmatprep.subr.mxu0 0.0
    %4185 = vmatpush1.msra.mxu0 %v953
    %4186 = vmatprep.subr.mxu0 0.0
    %4187 = vmatpush1.msra.mxu0 %v952
    %4188 = vmatprep.subr.mxu0 0.0
    %4189 = vmatpush2.msra.mxu0 0.0
    %4190 = vmatprep.subr.mxu0 0.0
    %4191 = vmatpush2.msra.mxu0 0.0
    %4192 = vmatprep.subr.mxu0 0.0
    %4193 = vmatpush2.msra.mxu0 0.0
    %4194 = vmatprep.subr.mxu0 0.0
    %4195 = vmatpush2.msra.mxu0 0.0
    %4196 = vmatprep.subr.mxu0 0.0
    %4197 = vmatpush2.msra.mxu0 0.0
    %4198 = vmatprep.subr.mxu0 0.0
    %4199 = vmatpush2.msra.mxu0 0.0
    %4200 = vmatprep.subr.mxu0 0.0
    %4201 = vmatpush2.msra.mxu0 0.0
    %4202 = vmatprep.subr.mxu0 0.0
    %4203 = vmatpush2.msra.mxu0 0.0
    %4204 = vmatprep.subr.mxu0 0.0
    %4205 = vmatpush2.msra.mxu0 0.0
    %4206 = vmatprep.subr.mxu0 0.0
    %4207 = vmatpush2.msra.mxu0 0.0
    %4208 = vmatprep.subr.mxu0 0.0
    %4209 = vmatpush2.msra.mxu0 0.0
    %4210 = vmatprep.subr.mxu0 0.0
    %4211 = vmatpush2.msra.mxu0 0.0
    %4212 = vmatprep.subr.mxu0 0.0
    %4213 = vmatpush2.msra.mxu0 0.0
    %4214 = vmatprep.subr.mxu0 0.0
    %4215 = vmatpush2.msra.mxu0 0.0
    %4216 = vmatprep.subr.mxu0 0.0
    %4217 = vmatpush2.msra.mxu0 0.0
    %4218 = vmatprep.subr.mxu0 0.0
    %4219 = vmatpush2.msra.mxu0 0.0
    %4220 = vmatprep.mubr.f32.mxu0 0.0
    %4221 = vmatmul.mubr.f32.gmra.mxu0 %v4145
    %v4222 = vpop.f32.mrf.mxu0
    %v4223 = vadd.f32 0.0, %v4222
    %v4224 = vpop.f32.mrf.mxu0
    %4225 = vmatprep.mubr.f32.mxu0 0.0
    %4226 = vmatmul.mubr.f32.gmra.mxu0 %v4148
    %v4227 = vpop.f32.mrf.mxu0
    %v4228 = vadd.f32 0.0, %v4227
    %v4229 = vpop.f32.mrf.mxu0
    %4230 = vmatprep.mubr.f32.mxu0 0.0
    %4231 = vmatmul.mubr.f32.gmra.mxu0 %v4151
    %v4232 = vpop.f32.mrf.mxu0
    %v4233 = vadd.f32 0.0, %v4232
    %v4234 = vpop.f32.mrf.mxu0
    %4235 = vmatprep.mubr.f32.mxu0 0.0
    %4236 = vmatmul.mubr.f32.gmra.mxu0 %v4154
    %v4237 = vpop.f32.mrf.mxu0
    %v4238 = vadd.f32 0.0, %v4237
    %v4239 = vpop.f32.mrf.mxu0
    %4240 = vdwg.mxu0
    %v4241 = vadd.f32 %v4140, %v4223
    %v4242 = vadd.f32 %v4141, %v4228
    %v4243 = vadd.f32 %v4142, %v4233
    %v4244 = vadd.f32 %v4143, %v4238
    %v4245 = vld [vmem:[#allocation7 + $0x2f0] sm:$0xff]
    %v4246 = vld [vmem:[#allocation7 + $0x2f8] sm:$0xff]
    %v4247 = vld [vmem:[#allocation7 + $0x300] sm:$0xff]
    %v4248 = vld [vmem:[#allocation7 + $0x308] sm:$0xff]
    %4250 = vset.pattern.permute.xlu0 64
    %4251 = vperm.xlu0 %4250, %v4245
    %v4252 = vpop.permute.xlu0 %4251
    %4255 = vset.pattern.permute.xlu0 64
    %4256 = vperm.xlu0 %4255, %v4246
    %v4257 = vpop.permute.xlu0 %4256
    %4260 = vset.pattern.permute.xlu0 64
    %4261 = vperm.xlu0 %4260, %v4247
    %v4262 = vpop.permute.xlu0 %4261
    %4265 = vset.pattern.permute.xlu0 64
    %4266 = vperm.xlu0 %4265, %v4248
    %v4267 = vpop.permute.xlu0 %4266
    %v4269 = vadd.f32 %v4241, %v4252
    %v4270 = vadd.f32 %v4242, %v4257
    %v4271 = vadd.f32 %v4243, %v4262
    %v4272 = vadd.f32 %v4244, %v4267
    %v4273 = vmax.f32 %v4269, 0.0
    %v4274 = vmax.f32 %v4270, 0.0
    %v4275 = vmax.f32 %v4271, 0.0
    %v4276 = vmax.f32 %v4272, 0.0
    %v4277 = vadd.f32 %v4273, %v3459
    %v4278 = vadd.f32 %v4274, %v3460
    %v4279 = vadd.f32 %v4275, %v3461
    %v4280 = vadd.f32 %v4276, %v3462
    %4281 = vst.msk [vmem:[#allocation8] sm:$0xff] %vm65, %v4277
    %4282 = vst.msk [vmem:[#allocation8 + $0x8] sm:$0xff] %vm65, %v4278
    %4283 = vst.msk [vmem:[#allocation8 + $0x10] sm:$0xff] %vm65, %v4279
    %4284 = vst.msk [vmem:[#allocation8 + $0x18] sm:$0xff] %vm65, %v4280
    // Predicated region
    $region30: #{tpu_custom_call.1} parent=1 // pred_check
      _
    $region31: #{tpu_custom_call.1} parent=1 // pred_check_branch
      %4286 = sbr.rel (0) target = $region33
    $region32: #{tpu_custom_call.1} parent=1 // pred_region
      %s4288 = ssub.s32 512, 512
      %4289 = vsyncadd [#allocation4], %s4288
      %s4290 = sshll.u32 [#allocation8], 4
      %s4291 = int_to_ptr.vmem [resolvable:$true] %s4290
      %4296 = dma.vmem_to_hbm [thread:$0]  %s4291, 512, %s4, [#allocation4], 128, 128, 8
    $region33: #{tpu_custom_call.1} parent=1 // pred_fallthru
      _
    // Predicated region
    $region34: #{tpu_custom_call.1} parent=1 // pred_check
      _
    $region35: #{tpu_custom_call.1} parent=1 // pred_check_branch
      %4298 = sbr.rel (0) target = $region37
    $region36: #{tpu_custom_call.1} parent=1 // pred_region
      %4299 = dma.done [#allocation4], 512
    $region37: #{tpu_custom_call.1} parent=1 // pred_fallthru
      _
    %4300 = vsyncpa [#allocation3], 1
    %4301 = vsyncpa [#allocation6], 1
    %4302 = vsyncpa [#allocation4], 1

</llo_original>
